<compile_context>
chip_gen: v5e
topology: v5e:2x2
jax: 0.10.0
libtpu: 0.0.40
codegen_flags: <defaults>
</compile_context>

<pallas_src>
import functools

import numpy as np
import jax
import jax.numpy as jnp
from jax.experimental import pallas as pl
from jax.experimental.pallas import tpu as pltpu


# ----------------------------------------------------------------------------
# Layout helper (the only wrapper-side layout op): zero-pad + 2x2 phase split +
# flatten spatial onto lanes.  XLA fuses pad+transpose+reshape into one copy.
# ----------------------------------------------------------------------------
def _phase_split_flat(x, pad, lane_pad):
    """(N,C,H,W) -> (N, 4, C, Sp + lane_pad), phase p = (y%2)*2 + (x%2),
    within-phase flat index y2*Wph + x2 on lanes, `lane_pad` trailing zeros."""
    N, C, H, W = x.shape
    Hp, Wp = H + 2 * pad, W + 2 * pad
    xp = jnp.pad(x, ((0, 0), (0, 0), (pad, pad), (pad, pad)))
    ph = xp.reshape(N, C, Hp // 2, 2, Wp // 2, 2)
    ph = ph.transpose(0, 3, 5, 1, 2, 4)                  # (N, py, px, C, y, x)
    ph = ph.reshape(N, 4, C, (Hp // 2) * (Wp // 2))
    if lane_pad:
        ph = jnp.pad(ph, ((0, 0), (0, 0), (0, 0), (0, lane_pad)))
    return ph


# ----------------------------------------------------------------------------
# Kernel A: fused EESP(stride=2, 'avg') branch + avg-pool of x + concat
# (+ final PReLU when there is no x2 branch).  One grid step per batch image.
# ----------------------------------------------------------------------------
def _eesp_down_kernel(xph_ref, wproj_ref, wdw_ref, wexp_ref, cp_ref, mask_ref,
                      o_ref, *, dilations, pad, cin, n, diff,
                      hph, wph, ho, wo, apply_act):
    sp = hph * wph
    xall = xph_ref[0].astype(jnp.float32)                # (4, cin, spx)
    xph = [xall[p] for p in range(4)]                    # each (cin, spx)
    wproj = wproj_ref[...].astype(jnp.float32)           # (n, cin)
    wdw = wdw_ref[...].astype(jnp.float32)               # (n, k*9)
    wexp = wexp_ref[...].astype(jnp.float32)             # (diff, diff)
    cp = cp_ref[...].astype(jnp.float32)                 # (out_ch, 9)
    mask = mask_ref[...].astype(jnp.float32)             # (1, spx)

    # ---- 3x3 / stride-2 / pad-1 average pool of x (count_include_pad, /9) ----
    avg = None
    for ky in range(3):
        ey = pad + (ky - 1)
        for kx in range(3):
            ex = pad + (kx - 1)
            p = (ey % 2) * 2 + (ex % 2)
            off = (ey // 2) * wph + (ex // 2)
            tap = xph[p][:, off:off + sp]
            avg = tap if avg is None else avg + tap
    avg = avg * (1.0 / 9.0)                              # (cin, sp)

    # ---- grouped 1x1 proj + BN + PReLU per spatial phase (masked padding) ----
    ps, pb, pa = cp[:n, 0:1], cp[:n, 1:2], cp[:n, 2:3]
    o1ph = []
    for p in range(4):
        o1 = jnp.dot(wproj, xph[p], preferred_element_type=jnp.float32)
        o1 = o1 * ps + pb
        o1 = jnp.where(o1 > 0, o1, o1 * pa)
        o1ph.append(o1 * mask)                           # zero the padding ring

    # ---- k dilated 3x3/s2 depthwise convs + HFF + BN/PReLU + grouped 1x1 exp --
    es, eb = cp[:diff, 6:7], cp[:diff, 7:8]
    eesp = jnp.zeros((diff, sp), jnp.float32)
    prev = None
    for i, d in enumerate(dilations):
        acc = jnp.zeros((n, sp), jnp.float32)
        for ky in range(3):
            ey = pad + d * (ky - 1)
            for kx in range(3):
                ex = pad + d * (kx - 1)
                p = (ey % 2) * 2 + (ex % 2)
                off = (ey // 2) * wph + (ex // 2)
                j = i * 9 + ky * 3 + kx
                acc = acc + o1ph[p][:, off:off + sp] * wdw[:, j:j + 1]
        prev = acc if prev is None else acc + prev       # hierarchical fusion
        bs = cp[i * n:(i + 1) * n, 3:4]
        bb = cp[i * n:(i + 1) * n, 4:5]
        ba = cp[i * n:(i + 1) * n, 5:6]
        bi = prev * bs + bb
        bi = jnp.where(bi > 0, bi, bi * ba)
        # grouped 1x1 expansion accumulated one input-channel group at a time
        eesp = eesp + jnp.dot(wexp[:, i * n:(i + 1) * n], bi,
                              preferred_element_type=jnp.float32)
    eesp = eesp * es + eb                                # (diff, sp)

    if apply_act:
        avg = jnp.where(avg > 0, avg, avg * cp[:cin, 8:9])
        eesp = jnp.where(eesp > 0, eesp, eesp * cp[cin:cin + diff, 8:9])

    # ---- compact (hph, wph) phase grid -> (ho, wo) and store concat(avg,eesp)
    for oy in range(ho):
        src = slice(oy * wph, oy * wph + wo)
        dst = slice(oy * wo, (oy + 1) * wo)
        o_ref[0, :cin, dst] = avg[:, src].astype(o_ref.dtype)
        o_ref[0, cin:, dst] = eesp[:, src].astype(o_ref.dtype)


def eesp_downsample(x, wproj, wdwf, wexp, cp, dilations, apply_act):
    N, cin, H, W = x.shape
    assert H % 2 == 0 and W % 2 == 0
    n, diff, out_ch = wproj.shape[0], wexp.shape[0], cp.shape[0]
    ho, wo = H // 2, W // 2
    d_max = max(dilations)
    pad = d_max + (d_max % 2)                  # even common padding >= max dilation
    hph, wph = (H + 2 * pad) // 2, (W + 2 * pad) // 2
    sp = hph * wph
    lane_pad = ((pad + d_max) // 2) * (wph + 1)
    spx = sp + lane_pad
    xph = _phase_split_flat(x, pad, lane_pad)            # (N, 4, cin, spx)

    # validity mask for the common zero-padding ring (same for all 4 phases
    # because `pad` is even).
    m = np.zeros((1, spx), np.float32)
    yy, xx = np.meshgrid(np.arange(hph), np.arange(wph), indexing="ij")
    valid = ((yy >= pad // 2) & (yy < pad // 2 + ho) &
             (xx >= pad // 2) & (xx < pad // 2 + wo))
    m[0, :sp] = valid.reshape(-1).astype(np.float32)
    mask = jnp.asarray(m)

    kern = functools.partial(
        _eesp_down_kernel, dilations=tuple(dilations), pad=pad, cin=cin, n=n,
        diff=diff, hph=hph, wph=wph, ho=ho, wo=wo, apply_act=apply_act)
    return pl.pallas_call(
        kern,
        out_shape=jax.ShapeDtypeStruct((N, out_ch, ho * wo), jnp.float32),
        grid=(N,),
        in_specs=[
            pl.BlockSpec((1, 4, cin, spx), lambda b: (b, 0, 0, 0)),
            pl.BlockSpec(wproj.shape, lambda b: (0, 0)),
            pl.BlockSpec(wdwf.shape, lambda b: (0, 0)),
            pl.BlockSpec(wexp.shape, lambda b: (0, 0)),
            pl.BlockSpec(cp.shape, lambda b: (0, 0)),
            pl.BlockSpec((1, spx), lambda b: (0, 0)),
        ],
        out_specs=pl.BlockSpec((1, out_ch, ho * wo), lambda b: (b, 0, 0)),
        compiler_params=pltpu.CompilerParams(dimension_semantics=("parallel",)),
    )(xph.astype(jnp.float32), wproj, wdwf, wexp, cp, mask)


# ----------------------------------------------------------------------------
# Kernel C: standalone lane-dense 3x3/s2/p1 average pool (x2 preprocessing).
# Can emit either a compact (Ho, Wo) map or a zero-bordered (Ho+2, Wo+2)
# padded grid ready for the fused 3x3 conv of the reinforcement kernel.
# ----------------------------------------------------------------------------
def _avgpool_kernel(xph_ref, o_ref, *, hph, wph, ho, wo,
                    out_stride, out_base, zero_fill):
    sp = hph * wph
    xall = xph_ref[0].astype(jnp.float32)                # (4, c, spx)
    acc = None
    for ky in range(3):
        for kx in range(3):
            p = (ky % 2) * 2 + (kx % 2)
            off = (ky // 2) * wph + (kx // 2)
            tap = xall[p][:, off:off + sp]
            acc = tap if acc is None else acc + tap
    acc = acc * (1.0 / 9.0)
    if zero_fill:
        o_ref[0] = jnp.zeros(o_ref.shape[1:], o_ref.dtype)
    for oy in range(ho):
        s = out_base + oy * out_stride
        o_ref[0, :, s:s + wo] = acc[:, oy * wph:oy * wph + wo].astype(o_ref.dtype)


def avgpool3x3_s2_p1(x, conv_pad_out=False):
    N, C, H, W = x.shape
    assert H % 2 == 0 and W % 2 == 0
    ho, wo = H // 2, W // 2
    hph, wph = ho + 1, wo + 1
    lane_pad = wph + 1
    spx = hph * wph + lane_pad
    xph = _phase_split_flat(x, 1, lane_pad)              # (N, 4, C, spx)
    if conv_pad_out:
        lout, stride, base, zf = (ho + 2) * (wo + 2), wo + 2, (wo + 2) + 1, True
    else:
        lout, stride, base, zf = ho * wo, wo, 0, False
    kern = functools.partial(_avgpool_kernel, hph=hph, wph=wph, ho=ho, wo=wo,
                             out_stride=stride, out_base=base, zero_fill=zf)
    out = pl.pallas_call(
        kern,
        out_shape=jax.ShapeDtypeStruct((N, C, lout), jnp.float32),
        grid=(N,),
        in_specs=[pl.BlockSpec((1, 4, C, spx), lambda b: (b, 0, 0, 0))],
        out_specs=pl.BlockSpec((1, C, lout), lambda b: (b, 0, 0)),
        compiler_params=pltpu.CompilerParams(dimension_semantics=("parallel",)),
    )(xph.astype(jnp.float32))
    if conv_pad_out:
        return out
    return out.reshape(N, C, ho, wo)


# ----------------------------------------------------------------------------
# Kernel B: fused input-reinforcement branch + residual add + final PReLU.
#   x2 (already pooled, on a zero-bordered (Ho+2, Wo+2) flat grid) ->
#   3x3 conv + BN + PReLU -> 1x1 conv + BN -> + pre_act -> PReLU.
# ----------------------------------------------------------------------------
def _reinf_kernel(pre_ref, x2p_ref, w1_ref, w2_ref, cp_ref, o_ref, *,
                  c2, ho, wo):
    wg = wo + 2
    lcar = (ho - 1) * wg + wo
    pre = pre_ref[0].astype(jnp.float32)                 # (out_ch, ho*wo)
    x2 = x2p_ref[0].astype(jnp.float32)                  # (c2, (ho+2)*(wo+2))
    w1 = w1_ref[...].astype(jnp.float32)                 # (c2, 9*c2)
    w2 = w2_ref[...].astype(jnp.float32)                 # (out_ch, c2)
    cp = cp_ref[...].astype(jnp.float32)                 # (out_ch, 6)

    # 3x3 / stride-1 / pad-1 conv as 9 constant-lane-offset taps on the
    # zero-bordered grid (output kept in shifted flat coordinates).
    y1 = jnp.zeros((c2, lcar), jnp.float32)
    for ky in range(3):
        for kx in range(3):
            off = (wg + 1) + (ky - 1) * wg + (kx - 1)
            t = ky * 3 + kx
            y1 = y1 + jnp.dot(w1[:, t * c2:(t + 1) * c2],
                              x2[:, off:off + lcar],
                              preferred_element_type=jnp.float32)
    r1s, r1b, r1a = cp[:c2, 0:1], cp[:c2, 1:2], cp[:c2, 2:3]
    y1 = y1 * r1s + r1b
    y1 = jnp.where(y1 > 0, y1, y1 * r1a)

    reinf = jnp.dot(w2, y1, preferred_element_type=jnp.float32)
    reinf = reinf * cp[:, 3:4] + cp[:, 4:5]
    aa = cp[:, 5:6]

    for oy in range(ho):
        row = pre[:, oy * wo:(oy + 1) * wo] + reinf[:, oy * wg:oy * wg + wo]
        row = jnp.where(row > 0, row, row * aa)
        o_ref[0, :, oy * wo:(oy + 1) * wo] = row.astype(o_ref.dtype)


def reinf_add_act(pre, x2pad, w1f, w2, cp2, ho, wo):
    N, out_ch, _ = pre.shape
    c2 = x2pad.shape[1]
    kern = functools.partial(_reinf_kernel, c2=c2, ho=ho, wo=wo)
    return pl.pallas_call(
        kern,
        out_shape=jax.ShapeDtypeStruct((N, out_ch, ho * wo), jnp.float32),
        grid=(N,),
        in_specs=[
            pl.BlockSpec((1, out_ch, ho * wo), lambda b: (b, 0, 0)),
            pl.BlockSpec((1, c2, x2pad.shape[2]), lambda b: (b, 0, 0)),
            pl.BlockSpec(w1f.shape, lambda b: (0, 0)),
            pl.BlockSpec(w2.shape, lambda b: (0, 0)),
            pl.BlockSpec(cp2.shape, lambda b: (0, 0)),
        ],
        out_specs=pl.BlockSpec((1, out_ch, ho * wo), lambda b: (b, 0, 0)),
        compiler_params=pltpu.CompilerParams(dimension_semantics=("parallel",)),
    )(pre, x2pad, w1f, w2, cp2)


# ----------------------------------------------------------------------------
# Parameter packing (host side)
# ----------------------------------------------------------------------------
def grouped_1x1_dense(w, groups):
    """torch Conv2d weight (Cout, Cin/groups, 1, 1) -> dense (Cout, Cin)."""
    cout, cin_g = w.shape[0], w.shape[1]
    cog = cout // groups
    wd = jnp.zeros((cout, cin_g * groups), jnp.float32)
    for g in range(groups):
        wd = wd.at[g * cog:(g + 1) * cog, g * cin_g:(g + 1) * cin_g].set(
            w[g * cog:(g + 1) * cog, :, 0, 0])
    return wd


def _pack_eesp_params(params, n, diff, out_ch):
    cp = jnp.zeros((out_ch, 9), jnp.float32)
    ps, pb = params["proj_bn"]
    bs, bb = params["brcat_bn"]
    es, eb = params["exp_bn"]
    cp = cp.at[:n, 0].set(ps).at[:n, 1].set(pb).at[:n, 2].set(params["proj_alpha"])
    cp = cp.at[:diff, 3].set(bs).at[:diff, 4].set(bb)
    cp = cp.at[:diff, 5].set(params["brcat_alpha"])
    cp = cp.at[:diff, 6].set(es).at[:diff, 7].set(eb)
    cp = cp.at[:, 8].set(params["act_alpha"])
    return cp


def _pack_reinf_params(params, out_ch):
    c2 = params["reinf1_bn"][0].shape[0]
    cp = jnp.zeros((out_ch, 6), jnp.float32)
    r1s, r1b = params["reinf1_bn"]
    r2s, r2b = params["reinf2_bn"]
    cp = cp.at[:c2, 0].set(r1s).at[:c2, 1].set(r1b)
    cp = cp.at[:c2, 2].set(params["reinf1_alpha"])
    cp = cp.at[:, 3].set(r2s).at[:, 4].set(r2b).at[:, 5].set(params["act_alpha"])
    return cp


# ----------------------------------------------------------------------------
# DownSampler forward (Pallas path)
# ----------------------------------------------------------------------------
def downsampler_forward(params, x, x2, dilations, k):
    N, cin, H, W = x.shape
    n = params["proj_w_raw"].shape[0]
    diff = params["exp_w_raw"].shape[0]
    out_ch = params["act_alpha"].shape[0]
    ho, wo = H // 2, W // 2

    wproj = grouped_1x1_dense(params["proj_w_raw"], k)               # (n, cin)
    wexp = grouped_1x1_dense(params["exp_w_raw"], k)                 # (diff, diff)
    wdwf = params["dw_w"].transpose(1, 0, 2, 3).reshape(n, k * 9)    # (n, k*9)
    cp = _pack_eesp_params(params, n, diff, out_ch)

    pre = eesp_downsample(x, wproj, wdwf, wexp, cp, dilations,
                          apply_act=(x2 is None))                    # (N, out_ch, ho*wo)
    if x2 is None:
        return pre.reshape(N, out_ch, ho, wo)

    # repeated avg pooling of x2 until its spatial size matches avg_out
    cur = x2
    while cur.shape[2] // 2 != ho:
        cur = avgpool3x3_s2_p1(cur, conv_pad_out=False)
    x2pad = avgpool3x3_s2_p1(cur, conv_pad_out=True)                 # (N, c2, (ho+2)*(wo+2))

    c2 = params["reinf1_w_raw"].shape[0]
    w1f = params["reinf1_w_raw"].transpose(2, 3, 1, 0).reshape(9 * c2, c2).T
    w2 = grouped_1x1_dense(params["reinf2_w_raw"], 1)                # (out_ch, c2)
    cp2 = _pack_reinf_params(params, out_ch)

    out = reinf_add_act(pre, x2pad, w1f, w2, cp2, ho, wo)
    return out.reshape(N, out_ch, ho, wo)


# ----------------------------------------------------------------------------
# Parameter init
# ----------------------------------------------------------------------------
def init_params(key, in_ch, out_ch, k=4, r_lim=9, inp_reinf=3):
    diff = out_ch - in_ch
    assert diff % k == 0 and in_ch % k == 0
    n = diff // k
    map_rk = {3: 1, 5: 2, 7: 3, 9: 4, 11: 5, 13: 6, 15: 7, 17: 8}
    k_sizes = sorted([(3 + 2 * i) if (3 + 2 * i) <= r_lim else 3 for i in range(k)])
    dilations = tuple(map_rk[s] for s in k_sizes)

    keys = iter(jax.random.split(key, 32))

    def conv_w(shape, scale=0.3):
        return jax.random.normal(next(keys), shape, jnp.float32) * scale

    def bn(c):  # folded eval-mode BatchNorm: y = x*scale + bias
        s = jax.random.uniform(next(keys), (c,), jnp.float32, 0.5, 1.5)
        b = jax.random.normal(next(keys), (c,), jnp.float32) * 0.1
        return (s, b)

    def prelu_alpha(c):
        return jnp.full((c,), 0.25, jnp.float32)

    params = dict(
        proj_w_raw=conv_w((n, in_ch // k, 1, 1)),
        proj_bn=bn(n),
        proj_alpha=prelu_alpha(n),
        dw_w=conv_w((k, n, 3, 3)),
        brcat_bn=bn(diff),
        brcat_alpha=prelu_alpha(diff),
        exp_w_raw=conv_w((diff, diff // k, 1, 1)),
        exp_bn=bn(diff),
        reinf1_w_raw=conv_w((inp_reinf, inp_reinf, 3, 3)),
        reinf1_bn=bn(inp_reinf),
        reinf1_alpha=prelu_alpha(inp_reinf),
        reinf2_w_raw=conv_w((out_ch, inp_reinf, 1, 1)),
        reinf2_bn=bn(out_ch),
        act_alpha=prelu_alpha(out_ch),
    )
    return params, dilations, k


# ----------------------------------------------------------------------------
# Pure-JAX reference (mirrors the PyTorch forward exactly)
# ----------------------------------------------------------------------------
def _conv_ref(x, w, stride=1, padding=0, dilation=1, groups=1):
    return jax.lax.conv_general_dilated(
        x, w, window_strides=(stride, stride),
        padding=((padding, padding), (padding, padding)),
        rhs_dilation=(dilation, dilation),
        dimension_numbers=("NCHW", "OIHW", "NCHW"),
        feature_group_count=groups)


def _bn_ref(x, sb):
    s, b = sb
    return x * s[None, :, None, None] + b[None, :, None, None]


def _prelu_ref(x, a):
    return jnp.where(x > 0, x, x * a[None, :, None, None])


def _avgpool_ref(x):
    s = jax.lax.reduce_window(x, 0.0, jax.lax.add, (1, 1, 3, 3), (1, 1, 2, 2),
                              ((0, 0), (0, 0), (1, 1), (1, 1)))
    return s / 9.0


def reference_forward(params, x, x2, dilations, k):
    n = params["proj_w_raw"].shape[0]
    o1 = _conv_ref(x, params["proj_w_raw"], groups=k)
    o1 = _prelu_ref(_bn_ref(o1, params["proj_bn"]), params["proj_alpha"])
    prev, outs = None, []
    for i, d in enumerate(dilations):
        wi = params["dw_w"][i][:, None, :, :]
        bi = _conv_ref(o1, wi, stride=2, padding=d, dilation=d, groups=n)
        prev = bi if prev is None else bi + prev
        outs.append(prev)
    cat = jnp.concatenate(outs, axis=1)
    cat = _prelu_ref(_bn_ref(cat, params["brcat_bn"]), params["brcat_alpha"])
    eesp_out = _bn_ref(_conv_ref(cat, params["exp_w_raw"], groups=k), params["exp_bn"])
    avg_out = _avgpool_ref(x)
    output = jnp.concatenate([avg_out, eesp_out], axis=1)
    if x2 is not None:
        w1 = avg_out.shape[2]
        while True:
            x2 = _avgpool_ref(x2)
            if x2.shape[2] == w1:
                break
        y = _conv_ref(x2, params["reinf1_w_raw"], padding=1)
        y = _prelu_ref(_bn_ref(y, params["reinf1_bn"]), params["reinf1_alpha"])
        y = _bn_ref(_conv_ref(y, params["reinf2_w_raw"]), params["reinf2_bn"])
        output = output + y
    return _prelu_ref(output, params["act_alpha"])


# ----------------------------------------------------------------------------
if __name__ == "__main__":
    in_ch, out_ch = 8, 24
    key = jax.random.PRNGKey(0)
    kp, kx, kx2 = jax.random.split(key, 3)
    params, dilations, k = init_params(kp, in_ch, out_ch, k=4, r_lim=9, inp_reinf=3)

    x = jax.random.normal(kx, (2, in_ch, 16, 16), jnp.float32)
    x2 = jax.random.normal(kx2, (2, 3, 32, 32), jnp.float32)

    fwd = jax.jit(functools.partial(downsampler_forward, dilations=dilations, k=k))
    out = jax.block_until_ready(fwd(params, x, x2))

    ref = reference_forward(params, x, x2, dilations, k)
    assert out.shape == (2, out_ch, 8, 8), out.shape
    err = float(jnp.max(jnp.abs(out - ref)))
    assert jnp.allclose(out, ref, atol=5e-4, rtol=5e-4), err
    print("KERNEL_OK")
</pallas_src>

<mosaic_0001>
module attributes {stable_mosaic.version = 11 : i64} {
  func.func @_eesp_down_kernel(%arg0: i32, %arg1: memref<1x4x8x196xf32, #tpu.memory_space<vmem>>, %arg2: memref<4x8xf32, #tpu.memory_space<vmem>>, %arg3: memref<4x36xf32, #tpu.memory_space<vmem>>, %arg4: memref<16x16xf32, #tpu.memory_space<vmem>>, %arg5: memref<24x9xf32, #tpu.memory_space<vmem>>, %arg6: memref<1x196xf32, #tpu.memory_space<vmem>>, %arg7: memref<1x24x64xf32, #tpu.memory_space<vmem>>) attributes {dimension_semantics = [#tpu.dimension_semantics<parallel>], iteration_bounds = array<i64: 2>, scalar_prefetch = 0 : i64, scratch_operands = 0 : i64, tpu.core_type = #tpu.core_type<tc>, window_params = [{transform_indices = @transform_0, window_bounds = array<i64: 1, 4, 8, 196>}, {pipeline_mode = #tpu.pipeline_mode<synchronous>, transform_indices = @transform_1, window_bounds = array<i64: 4, 8>}, {pipeline_mode = #tpu.pipeline_mode<synchronous>, transform_indices = @transform_2, window_bounds = array<i64: 4, 36>}, {pipeline_mode = #tpu.pipeline_mode<synchronous>, transform_indices = @transform_3, window_bounds = array<i64: 16, 16>}, {pipeline_mode = #tpu.pipeline_mode<synchronous>, transform_indices = @transform_4, window_bounds = array<i64: 24, 9>}, {pipeline_mode = #tpu.pipeline_mode<synchronous>, transform_indices = @transform_5, window_bounds = array<i64: 1, 196>}, {transform_indices = @transform_6, window_bounds = array<i64: 1, 24, 64>}]} {
    %c0 = arith.constant 0 : index
    %c0_0 = arith.constant 0 : index
    %c0_1 = arith.constant 0 : index
    %c0_2 = arith.constant 0 : index
    %0 = vector.load %arg1[%c0, %c0_0, %c0_1, %c0_2] : memref<1x4x8x196xf32, #tpu.memory_space<vmem>>, vector<1x4x8x196xf32>
    %1 = vector.shape_cast %0 : vector<1x4x8x196xf32> to vector<4x8x196xf32>
    %2 = vector.extract_strided_slice %1 {offsets = [0, 0, 0], sizes = [1, 8, 196], strides = [1, 1, 1]} : vector<4x8x196xf32> to vector<1x8x196xf32>
    %3 = vector.shape_cast %2 : vector<1x8x196xf32> to vector<8x196xf32>
    %4 = vector.extract_strided_slice %1 {offsets = [1, 0, 0], sizes = [1, 8, 196], strides = [1, 1, 1]} : vector<4x8x196xf32> to vector<1x8x196xf32>
    %5 = vector.shape_cast %4 : vector<1x8x196xf32> to vector<8x196xf32>
    %6 = vector.extract_strided_slice %1 {offsets = [2, 0, 0], sizes = [1, 8, 196], strides = [1, 1, 1]} : vector<4x8x196xf32> to vector<1x8x196xf32>
    %7 = vector.shape_cast %6 : vector<1x8x196xf32> to vector<8x196xf32>
    %8 = vector.extract_strided_slice %1 {offsets = [3, 0, 0], sizes = [1, 8, 196], strides = [1, 1, 1]} : vector<4x8x196xf32> to vector<1x8x196xf32>
    %9 = vector.shape_cast %8 : vector<1x8x196xf32> to vector<8x196xf32>
    %c0_3 = arith.constant 0 : index
    %c0_4 = arith.constant 0 : index
    %10 = vector.load %arg2[%c0_3, %c0_4] : memref<4x8xf32, #tpu.memory_space<vmem>>, vector<4x8xf32>
    %c0_5 = arith.constant 0 : index
    %c0_6 = arith.constant 0 : index
    %11 = vector.load %arg3[%c0_5, %c0_6] : memref<4x36xf32, #tpu.memory_space<vmem>>, vector<4x36xf32>
    %c0_7 = arith.constant 0 : index
    %c0_8 = arith.constant 0 : index
    %12 = vector.load %arg4[%c0_7, %c0_8] : memref<16x16xf32, #tpu.memory_space<vmem>>, vector<16x16xf32>
    %c0_9 = arith.constant 0 : index
    %c0_10 = arith.constant 0 : index
    %13 = vector.load %arg5[%c0_9, %c0_10] : memref<24x9xf32, #tpu.memory_space<vmem>>, vector<24x9xf32>
    %c0_11 = arith.constant 0 : index
    %c0_12 = arith.constant 0 : index
    %14 = vector.load %arg6[%c0_11, %c0_12] : memref<1x196xf32, #tpu.memory_space<vmem>>, vector<1x196xf32>
    %15 = vector.extract_strided_slice %9 {offsets = [0, 13], sizes = [8, 144], strides = [1, 1]} : vector<8x196xf32> to vector<8x144xf32>
    %16 = vector.extract_strided_slice %7 {offsets = [0, 14], sizes = [8, 144], strides = [1, 1]} : vector<8x196xf32> to vector<8x144xf32>
    %17 = arith.addf %15, %16 : vector<8x144xf32>
    %18 = vector.extract_strided_slice %9 {offsets = [0, 14], sizes = [8, 144], strides = [1, 1]} : vector<8x196xf32> to vector<8x144xf32>
    %19 = arith.addf %17, %18 : vector<8x144xf32>
    %20 = vector.extract_strided_slice %5 {offsets = [0, 25], sizes = [8, 144], strides = [1, 1]} : vector<8x196xf32> to vector<8x144xf32>
    %21 = arith.addf %19, %20 : vector<8x144xf32>
    %22 = vector.extract_strided_slice %3 {offsets = [0, 26], sizes = [8, 144], strides = [1, 1]} : vector<8x196xf32> to vector<8x144xf32>
    %23 = arith.addf %21, %22 : vector<8x144xf32>
    %24 = vector.extract_strided_slice %5 {offsets = [0, 26], sizes = [8, 144], strides = [1, 1]} : vector<8x196xf32> to vector<8x144xf32>
    %25 = arith.addf %23, %24 : vector<8x144xf32>
    %26 = vector.extract_strided_slice %9 {offsets = [0, 25], sizes = [8, 144], strides = [1, 1]} : vector<8x196xf32> to vector<8x144xf32>
    %27 = arith.addf %25, %26 : vector<8x144xf32>
    %28 = vector.extract_strided_slice %7 {offsets = [0, 26], sizes = [8, 144], strides = [1, 1]} : vector<8x196xf32> to vector<8x144xf32>
    %29 = arith.addf %27, %28 : vector<8x144xf32>
    %30 = vector.extract_strided_slice %9 {offsets = [0, 26], sizes = [8, 144], strides = [1, 1]} : vector<8x196xf32> to vector<8x144xf32>
    %31 = arith.addf %29, %30 : vector<8x144xf32>
    %cst = arith.constant 0.111111112 : f32
    %32 = vector.broadcast %cst : f32 to vector<8x144xf32>
    %33 = arith.mulf %31, %32 : vector<8x144xf32>
    %34 = vector.extract_strided_slice %13 {offsets = [0, 0], sizes = [4, 1], strides = [1, 1]} : vector<24x9xf32> to vector<4x1xf32>
    %35 = vector.extract_strided_slice %13 {offsets = [0, 1], sizes = [4, 1], strides = [1, 1]} : vector<24x9xf32> to vector<4x1xf32>
    %36 = vector.extract_strided_slice %13 {offsets = [0, 2], sizes = [4, 1], strides = [1, 1]} : vector<24x9xf32> to vector<4x1xf32>
    %cst_13 = arith.constant dense<0.000000e+00> : vector<4x196xf32>
    %37 = tpu.matmul %10, %3, %cst_13 {dimension_numbers = #tpu.dot_dimension_numbers<[1], [0], [0], [1], [0, 0, 1, 1], [], []>} : vector<4x8xf32>, vector<8x196xf32>, vector<4x196xf32> -> vector<4x196xf32>
    %38 = vector.broadcast %34 : vector<4x1xf32> to vector<4x196xf32>
    %39 = arith.mulf %37, %38 : vector<4x196xf32>
    %40 = vector.broadcast %35 : vector<4x1xf32> to vector<4x196xf32>
    %41 = arith.addf %39, %40 : vector<4x196xf32>
    %cst_14 = arith.constant 0.000000e+00 : f32
    %42 = vector.broadcast %cst_14 : f32 to vector<4x196xf32>
    %43 = arith.cmpf ogt, %41, %42 : vector<4x196xf32>
    %44 = vector.broadcast %36 : vector<4x1xf32> to vector<4x196xf32>
    %45 = arith.mulf %41, %44 : vector<4x196xf32>
    %46 = arith.select %43, %41, %45 : vector<4x196xi1>, vector<4x196xf32>
    %47 = vector.broadcast %14 : vector<1x196xf32> to vector<4x196xf32>
    %48 = arith.mulf %46, %47 : vector<4x196xf32>
    %cst_15 = arith.constant dense<0.000000e+00> : vector<4x196xf32>
    %49 = tpu.matmul %10, %5, %cst_15 {dimension_numbers = #tpu.dot_dimension_numbers<[1], [0], [0], [1], [0, 0, 1, 1], [], []>} : vector<4x8xf32>, vector<8x196xf32>, vector<4x196xf32> -> vector<4x196xf32>
    %50 = vector.broadcast %34 : vector<4x1xf32> to vector<4x196xf32>
    %51 = arith.mulf %49, %50 : vector<4x196xf32>
    %52 = vector.broadcast %35 : vector<4x1xf32> to vector<4x196xf32>
    %53 = arith.addf %51, %52 : vector<4x196xf32>
    %cst_16 = arith.constant 0.000000e+00 : f32
    %54 = vector.broadcast %cst_16 : f32 to vector<4x196xf32>
    %55 = arith.cmpf ogt, %53, %54 : vector<4x196xf32>
    %56 = vector.broadcast %36 : vector<4x1xf32> to vector<4x196xf32>
    %57 = arith.mulf %53, %56 : vector<4x196xf32>
    %58 = arith.select %55, %53, %57 : vector<4x196xi1>, vector<4x196xf32>
    %59 = vector.broadcast %14 : vector<1x196xf32> to vector<4x196xf32>
    %60 = arith.mulf %58, %59 : vector<4x196xf32>
    %cst_17 = arith.constant dense<0.000000e+00> : vector<4x196xf32>
    %61 = tpu.matmul %10, %7, %cst_17 {dimension_numbers = #tpu.dot_dimension_numbers<[1], [0], [0], [1], [0, 0, 1, 1], [], []>} : vector<4x8xf32>, vector<8x196xf32>, vector<4x196xf32> -> vector<4x196xf32>
    %62 = vector.broadcast %34 : vector<4x1xf32> to vector<4x196xf32>
    %63 = arith.mulf %61, %62 : vector<4x196xf32>
    %64 = vector.broadcast %35 : vector<4x1xf32> to vector<4x196xf32>
    %65 = arith.addf %63, %64 : vector<4x196xf32>
    %cst_18 = arith.constant 0.000000e+00 : f32
    %66 = vector.broadcast %cst_18 : f32 to vector<4x196xf32>
    %67 = arith.cmpf ogt, %65, %66 : vector<4x196xf32>
    %68 = vector.broadcast %36 : vector<4x1xf32> to vector<4x196xf32>
    %69 = arith.mulf %65, %68 : vector<4x196xf32>
    %70 = arith.select %67, %65, %69 : vector<4x196xi1>, vector<4x196xf32>
    %71 = vector.broadcast %14 : vector<1x196xf32> to vector<4x196xf32>
    %72 = arith.mulf %70, %71 : vector<4x196xf32>
    %cst_19 = arith.constant dense<0.000000e+00> : vector<4x196xf32>
    %73 = tpu.matmul %10, %9, %cst_19 {dimension_numbers = #tpu.dot_dimension_numbers<[1], [0], [0], [1], [0, 0, 1, 1], [], []>} : vector<4x8xf32>, vector<8x196xf32>, vector<4x196xf32> -> vector<4x196xf32>
    %74 = vector.broadcast %34 : vector<4x1xf32> to vector<4x196xf32>
    %75 = arith.mulf %73, %74 : vector<4x196xf32>
    %76 = vector.broadcast %35 : vector<4x1xf32> to vector<4x196xf32>
    %77 = arith.addf %75, %76 : vector<4x196xf32>
    %cst_20 = arith.constant 0.000000e+00 : f32
    %78 = vector.broadcast %cst_20 : f32 to vector<4x196xf32>
    %79 = arith.cmpf ogt, %77, %78 : vector<4x196xf32>
    %80 = vector.broadcast %36 : vector<4x1xf32> to vector<4x196xf32>
    %81 = arith.mulf %77, %80 : vector<4x196xf32>
    %82 = arith.select %79, %77, %81 : vector<4x196xi1>, vector<4x196xf32>
    %83 = vector.broadcast %14 : vector<1x196xf32> to vector<4x196xf32>
    %84 = arith.mulf %82, %83 : vector<4x196xf32>
    %85 = vector.extract_strided_slice %13 {offsets = [0, 6], sizes = [16, 1], strides = [1, 1]} : vector<24x9xf32> to vector<16x1xf32>
    %86 = vector.extract_strided_slice %13 {offsets = [0, 7], sizes = [16, 1], strides = [1, 1]} : vector<24x9xf32> to vector<16x1xf32>
    %cst_21 = arith.constant 0.000000e+00 : f32
    %87 = vector.broadcast %cst_21 : f32 to vector<16x144xf32>
    %cst_22 = arith.constant 0.000000e+00 : f32
    %88 = vector.broadcast %cst_22 : f32 to vector<4x144xf32>
    %89 = vector.extract_strided_slice %84 {offsets = [0, 13], sizes = [4, 144], strides = [1, 1]} : vector<4x196xf32> to vector<4x144xf32>
    %90 = vector.extract_strided_slice %11 {offsets = [0, 0], sizes = [4, 1], strides = [1, 1]} : vector<4x36xf32> to vector<4x1xf32>
    %91 = vector.broadcast %90 : vector<4x1xf32> to vector<4x144xf32>
    %92 = arith.mulf %89, %91 : vector<4x144xf32>
    %93 = arith.addf %88, %92 : vector<4x144xf32>
    %94 = vector.extract_strided_slice %72 {offsets = [0, 14], sizes = [4, 144], strides = [1, 1]} : vector<4x196xf32> to vector<4x144xf32>
    %95 = vector.extract_strided_slice %11 {offsets = [0, 1], sizes = [4, 1], strides = [1, 1]} : vector<4x36xf32> to vector<4x1xf32>
    %96 = vector.broadcast %95 : vector<4x1xf32> to vector<4x144xf32>
    %97 = arith.mulf %94, %96 : vector<4x144xf32>
    %98 = arith.addf %93, %97 : vector<4x144xf32>
    %99 = vector.extract_strided_slice %84 {offsets = [0, 14], sizes = [4, 144], strides = [1, 1]} : vector<4x196xf32> to vector<4x144xf32>
    %100 = vector.extract_strided_slice %11 {offsets = [0, 2], sizes = [4, 1], strides = [1, 1]} : vector<4x36xf32> to vector<4x1xf32>
    %101 = vector.broadcast %100 : vector<4x1xf32> to vector<4x144xf32>
    %102 = arith.mulf %99, %101 : vector<4x144xf32>
    %103 = arith.addf %98, %102 : vector<4x144xf32>
    %104 = vector.extract_strided_slice %60 {offsets = [0, 25], sizes = [4, 144], strides = [1, 1]} : vector<4x196xf32> to vector<4x144xf32>
    %105 = vector.extract_strided_slice %11 {offsets = [0, 3], sizes = [4, 1], strides = [1, 1]} : vector<4x36xf32> to vector<4x1xf32>
    %106 = vector.broadcast %105 : vector<4x1xf32> to vector<4x144xf32>
    %107 = arith.mulf %104, %106 : vector<4x144xf32>
    %108 = arith.addf %103, %107 : vector<4x144xf32>
    %109 = vector.extract_strided_slice %48 {offsets = [0, 26], sizes = [4, 144], strides = [1, 1]} : vector<4x196xf32> to vector<4x144xf32>
    %110 = vector.extract_strided_slice %11 {offsets = [0, 4], sizes = [4, 1], strides = [1, 1]} : vector<4x36xf32> to vector<4x1xf32>
    %111 = vector.broadcast %110 : vector<4x1xf32> to vector<4x144xf32>
    %112 = arith.mulf %109, %111 : vector<4x144xf32>
    %113 = arith.addf %108, %112 : vector<4x144xf32>
    %114 = vector.extract_strided_slice %60 {offsets = [0, 26], sizes = [4, 144], strides = [1, 1]} : vector<4x196xf32> to vector<4x144xf32>
    %115 = vector.extract_strided_slice %11 {offsets = [0, 5], sizes = [4, 1], strides = [1, 1]} : vector<4x36xf32> to vector<4x1xf32>
    %116 = vector.broadcast %115 : vector<4x1xf32> to vector<4x144xf32>
    %117 = arith.mulf %114, %116 : vector<4x144xf32>
    %118 = arith.addf %113, %117 : vector<4x144xf32>
    %119 = vector.extract_strided_slice %84 {offsets = [0, 25], sizes = [4, 144], strides = [1, 1]} : vector<4x196xf32> to vector<4x144xf32>
    %120 = vector.extract_strided_slice %11 {offsets = [0, 6], sizes = [4, 1], strides = [1, 1]} : vector<4x36xf32> to vector<4x1xf32>
    %121 = vector.broadcast %120 : vector<4x1xf32> to vector<4x144xf32>
    %122 = arith.mulf %119, %121 : vector<4x144xf32>
    %123 = arith.addf %118, %122 : vector<4x144xf32>
    %124 = vector.extract_strided_slice %72 {offsets = [0, 26], sizes = [4, 144], strides = [1, 1]} : vector<4x196xf32> to vector<4x144xf32>
    %125 = vector.extract_strided_slice %11 {offsets = [0, 7], sizes = [4, 1], strides = [1, 1]} : vector<4x36xf32> to vector<4x1xf32>
    %126 = vector.broadcast %125 : vector<4x1xf32> to vector<4x144xf32>
    %127 = arith.mulf %124, %126 : vector<4x144xf32>
    %128 = arith.addf %123, %127 : vector<4x144xf32>
    %129 = vector.extract_strided_slice %84 {offsets = [0, 26], sizes = [4, 144], strides = [1, 1]} : vector<4x196xf32> to vector<4x144xf32>
    %130 = vector.extract_strided_slice %11 {offsets = [0, 8], sizes = [4, 1], strides = [1, 1]} : vector<4x36xf32> to vector<4x1xf32>
    %131 = vector.broadcast %130 : vector<4x1xf32> to vector<4x144xf32>
    %132 = arith.mulf %129, %131 : vector<4x144xf32>
    %133 = arith.addf %128, %132 : vector<4x144xf32>
    %134 = vector.extract_strided_slice %13 {offsets = [0, 3], sizes = [4, 1], strides = [1, 1]} : vector<24x9xf32> to vector<4x1xf32>
    %135 = vector.extract_strided_slice %13 {offsets = [0, 4], sizes = [4, 1], strides = [1, 1]} : vector<24x9xf32> to vector<4x1xf32>
    %136 = vector.extract_strided_slice %13 {offsets = [0, 5], sizes = [4, 1], strides = [1, 1]} : vector<24x9xf32> to vector<4x1xf32>
    %137 = vector.broadcast %134 : vector<4x1xf32> to vector<4x144xf32>
    %138 = arith.mulf %133, %137 : vector<4x144xf32>
    %139 = vector.broadcast %135 : vector<4x1xf32> to vector<4x144xf32>
    %140 = arith.addf %138, %139 : vector<4x144xf32>
    %cst_23 = arith.constant 0.000000e+00 : f32
    %141 = vector.broadcast %cst_23 : f32 to vector<4x144xf32>
    %142 = arith.cmpf ogt, %140, %141 : vector<4x144xf32>
    %143 = vector.broadcast %136 : vector<4x1xf32> to vector<4x144xf32>
    %144 = arith.mulf %140, %143 : vector<4x144xf32>
    %145 = arith.select %142, %140, %144 : vector<4x144xi1>, vector<4x144xf32>
    %146 = vector.extract_strided_slice %12 {offsets = [0, 0], sizes = [16, 4], strides = [1, 1]} : vector<16x16xf32> to vector<16x4xf32>
    %cst_24 = arith.constant dense<0.000000e+00> : vector<16x144xf32>
    %147 = tpu.matmul %146, %145, %cst_24 {dimension_numbers = #tpu.dot_dimension_numbers<[1], [0], [0], [1], [0, 0, 1, 1], [], []>} : vector<16x4xf32>, vector<4x144xf32>, vector<16x144xf32> -> vector<16x144xf32>
    %148 = arith.addf %87, %147 : vector<16x144xf32>
    %cst_25 = arith.constant 0.000000e+00 : f32
    %149 = vector.broadcast %cst_25 : f32 to vector<4x144xf32>
    %150 = vector.extract_strided_slice %48 {offsets = [0, 13], sizes = [4, 144], strides = [1, 1]} : vector<4x196xf32> to vector<4x144xf32>
    %151 = vector.extract_strided_slice %11 {offsets = [0, 9], sizes = [4, 1], strides = [1, 1]} : vector<4x36xf32> to vector<4x1xf32>
    %152 = vector.broadcast %151 : vector<4x1xf32> to vector<4x144xf32>
    %153 = arith.mulf %150, %152 : vector<4x144xf32>
    %154 = arith.addf %149, %153 : vector<4x144xf32>
    %155 = vector.extract_strided_slice %48 {offsets = [0, 14], sizes = [4, 144], strides = [1, 1]} : vector<4x196xf32> to vector<4x144xf32>
    %156 = vector.extract_strided_slice %11 {offsets = [0, 10], sizes = [4, 1], strides = [1, 1]} : vector<4x36xf32> to vector<4x1xf32>
    %157 = vector.broadcast %156 : vector<4x1xf32> to vector<4x144xf32>
    %158 = arith.mulf %155, %157 : vector<4x144xf32>
    %159 = arith.addf %154, %158 : vector<4x144xf32>
    %160 = vector.extract_strided_slice %48 {offsets = [0, 15], sizes = [4, 144], strides = [1, 1]} : vector<4x196xf32> to vector<4x144xf32>
    %161 = vector.extract_strided_slice %11 {offsets = [0, 11], sizes = [4, 1], strides = [1, 1]} : vector<4x36xf32> to vector<4x1xf32>
    %162 = vector.broadcast %161 : vector<4x1xf32> to vector<4x144xf32>
    %163 = arith.mulf %160, %162 : vector<4x144xf32>
    %164 = arith.addf %159, %163 : vector<4x144xf32>
    %165 = vector.extract_strided_slice %48 {offsets = [0, 25], sizes = [4, 144], strides = [1, 1]} : vector<4x196xf32> to vector<4x144xf32>
    %166 = vector.extract_strided_slice %11 {offsets = [0, 12], sizes = [4, 1], strides = [1, 1]} : vector<4x36xf32> to vector<4x1xf32>
    %167 = vector.broadcast %166 : vector<4x1xf32> to vector<4x144xf32>
    %168 = arith.mulf %165, %167 : vector<4x144xf32>
    %169 = arith.addf %164, %168 : vector<4x144xf32>
    %170 = vector.extract_strided_slice %48 {offsets = [0, 26], sizes = [4, 144], strides = [1, 1]} : vector<4x196xf32> to vector<4x144xf32>
    %171 = vector.extract_strided_slice %11 {offsets = [0, 13], sizes = [4, 1], strides = [1, 1]} : vector<4x36xf32> to vector<4x1xf32>
    %172 = vector.broadcast %171 : vector<4x1xf32> to vector<4x144xf32>
    %173 = arith.mulf %170, %172 : vector<4x144xf32>
    %174 = arith.addf %169, %173 : vector<4x144xf32>
    %175 = vector.extract_strided_slice %48 {offsets = [0, 27], sizes = [4, 144], strides = [1, 1]} : vector<4x196xf32> to vector<4x144xf32>
    %176 = vector.extract_strided_slice %11 {offsets = [0, 14], sizes = [4, 1], strides = [1, 1]} : vector<4x36xf32> to vector<4x1xf32>
    %177 = vector.broadcast %176 : vector<4x1xf32> to vector<4x144xf32>
    %178 = arith.mulf %175, %177 : vector<4x144xf32>
    %179 = arith.addf %174, %178 : vector<4x144xf32>
    %180 = vector.extract_strided_slice %48 {offsets = [0, 37], sizes = [4, 144], strides = [1, 1]} : vector<4x196xf32> to vector<4x144xf32>
    %181 = vector.extract_strided_slice %11 {offsets = [0, 15], sizes = [4, 1], strides = [1, 1]} : vector<4x36xf32> to vector<4x1xf32>
    %182 = vector.broadcast %181 : vector<4x1xf32> to vector<4x144xf32>
    %183 = arith.mulf %180, %182 : vector<4x144xf32>
    %184 = arith.addf %179, %183 : vector<4x144xf32>
    %185 = vector.extract_strided_slice %48 {offsets = [0, 38], sizes = [4, 144], strides = [1, 1]} : vector<4x196xf32> to vector<4x144xf32>
    %186 = vector.extract_strided_slice %11 {offsets = [0, 16], sizes = [4, 1], strides = [1, 1]} : vector<4x36xf32> to vector<4x1xf32>
    %187 = vector.broadcast %186 : vector<4x1xf32> to vector<4x144xf32>
    %188 = arith.mulf %185, %187 : vector<4x144xf32>
    %189 = arith.addf %184, %188 : vector<4x144xf32>
    %190 = vector.extract_strided_slice %48 {offsets = [0, 39], sizes = [4, 144], strides = [1, 1]} : vector<4x196xf32> to vector<4x144xf32>
    %191 = vector.extract_strided_slice %11 {offsets = [0, 17], sizes = [4, 1], strides = [1, 1]} : vector<4x36xf32> to vector<4x1xf32>
    %192 = vector.broadcast %191 : vector<4x1xf32> to vector<4x144xf32>
    %193 = arith.mulf %190, %192 : vector<4x144xf32>
    %194 = arith.addf %189, %193 : vector<4x144xf32>
    %195 = arith.addf %194, %133 : vector<4x144xf32>
    %196 = vector.extract_strided_slice %13 {offsets = [4, 3], sizes = [4, 1], strides = [1, 1]} : vector<24x9xf32> to vector<4x1xf32>
    %197 = vector.extract_strided_slice %13 {offsets = [4, 4], sizes = [4, 1], strides = [1, 1]} : vector<24x9xf32> to vector<4x1xf32>
    %198 = vector.extract_strided_slice %13 {offsets = [4, 5], sizes = [4, 1], strides = [1, 1]} : vector<24x9xf32> to vector<4x1xf32>
    %199 = vector.broadcast %196 : vector<4x1xf32> to vector<4x144xf32>
    %200 = arith.mulf %195, %199 : vector<4x144xf32>
    %201 = vector.broadcast %197 : vector<4x1xf32> to vector<4x144xf32>
    %202 = arith.addf %200, %201 : vector<4x144xf32>
    %cst_26 = arith.constant 0.000000e+00 : f32
    %203 = vector.broadcast %cst_26 : f32 to vector<4x144xf32>
    %204 = arith.cmpf ogt, %202, %203 : vector<4x144xf32>
    %205 = vector.broadcast %198 : vector<4x1xf32> to vector<4x144xf32>
    %206 = arith.mulf %202, %205 : vector<4x144xf32>
    %207 = arith.select %204, %202, %206 : vector<4x144xi1>, vector<4x144xf32>
    %208 = vector.extract_strided_slice %12 {offsets = [0, 4], sizes = [16, 4], strides = [1, 1]} : vector<16x16xf32> to vector<16x4xf32>
    %cst_27 = arith.constant dense<0.000000e+00> : vector<16x144xf32>
    %209 = tpu.matmul %208, %207, %cst_27 {dimension_numbers = #tpu.dot_dimension_numbers<[1], [0], [0], [1], [0, 0, 1, 1], [], []>} : vector<16x4xf32>, vector<4x144xf32>, vector<16x144xf32> -> vector<16x144xf32>
    %210 = arith.addf %148, %209 : vector<16x144xf32>
    %cst_28 = arith.constant 0.000000e+00 : f32
    %211 = vector.broadcast %cst_28 : f32 to vector<4x144xf32>
    %212 = vector.extract_strided_slice %84 {offsets = [0, 0], sizes = [4, 144], strides = [1, 1]} : vector<4x196xf32> to vector<4x144xf32>
    %213 = vector.extract_strided_slice %11 {offsets = [0, 18], sizes = [4, 1], strides = [1, 1]} : vector<4x36xf32> to vector<4x1xf32>
    %214 = vector.broadcast %213 : vector<4x1xf32> to vector<4x144xf32>
    %215 = arith.mulf %212, %214 : vector<4x144xf32>
    %216 = arith.addf %211, %215 : vector<4x144xf32>
    %217 = vector.extract_strided_slice %72 {offsets = [0, 2], sizes = [4, 144], strides = [1, 1]} : vector<4x196xf32> to vector<4x144xf32>
    %218 = vector.extract_strided_slice %11 {offsets = [0, 19], sizes = [4, 1], strides = [1, 1]} : vector<4x36xf32> to vector<4x1xf32>
    %219 = vector.broadcast %218 : vector<4x1xf32> to vector<4x144xf32>
    %220 = arith.mulf %217, %219 : vector<4x144xf32>
    %221 = arith.addf %216, %220 : vector<4x144xf32>
    %222 = vector.extract_strided_slice %84 {offsets = [0, 3], sizes = [4, 144], strides = [1, 1]} : vector<4x196xf32> to vector<4x144xf32>
    %223 = vector.extract_strided_slice %11 {offsets = [0, 20], sizes = [4, 1], strides = [1, 1]} : vector<4x36xf32> to vector<4x1xf32>
    %224 = vector.broadcast %223 : vector<4x1xf32> to vector<4x144xf32>
    %225 = arith.mulf %222, %224 : vector<4x144xf32>
    %226 = arith.addf %221, %225 : vector<4x144xf32>
    %227 = vector.extract_strided_slice %60 {offsets = [0, 24], sizes = [4, 144], strides = [1, 1]} : vector<4x196xf32> to vector<4x144xf32>
    %228 = vector.extract_strided_slice %11 {offsets = [0, 21], sizes = [4, 1], strides = [1, 1]} : vector<4x36xf32> to vector<4x1xf32>
    %229 = vector.broadcast %228 : vector<4x1xf32> to vector<4x144xf32>
    %230 = arith.mulf %227, %229 : vector<4x144xf32>
    %231 = arith.addf %226, %230 : vector<4x144xf32>
    %232 = vector.extract_strided_slice %48 {offsets = [0, 26], sizes = [4, 144], strides = [1, 1]} : vector<4x196xf32> to vector<4x144xf32>
    %233 = vector.extract_strided_slice %11 {offsets = [0, 22], sizes = [4, 1], strides = [1, 1]} : vector<4x36xf32> to vector<4x1xf32>
    %234 = vector.broadcast %233 : vector<4x1xf32> to vector<4x144xf32>
    %235 = arith.mulf %232, %234 : vector<4x144xf32>
    %236 = arith.addf %231, %235 : vector<4x144xf32>
    %237 = vector.extract_strided_slice %60 {offsets = [0, 27], sizes = [4, 144], strides = [1, 1]} : vector<4x196xf32> to vector<4x144xf32>
    %238 = vector.extract_strided_slice %11 {offsets = [0, 23], sizes = [4, 1], strides = [1, 1]} : vector<4x36xf32> to vector<4x1xf32>
    %239 = vector.broadcast %238 : vector<4x1xf32> to vector<4x144xf32>
    %240 = arith.mulf %237, %239 : vector<4x144xf32>
    %241 = arith.addf %236, %240 : vector<4x144xf32>
    %242 = vector.extract_strided_slice %84 {offsets = [0, 36], sizes = [4, 144], strides = [1, 1]} : vector<4x196xf32> to vector<4x144xf32>
    %243 = vector.extract_strided_slice %11 {offsets = [0, 24], sizes = [4, 1], strides = [1, 1]} : vector<4x36xf32> to vector<4x1xf32>
    %244 = vector.broadcast %243 : vector<4x1xf32> to vector<4x144xf32>
    %245 = arith.mulf %242, %244 : vector<4x144xf32>
    %246 = arith.addf %241, %245 : vector<4x144xf32>
    %247 = vector.extract_strided_slice %72 {offsets = [0, 38], sizes = [4, 144], strides = [1, 1]} : vector<4x196xf32> to vector<4x144xf32>
    %248 = vector.extract_strided_slice %11 {offsets = [0, 25], sizes = [4, 1], strides = [1, 1]} : vector<4x36xf32> to vector<4x1xf32>
    %249 = vector.broadcast %248 : vector<4x1xf32> to vector<4x144xf32>
    %250 = arith.mulf %247, %249 : vector<4x144xf32>
    %251 = arith.addf %246, %250 : vector<4x144xf32>
    %252 = vector.extract_strided_slice %84 {offsets = [0, 39], sizes = [4, 144], strides = [1, 1]} : vector<4x196xf32> to vector<4x144xf32>
    %253 = vector.extract_strided_slice %11 {offsets = [0, 26], sizes = [4, 1], strides = [1, 1]} : vector<4x36xf32> to vector<4x1xf32>
    %254 = vector.broadcast %253 : vector<4x1xf32> to vector<4x144xf32>
    %255 = arith.mulf %252, %254 : vector<4x144xf32>
    %256 = arith.addf %251, %255 : vector<4x144xf32>
    %257 = arith.addf %256, %195 : vector<4x144xf32>
    %258 = vector.extract_strided_slice %13 {offsets = [8, 3], sizes = [4, 1], strides = [1, 1]} : vector<24x9xf32> to vector<4x1xf32>
    %259 = vector.extract_strided_slice %13 {offsets = [8, 4], sizes = [4, 1], strides = [1, 1]} : vector<24x9xf32> to vector<4x1xf32>
    %260 = vector.extract_strided_slice %13 {offsets = [8, 5], sizes = [4, 1], strides = [1, 1]} : vector<24x9xf32> to vector<4x1xf32>
    %261 = vector.broadcast %258 : vector<4x1xf32> to vector<4x144xf32>
    %262 = arith.mulf %257, %261 : vector<4x144xf32>
    %263 = vector.broadcast %259 : vector<4x1xf32> to vector<4x144xf32>
    %264 = arith.addf %262, %263 : vector<4x144xf32>
    %cst_29 = arith.constant 0.000000e+00 : f32
    %265 = vector.broadcast %cst_29 : f32 to vector<4x144xf32>
    %266 = arith.cmpf ogt, %264, %265 : vector<4x144xf32>
    %267 = vector.broadcast %260 : vector<4x1xf32> to vector<4x144xf32>
    %268 = arith.mulf %264, %267 : vector<4x144xf32>
    %269 = arith.select %266, %264, %268 : vector<4x144xi1>, vector<4x144xf32>
    %270 = vector.extract_strided_slice %12 {offsets = [0, 8], sizes = [16, 4], strides = [1, 1]} : vector<16x16xf32> to vector<16x4xf32>
    %cst_30 = arith.constant dense<0.000000e+00> : vector<16x144xf32>
    %271 = tpu.matmul %270, %269, %cst_30 {dimension_numbers = #tpu.dot_dimension_numbers<[1], [0], [0], [1], [0, 0, 1, 1], [], []>} : vector<16x4xf32>, vector<4x144xf32>, vector<16x144xf32> -> vector<16x144xf32>
    %272 = arith.addf %210, %271 : vector<16x144xf32>
    %cst_31 = arith.constant 0.000000e+00 : f32
    %273 = vector.broadcast %cst_31 : f32 to vector<4x144xf32>
    %274 = vector.extract_strided_slice %48 {offsets = [0, 0], sizes = [4, 144], strides = [1, 1]} : vector<4x196xf32> to vector<4x144xf32>
    %275 = vector.extract_strided_slice %11 {offsets = [0, 27], sizes = [4, 1], strides = [1, 1]} : vector<4x36xf32> to vector<4x1xf32>
    %276 = vector.broadcast %275 : vector<4x1xf32> to vector<4x144xf32>
    %277 = arith.mulf %274, %276 : vector<4x144xf32>
    %278 = arith.addf %273, %277 : vector<4x144xf32>
    %279 = vector.extract_strided_slice %48 {offsets = [0, 2], sizes = [4, 144], strides = [1, 1]} : vector<4x196xf32> to vector<4x144xf32>
    %280 = vector.extract_strided_slice %11 {offsets = [0, 28], sizes = [4, 1], strides = [1, 1]} : vector<4x36xf32> to vector<4x1xf32>
    %281 = vector.broadcast %280 : vector<4x1xf32> to vector<4x144xf32>
    %282 = arith.mulf %279, %281 : vector<4x144xf32>
    %283 = arith.addf %278, %282 : vector<4x144xf32>
    %284 = vector.extract_strided_slice %48 {offsets = [0, 4], sizes = [4, 144], strides = [1, 1]} : vector<4x196xf32> to vector<4x144xf32>
    %285 = vector.extract_strided_slice %11 {offsets = [0, 29], sizes = [4, 1], strides = [1, 1]} : vector<4x36xf32> to vector<4x1xf32>
    %286 = vector.broadcast %285 : vector<4x1xf32> to vector<4x144xf32>
    %287 = arith.mulf %284, %286 : vector<4x144xf32>
    %288 = arith.addf %283, %287 : vector<4x144xf32>
    %289 = vector.extract_strided_slice %48 {offsets = [0, 24], sizes = [4, 144], strides = [1, 1]} : vector<4x196xf32> to vector<4x144xf32>
    %290 = vector.extract_strided_slice %11 {offsets = [0, 30], sizes = [4, 1], strides = [1, 1]} : vector<4x36xf32> to vector<4x1xf32>
    %291 = vector.broadcast %290 : vector<4x1xf32> to vector<4x144xf32>
    %292 = arith.mulf %289, %291 : vector<4x144xf32>
    %293 = arith.addf %288, %292 : vector<4x144xf32>
    %294 = vector.extract_strided_slice %48 {offsets = [0, 26], sizes = [4, 144], strides = [1, 1]} : vector<4x196xf32> to vector<4x144xf32>
    %295 = vector.extract_strided_slice %11 {offsets = [0, 31], sizes = [4, 1], strides = [1, 1]} : vector<4x36xf32> to vector<4x1xf32>
    %296 = vector.broadcast %295 : vector<4x1xf32> to vector<4x144xf32>
    %297 = arith.mulf %294, %296 : vector<4x144xf32>
    %298 = arith.addf %293, %297 : vector<4x144xf32>
    %299 = vector.extract_strided_slice %48 {offsets = [0, 28], sizes = [4, 144], strides = [1, 1]} : vector<4x196xf32> to vector<4x144xf32>
    %300 = vector.extract_strided_slice %11 {offsets = [0, 32], sizes = [4, 1], strides = [1, 1]} : vector<4x36xf32> to vector<4x1xf32>
    %301 = vector.broadcast %300 : vector<4x1xf32> to vector<4x144xf32>
    %302 = arith.mulf %299, %301 : vector<4x144xf32>
    %303 = arith.addf %298, %302 : vector<4x144xf32>
    %304 = vector.extract_strided_slice %48 {offsets = [0, 48], sizes = [4, 144], strides = [1, 1]} : vector<4x196xf32> to vector<4x144xf32>
    %305 = vector.extract_strided_slice %11 {offsets = [0, 33], sizes = [4, 1], strides = [1, 1]} : vector<4x36xf32> to vector<4x1xf32>
    %306 = vector.broadcast %305 : vector<4x1xf32> to vector<4x144xf32>
    %307 = arith.mulf %304, %306 : vector<4x144xf32>
    %308 = arith.addf %303, %307 : vector<4x144xf32>
    %309 = vector.extract_strided_slice %48 {offsets = [0, 50], sizes = [4, 144], strides = [1, 1]} : vector<4x196xf32> to vector<4x144xf32>
    %310 = vector.extract_strided_slice %11 {offsets = [0, 34], sizes = [4, 1], strides = [1, 1]} : vector<4x36xf32> to vector<4x1xf32>
    %311 = vector.broadcast %310 : vector<4x1xf32> to vector<4x144xf32>
    %312 = arith.mulf %309, %311 : vector<4x144xf32>
    %313 = arith.addf %308, %312 : vector<4x144xf32>
    %314 = vector.extract_strided_slice %48 {offsets = [0, 52], sizes = [4, 144], strides = [1, 1]} : vector<4x196xf32> to vector<4x144xf32>
    %315 = vector.extract_strided_slice %11 {offsets = [0, 35], sizes = [4, 1], strides = [1, 1]} : vector<4x36xf32> to vector<4x1xf32>
    %316 = vector.broadcast %315 : vector<4x1xf32> to vector<4x144xf32>
    %317 = arith.mulf %314, %316 : vector<4x144xf32>
    %318 = arith.addf %313, %317 : vector<4x144xf32>
    %319 = arith.addf %318, %257 : vector<4x144xf32>
    %320 = vector.extract_strided_slice %13 {offsets = [12, 3], sizes = [4, 1], strides = [1, 1]} : vector<24x9xf32> to vector<4x1xf32>
    %321 = vector.extract_strided_slice %13 {offsets = [12, 4], sizes = [4, 1], strides = [1, 1]} : vector<24x9xf32> to vector<4x1xf32>
    %322 = vector.extract_strided_slice %13 {offsets = [12, 5], sizes = [4, 1], strides = [1, 1]} : vector<24x9xf32> to vector<4x1xf32>
    %323 = vector.broadcast %320 : vector<4x1xf32> to vector<4x144xf32>
    %324 = arith.mulf %319, %323 : vector<4x144xf32>
    %325 = vector.broadcast %321 : vector<4x1xf32> to vector<4x144xf32>
    %326 = arith.addf %324, %325 : vector<4x144xf32>
    %cst_32 = arith.constant 0.000000e+00 : f32
    %327 = vector.broadcast %cst_32 : f32 to vector<4x144xf32>
    %328 = arith.cmpf ogt, %326, %327 : vector<4x144xf32>
    %329 = vector.broadcast %322 : vector<4x1xf32> to vector<4x144xf32>
    %330 = arith.mulf %326, %329 : vector<4x144xf32>
    %331 = arith.select %328, %326, %330 : vector<4x144xi1>, vector<4x144xf32>
    %332 = vector.extract_strided_slice %12 {offsets = [0, 12], sizes = [16, 4], strides = [1, 1]} : vector<16x16xf32> to vector<16x4xf32>
    %cst_33 = arith.constant dense<0.000000e+00> : vector<16x144xf32>
    %333 = tpu.matmul %332, %331, %cst_33 {dimension_numbers = #tpu.dot_dimension_numbers<[1], [0], [0], [1], [0, 0, 1, 1], [], []>} : vector<16x4xf32>, vector<4x144xf32>, vector<16x144xf32> -> vector<16x144xf32>
    %334 = arith.addf %272, %333 : vector<16x144xf32>
    %335 = vector.broadcast %85 : vector<16x1xf32> to vector<16x144xf32>
    %336 = arith.mulf %334, %335 : vector<16x144xf32>
    %337 = vector.broadcast %86 : vector<16x1xf32> to vector<16x144xf32>
    %338 = arith.addf %336, %337 : vector<16x144xf32>
    %339 = vector.extract_strided_slice %33 {offsets = [0, 0], sizes = [8, 8], strides = [1, 1]} : vector<8x144xf32> to vector<8x8xf32>
    %c0_34 = arith.constant 0 : index
    %c0_35 = arith.constant 0 : index
    %c0_36 = arith.constant 0 : index
    %340 = vector.load %arg7[%c0_34, %c0_35, %c0_36] : memref<1x24x64xf32, #tpu.memory_space<vmem>>, vector<1x8x8xf32>
    %341 = vector.shape_cast %340 : vector<1x8x8xf32> to vector<8x8xf32>
    %342 = vector.shape_cast %339 : vector<8x8xf32> to vector<1x8x8xf32>
    tpu.vector_store %arg7[%c0_34, %c0_35, %c0_36], %342 {strides = array<i32>} : memref<1x24x64xf32, #tpu.memory_space<vmem>>, vector<1x8x8xf32>,
    %343 = vector.extract_strided_slice %338 {offsets = [0, 0], sizes = [16, 8], strides = [1, 1]} : vector<16x144xf32> to vector<16x8xf32>
    %c0_37 = arith.constant 0 : index
    %c8 = arith.constant 8 : index
    %c0_38 = arith.constant 0 : index
    %344 = vector.load %arg7[%c0_37, %c8, %c0_38] : memref<1x24x64xf32, #tpu.memory_space<vmem>>, vector<1x16x8xf32>
    %345 = vector.shape_cast %344 : vector<1x16x8xf32> to vector<16x8xf32>
    %346 = vector.shape_cast %343 : vector<16x8xf32> to vector<1x16x8xf32>
    tpu.vector_store %arg7[%c0_37, %c8, %c0_38], %346 {strides = array<i32>} : memref<1x24x64xf32, #tpu.memory_space<vmem>>, vector<1x16x8xf32>,
    %347 = vector.extract_strided_slice %33 {offsets = [0, 12], sizes = [8, 8], strides = [1, 1]} : vector<8x144xf32> to vector<8x8xf32>
    %c0_39 = arith.constant 0 : index
    %c0_40 = arith.constant 0 : index
    %c8_41 = arith.constant 8 : index
    %348 = vector.load %arg7[%c0_39, %c0_40, %c8_41] : memref<1x24x64xf32, #tpu.memory_space<vmem>>, vector<1x8x8xf32>
    %349 = vector.shape_cast %348 : vector<1x8x8xf32> to vector<8x8xf32>
    %350 = vector.shape_cast %347 : vector<8x8xf32> to vector<1x8x8xf32>
    tpu.vector_store %arg7[%c0_39, %c0_40, %c8_41], %350 {strides = array<i32>} : memref<1x24x64xf32, #tpu.memory_space<vmem>>, vector<1x8x8xf32>,
    %351 = vector.extract_strided_slice %338 {offsets = [0, 12], sizes = [16, 8], strides = [1, 1]} : vector<16x144xf32> to vector<16x8xf32>
    %c0_42 = arith.constant 0 : index
    %c8_43 = arith.constant 8 : index
    %c8_44 = arith.constant 8 : index
    %352 = vector.load %arg7[%c0_42, %c8_43, %c8_44] : memref<1x24x64xf32, #tpu.memory_space<vmem>>, vector<1x16x8xf32>
    %353 = vector.shape_cast %352 : vector<1x16x8xf32> to vector<16x8xf32>
    %354 = vector.shape_cast %351 : vector<16x8xf32> to vector<1x16x8xf32>
    tpu.vector_store %arg7[%c0_42, %c8_43, %c8_44], %354 {strides = array<i32>} : memref<1x24x64xf32, #tpu.memory_space<vmem>>, vector<1x16x8xf32>,
    %355 = vector.extract_strided_slice %33 {offsets = [0, 24], sizes = [8, 8], strides = [1, 1]} : vector<8x144xf32> to vector<8x8xf32>
    %c0_45 = arith.constant 0 : index
    %c0_46 = arith.constant 0 : index
    %c16 = arith.constant 16 : index
    %356 = vector.load %arg7[%c0_45, %c0_46, %c16] : memref<1x24x64xf32, #tpu.memory_space<vmem>>, vector<1x8x8xf32>
    %357 = vector.shape_cast %356 : vector<1x8x8xf32> to vector<8x8xf32>
    %358 = vector.shape_cast %355 : vector<8x8xf32> to vector<1x8x8xf32>
    tpu.vector_store %arg7[%c0_45, %c0_46, %c16], %358 {strides = array<i32>} : memref<1x24x64xf32, #tpu.memory_space<vmem>>, vector<1x8x8xf32>,
    %359 = vector.extract_strided_slice %338 {offsets = [0, 24], sizes = [16, 8], strides = [1, 1]} : vector<16x144xf32> to vector<16x8xf32>
    %c0_47 = arith.constant 0 : index
    %c8_48 = arith.constant 8 : index
    %c16_49 = arith.constant 16 : index
    %360 = vector.load %arg7[%c0_47, %c8_48, %c16_49] : memref<1x24x64xf32, #tpu.memory_space<vmem>>, vector<1x16x8xf32>
    %361 = vector.shape_cast %360 : vector<1x16x8xf32> to vector<16x8xf32>
    %362 = vector.shape_cast %359 : vector<16x8xf32> to vector<1x16x8xf32>
    tpu.vector_store %arg7[%c0_47, %c8_48, %c16_49], %362 {strides = array<i32>} : memref<1x24x64xf32, #tpu.memory_space<vmem>>, vector<1x16x8xf32>,
    %363 = vector.extract_strided_slice %33 {offsets = [0, 36], sizes = [8, 8], strides = [1, 1]} : vector<8x144xf32> to vector<8x8xf32>
    %c0_50 = arith.constant 0 : index
    %c0_51 = arith.constant 0 : index
    %c24 = arith.constant 24 : index
    %364 = vector.load %arg7[%c0_50, %c0_51, %c24] : memref<1x24x64xf32, #tpu.memory_space<vmem>>, vector<1x8x8xf32>
    %365 = vector.shape_cast %364 : vector<1x8x8xf32> to vector<8x8xf32>
    %366 = vector.shape_cast %363 : vector<8x8xf32> to vector<1x8x8xf32>
    tpu.vector_store %arg7[%c0_50, %c0_51, %c24], %366 {strides = array<i32>} : memref<1x24x64xf32, #tpu.memory_space<vmem>>, vector<1x8x8xf32>,
    %367 = vector.extract_strided_slice %338 {offsets = [0, 36], sizes = [16, 8], strides = [1, 1]} : vector<16x144xf32> to vector<16x8xf32>
    %c0_52 = arith.constant 0 : index
    %c8_53 = arith.constant 8 : index
    %c24_54 = arith.constant 24 : index
    %368 = vector.load %arg7[%c0_52, %c8_53, %c24_54] : memref<1x24x64xf32, #tpu.memory_space<vmem>>, vector<1x16x8xf32>
    %369 = vector.shape_cast %368 : vector<1x16x8xf32> to vector<16x8xf32>
    %370 = vector.shape_cast %367 : vector<16x8xf32> to vector<1x16x8xf32>
    tpu.vector_store %arg7[%c0_52, %c8_53, %c24_54], %370 {strides = array<i32>} : memref<1x24x64xf32, #tpu.memory_space<vmem>>, vector<1x16x8xf32>,
    %371 = vector.extract_strided_slice %33 {offsets = [0, 48], sizes = [8, 8], strides = [1, 1]} : vector<8x144xf32> to vector<8x8xf32>
    %c0_55 = arith.constant 0 : index
    %c0_56 = arith.constant 0 : index
    %c32 = arith.constant 32 : index
    %372 = vector.load %arg7[%c0_55, %c0_56, %c32] : memref<1x24x64xf32, #tpu.memory_space<vmem>>, vector<1x8x8xf32>
    %373 = vector.shape_cast %372 : vector<1x8x8xf32> to vector<8x8xf32>
    %374 = vector.shape_cast %371 : vector<8x8xf32> to vector<1x8x8xf32>
    tpu.vector_store %arg7[%c0_55, %c0_56, %c32], %374 {strides = array<i32>} : memref<1x24x64xf32, #tpu.memory_space<vmem>>, vector<1x8x8xf32>,
    %375 = vector.extract_strided_slice %338 {offsets = [0, 48], sizes = [16, 8], strides = [1, 1]} : vector<16x144xf32> to vector<16x8xf32>
    %c0_57 = arith.constant 0 : index
    %c8_58 = arith.constant 8 : index
    %c32_59 = arith.constant 32 : index
    %376 = vector.load %arg7[%c0_57, %c8_58, %c32_59] : memref<1x24x64xf32, #tpu.memory_space<vmem>>, vector<1x16x8xf32>
    %377 = vector.shape_cast %376 : vector<1x16x8xf32> to vector<16x8xf32>
    %378 = vector.shape_cast %375 : vector<16x8xf32> to vector<1x16x8xf32>
    tpu.vector_store %arg7[%c0_57, %c8_58, %c32_59], %378 {strides = array<i32>} : memref<1x24x64xf32, #tpu.memory_space<vmem>>, vector<1x16x8xf32>,
    %379 = vector.extract_strided_slice %33 {offsets = [0, 60], sizes = [8, 8], strides = [1, 1]} : vector<8x144xf32> to vector<8x8xf32>
    %c0_60 = arith.constant 0 : index
    %c0_61 = arith.constant 0 : index
    %c40 = arith.constant 40 : index
    %380 = vector.load %arg7[%c0_60, %c0_61, %c40] : memref<1x24x64xf32, #tpu.memory_space<vmem>>, vector<1x8x8xf32>
    %381 = vector.shape_cast %380 : vector<1x8x8xf32> to vector<8x8xf32>
    %382 = vector.shape_cast %379 : vector<8x8xf32> to vector<1x8x8xf32>
    tpu.vector_store %arg7[%c0_60, %c0_61, %c40], %382 {strides = array<i32>} : memref<1x24x64xf32, #tpu.memory_space<vmem>>, vector<1x8x8xf32>,
    %383 = vector.extract_strided_slice %338 {offsets = [0, 60], sizes = [16, 8], strides = [1, 1]} : vector<16x144xf32> to vector<16x8xf32>
    %c0_62 = arith.constant 0 : index
    %c8_63 = arith.constant 8 : index
    %c40_64 = arith.constant 40 : index
    %384 = vector.load %arg7[%c0_62, %c8_63, %c40_64] : memref<1x24x64xf32, #tpu.memory_space<vmem>>, vector<1x16x8xf32>
    %385 = vector.shape_cast %384 : vector<1x16x8xf32> to vector<16x8xf32>
    %386 = vector.shape_cast %383 : vector<16x8xf32> to vector<1x16x8xf32>
    tpu.vector_store %arg7[%c0_62, %c8_63, %c40_64], %386 {strides = array<i32>} : memref<1x24x64xf32, #tpu.memory_space<vmem>>, vector<1x16x8xf32>,
    %387 = vector.extract_strided_slice %33 {offsets = [0, 72], sizes = [8, 8], strides = [1, 1]} : vector<8x144xf32> to vector<8x8xf32>
    %c0_65 = arith.constant 0 : index
    %c0_66 = arith.constant 0 : index
    %c48 = arith.constant 48 : index
    %388 = vector.load %arg7[%c0_65, %c0_66, %c48] : memref<1x24x64xf32, #tpu.memory_space<vmem>>, vector<1x8x8xf32>
    %389 = vector.shape_cast %388 : vector<1x8x8xf32> to vector<8x8xf32>
    %390 = vector.shape_cast %387 : vector<8x8xf32> to vector<1x8x8xf32>
    tpu.vector_store %arg7[%c0_65, %c0_66, %c48], %390 {strides = array<i32>} : memref<1x24x64xf32, #tpu.memory_space<vmem>>, vector<1x8x8xf32>,
    %391 = vector.extract_strided_slice %338 {offsets = [0, 72], sizes = [16, 8], strides = [1, 1]} : vector<16x144xf32> to vector<16x8xf32>
    %c0_67 = arith.constant 0 : index
    %c8_68 = arith.constant 8 : index
    %c48_69 = arith.constant 48 : index
    %392 = vector.load %arg7[%c0_67, %c8_68, %c48_69] : memref<1x24x64xf32, #tpu.memory_space<vmem>>, vector<1x16x8xf32>
    %393 = vector.shape_cast %392 : vector<1x16x8xf32> to vector<16x8xf32>
    %394 = vector.shape_cast %391 : vector<16x8xf32> to vector<1x16x8xf32>
    tpu.vector_store %arg7[%c0_67, %c8_68, %c48_69], %394 {strides = array<i32>} : memref<1x24x64xf32, #tpu.memory_space<vmem>>, vector<1x16x8xf32>,
    %395 = vector.extract_strided_slice %33 {offsets = [0, 84], sizes = [8, 8], strides = [1, 1]} : vector<8x144xf32> to vector<8x8xf32>
    %c0_70 = arith.constant 0 : index
    %c0_71 = arith.constant 0 : index
    %c56 = arith.constant 56 : index
    %396 = vector.load %arg7[%c0_70, %c0_71, %c56] : memref<1x24x64xf32, #tpu.memory_space<vmem>>, vector<1x8x8xf32>
    %397 = vector.shape_cast %396 : vector<1x8x8xf32> to vector<8x8xf32>
    %398 = vector.shape_cast %395 : vector<8x8xf32> to vector<1x8x8xf32>
    tpu.vector_store %arg7[%c0_70, %c0_71, %c56], %398 {strides = array<i32>} : memref<1x24x64xf32, #tpu.memory_space<vmem>>, vector<1x8x8xf32>,
    %399 = vector.extract_strided_slice %338 {offsets = [0, 84], sizes = [16, 8], strides = [1, 1]} : vector<16x144xf32> to vector<16x8xf32>
    %c0_72 = arith.constant 0 : index
    %c8_73 = arith.constant 8 : index
    %c56_74 = arith.constant 56 : index
    %400 = vector.load %arg7[%c0_72, %c8_73, %c56_74] : memref<1x24x64xf32, #tpu.memory_space<vmem>>, vector<1x16x8xf32>
    %401 = vector.shape_cast %400 : vector<1x16x8xf32> to vector<16x8xf32>
    %402 = vector.shape_cast %399 : vector<16x8xf32> to vector<1x16x8xf32>
    tpu.vector_store %arg7[%c0_72, %c8_73, %c56_74], %402 {strides = array<i32>} : memref<1x24x64xf32, #tpu.memory_space<vmem>>, vector<1x16x8xf32>,
    return
  }
  func.func @transform_0(%arg0: i32) -> (i32, i32, i32, i32) {
    %c0_i32 = arith.constant 0 : i32
    %c0_i32_0 = arith.constant 0 : i32
    %c0_i32_1 = arith.constant 0 : i32
    %c0_i32_2 = arith.constant 0 : i32
    return %arg0, %c0_i32, %c0_i32_0, %c0_i32_1 : i32, i32, i32, i32
  }
  func.func @transform_1(%arg0: i32) -> (i32, i32) {
    %c0_i32 = arith.constant 0 : i32
    %c0_i32_0 = arith.constant 0 : i32
    %c0_i32_1 = arith.constant 0 : i32
    return %c0_i32, %c0_i32_0 : i32, i32
  }
  func.func @transform_2(%arg0: i32) -> (i32, i32) {
    %c0_i32 = arith.constant 0 : i32
    %c0_i32_0 = arith.constant 0 : i32
    %c0_i32_1 = arith.constant 0 : i32
    return %c0_i32, %c0_i32_0 : i32, i32
  }
  func.func @transform_3(%arg0: i32) -> (i32, i32) {
    %c0_i32 = arith.constant 0 : i32
    %c0_i32_0 = arith.constant 0 : i32
    %c0_i32_1 = arith.constant 0 : i32
    return %c0_i32, %c0_i32_0 : i32, i32
  }
  func.func @transform_4(%arg0: i32) -> (i32, i32) {
    %c0_i32 = arith.constant 0 : i32
    %c0_i32_0 = arith.constant 0 : i32
    %c0_i32_1 = arith.constant 0 : i32
    return %c0_i32, %c0_i32_0 : i32, i32
  }
  func.func @transform_5(%arg0: i32) -> (i32, i32) {
    %c0_i32 = arith.constant 0 : i32
    %c0_i32_0 = arith.constant 0 : i32
    %c0_i32_1 = arith.constant 0 : i32
    return %c0_i32, %c0_i32_0 : i32, i32
  }
  func.func @transform_6(%arg0: i32) -> (i32, i32, i32) {
    %c0_i32 = arith.constant 0 : i32
    %c0_i32_0 = arith.constant 0 : i32
    %c0_i32_1 = arith.constant 0 : i32
    return %arg0, %c0_i32, %c0_i32_0 : i32, i32, i32
  }
}

module attributes {stable_mosaic.version = 11 : i64} {
  func.func @_avgpool_kernel(%arg0: i32, %arg1: memref<1x4x3x307xf32, #tpu.memory_space<vmem>>, %arg2: memref<1x3x256xf32, #tpu.memory_space<vmem>>) attributes {dimension_semantics = [#tpu.dimension_semantics<parallel>], iteration_bounds = array<i64: 2>, scalar_prefetch = 0 : i64, scratch_operands = 0 : i64, tpu.core_type = #tpu.core_type<tc>, window_params = [{transform_indices = @transform_0, window_bounds = array<i64: 1, 4, 3, 307>}, {transform_indices = @transform_1, window_bounds = array<i64: 1, 3, 256>}]} {
    %c0 = arith.constant 0 : index
    %c0_0 = arith.constant 0 : index
    %c0_1 = arith.constant 0 : index
    %c0_2 = arith.constant 0 : index
    %0 = vector.load %arg1[%c0, %c0_0, %c0_1, %c0_2] : memref<1x4x3x307xf32, #tpu.memory_space<vmem>>, vector<1x4x3x307xf32>
    %1 = vector.shape_cast %0 : vector<1x4x3x307xf32> to vector<4x3x307xf32>
    %2 = vector.extract_strided_slice %1 {offsets = [0, 0, 0], sizes = [1, 3, 307], strides = [1, 1, 1]} : vector<4x3x307xf32> to vector<1x3x307xf32>
    %3 = vector.shape_cast %2 : vector<1x3x307xf32> to vector<3x307xf32>
    %4 = vector.extract_strided_slice %3 {offsets = [0, 0], sizes = [3, 289], strides = [1, 1]} : vector<3x307xf32> to vector<3x289xf32>
    %5 = vector.extract_strided_slice %1 {offsets = [1, 0, 0], sizes = [1, 3, 307], strides = [1, 1, 1]} : vector<4x3x307xf32> to vector<1x3x307xf32>
    %6 = vector.shape_cast %5 : vector<1x3x307xf32> to vector<3x307xf32>
    %7 = vector.extract_strided_slice %6 {offsets = [0, 0], sizes = [3, 289], strides = [1, 1]} : vector<3x307xf32> to vector<3x289xf32>
    %8 = arith.addf %4, %7 : vector<3x289xf32>
    %9 = vector.extract_strided_slice %1 {offsets = [0, 0, 0], sizes = [1, 3, 307], strides = [1, 1, 1]} : vector<4x3x307xf32> to vector<1x3x307xf32>
    %10 = vector.shape_cast %9 : vector<1x3x307xf32> to vector<3x307xf32>
    %11 = vector.extract_strided_slice %10 {offsets = [0, 1], sizes = [3, 289], strides = [1, 1]} : vector<3x307xf32> to vector<3x289xf32>
    %12 = arith.addf %8, %11 : vector<3x289xf32>
    %13 = vector.extract_strided_slice %1 {offsets = [2, 0, 0], sizes = [1, 3, 307], strides = [1, 1, 1]} : vector<4x3x307xf32> to vector<1x3x307xf32>
    %14 = vector.shape_cast %13 : vector<1x3x307xf32> to vector<3x307xf32>
    %15 = vector.extract_strided_slice %14 {offsets = [0, 0], sizes = [3, 289], strides = [1, 1]} : vector<3x307xf32> to vector<3x289xf32>
    %16 = arith.addf %12, %15 : vector<3x289xf32>
    %17 = vector.extract_strided_slice %1 {offsets = [3, 0, 0], sizes = [1, 3, 307], strides = [1, 1, 1]} : vector<4x3x307xf32> to vector<1x3x307xf32>
    %18 = vector.shape_cast %17 : vector<1x3x307xf32> to vector<3x307xf32>
    %19 = vector.extract_strided_slice %18 {offsets = [0, 0], sizes = [3, 289], strides = [1, 1]} : vector<3x307xf32> to vector<3x289xf32>
    %20 = arith.addf %16, %19 : vector<3x289xf32>
    %21 = vector.extract_strided_slice %1 {offsets = [2, 0, 0], sizes = [1, 3, 307], strides = [1, 1, 1]} : vector<4x3x307xf32> to vector<1x3x307xf32>
    %22 = vector.shape_cast %21 : vector<1x3x307xf32> to vector<3x307xf32>
    %23 = vector.extract_strided_slice %22 {offsets = [0, 1], sizes = [3, 289], strides = [1, 1]} : vector<3x307xf32> to vector<3x289xf32>
    %24 = arith.addf %20, %23 : vector<3x289xf32>
    %25 = vector.extract_strided_slice %1 {offsets = [0, 0, 0], sizes = [1, 3, 307], strides = [1, 1, 1]} : vector<4x3x307xf32> to vector<1x3x307xf32>
    %26 = vector.shape_cast %25 : vector<1x3x307xf32> to vector<3x307xf32>
    %27 = vector.extract_strided_slice %26 {offsets = [0, 17], sizes = [3, 289], strides = [1, 1]} : vector<3x307xf32> to vector<3x289xf32>
    %28 = arith.addf %24, %27 : vector<3x289xf32>
    %29 = vector.extract_strided_slice %1 {offsets = [1, 0, 0], sizes = [1, 3, 307], strides = [1, 1, 1]} : vector<4x3x307xf32> to vector<1x3x307xf32>
    %30 = vector.shape_cast %29 : vector<1x3x307xf32> to vector<3x307xf32>
    %31 = vector.extract_strided_slice %30 {offsets = [0, 17], sizes = [3, 289], strides = [1, 1]} : vector<3x307xf32> to vector<3x289xf32>
    %32 = arith.addf %28, %31 : vector<3x289xf32>
    %33 = vector.extract_strided_slice %1 {offsets = [0, 0, 0], sizes = [1, 3, 307], strides = [1, 1, 1]} : vector<4x3x307xf32> to vector<1x3x307xf32>
    %34 = vector.shape_cast %33 : vector<1x3x307xf32> to vector<3x307xf32>
    %35 = vector.extract_strided_slice %34 {offsets = [0, 18], sizes = [3, 289], strides = [1, 1]} : vector<3x307xf32> to vector<3x289xf32>
    %36 = arith.addf %32, %35 : vector<3x289xf32>
    %cst = arith.constant 0.111111112 : f32
    %37 = vector.broadcast %cst : f32 to vector<3x289xf32>
    %38 = arith.mulf %36, %37 : vector<3x289xf32>
    %39 = vector.extract_strided_slice %38 {offsets = [0, 0], sizes = [3, 16], strides = [1, 1]} : vector<3x289xf32> to vector<3x16xf32>
    %c0_3 = arith.constant 0 : index
    %c0_4 = arith.constant 0 : index
    %c0_5 = arith.constant 0 : index
    %40 = vector.load %arg2[%c0_3, %c0_4, %c0_5] : memref<1x3x256xf32, #tpu.memory_space<vmem>>, vector<1x3x16xf32>
    %41 = vector.shape_cast %40 : vector<1x3x16xf32> to vector<3x16xf32>
    %42 = vector.shape_cast %39 : vector<3x16xf32> to vector<1x3x16xf32>
    tpu.vector_store %arg2[%c0_3, %c0_4, %c0_5], %42 {strides = array<i32>} : memref<1x3x256xf32, #tpu.memory_space<vmem>>, vector<1x3x16xf32>,
    %43 = vector.extract_strided_slice %38 {offsets = [0, 17], sizes = [3, 16], strides = [1, 1]} : vector<3x289xf32> to vector<3x16xf32>
    %c0_6 = arith.constant 0 : index
    %c0_7 = arith.constant 0 : index
    %c16 = arith.constant 16 : index
    %44 = vector.load %arg2[%c0_6, %c0_7, %c16] : memref<1x3x256xf32, #tpu.memory_space<vmem>>, vector<1x3x16xf32>
    %45 = vector.shape_cast %44 : vector<1x3x16xf32> to vector<3x16xf32>
    %46 = vector.shape_cast %43 : vector<3x16xf32> to vector<1x3x16xf32>
    tpu.vector_store %arg2[%c0_6, %c0_7, %c16], %46 {strides = array<i32>} : memref<1x3x256xf32, #tpu.memory_space<vmem>>, vector<1x3x16xf32>,
    %47 = vector.extract_strided_slice %38 {offsets = [0, 34], sizes = [3, 16], strides = [1, 1]} : vector<3x289xf32> to vector<3x16xf32>
    %c0_8 = arith.constant 0 : index
    %c0_9 = arith.constant 0 : index
    %c32 = arith.constant 32 : index
    %48 = vector.load %arg2[%c0_8, %c0_9, %c32] : memref<1x3x256xf32, #tpu.memory_space<vmem>>, vector<1x3x16xf32>
    %49 = vector.shape_cast %48 : vector<1x3x16xf32> to vector<3x16xf32>
    %50 = vector.shape_cast %47 : vector<3x16xf32> to vector<1x3x16xf32>
    tpu.vector_store %arg2[%c0_8, %c0_9, %c32], %50 {strides = array<i32>} : memref<1x3x256xf32, #tpu.memory_space<vmem>>, vector<1x3x16xf32>,
    %51 = vector.extract_strided_slice %38 {offsets = [0, 51], sizes = [3, 16], strides = [1, 1]} : vector<3x289xf32> to vector<3x16xf32>
    %c0_10 = arith.constant 0 : index
    %c0_11 = arith.constant 0 : index
    %c48 = arith.constant 48 : index
    %52 = vector.load %arg2[%c0_10, %c0_11, %c48] : memref<1x3x256xf32, #tpu.memory_space<vmem>>, vector<1x3x16xf32>
    %53 = vector.shape_cast %52 : vector<1x3x16xf32> to vector<3x16xf32>
    %54 = vector.shape_cast %51 : vector<3x16xf32> to vector<1x3x16xf32>
    tpu.vector_store %arg2[%c0_10, %c0_11, %c48], %54 {strides = array<i32>} : memref<1x3x256xf32, #tpu.memory_space<vmem>>, vector<1x3x16xf32>,
    %55 = vector.extract_strided_slice %38 {offsets = [0, 68], sizes = [3, 16], strides = [1, 1]} : vector<3x289xf32> to vector<3x16xf32>
    %c0_12 = arith.constant 0 : index
    %c0_13 = arith.constant 0 : index
    %c64 = arith.constant 64 : index
    %56 = vector.load %arg2[%c0_12, %c0_13, %c64] : memref<1x3x256xf32, #tpu.memory_space<vmem>>, vector<1x3x16xf32>
    %57 = vector.shape_cast %56 : vector<1x3x16xf32> to vector<3x16xf32>
    %58 = vector.shape_cast %55 : vector<3x16xf32> to vector<1x3x16xf32>
    tpu.vector_store %arg2[%c0_12, %c0_13, %c64], %58 {strides = array<i32>} : memref<1x3x256xf32, #tpu.memory_space<vmem>>, vector<1x3x16xf32>,
    %59 = vector.extract_strided_slice %38 {offsets = [0, 85], sizes = [3, 16], strides = [1, 1]} : vector<3x289xf32> to vector<3x16xf32>
    %c0_14 = arith.constant 0 : index
    %c0_15 = arith.constant 0 : index
    %c80 = arith.constant 80 : index
    %60 = vector.load %arg2[%c0_14, %c0_15, %c80] : memref<1x3x256xf32, #tpu.memory_space<vmem>>, vector<1x3x16xf32>
    %61 = vector.shape_cast %60 : vector<1x3x16xf32> to vector<3x16xf32>
    %62 = vector.shape_cast %59 : vector<3x16xf32> to vector<1x3x16xf32>
    tpu.vector_store %arg2[%c0_14, %c0_15, %c80], %62 {strides = array<i32>} : memref<1x3x256xf32, #tpu.memory_space<vmem>>, vector<1x3x16xf32>,
    %63 = vector.extract_strided_slice %38 {offsets = [0, 102], sizes = [3, 16], strides = [1, 1]} : vector<3x289xf32> to vector<3x16xf32>
    %c0_16 = arith.constant 0 : index
    %c0_17 = arith.constant 0 : index
    %c96 = arith.constant 96 : index
    %64 = vector.load %arg2[%c0_16, %c0_17, %c96] : memref<1x3x256xf32, #tpu.memory_space<vmem>>, vector<1x3x16xf32>
    %65 = vector.shape_cast %64 : vector<1x3x16xf32> to vector<3x16xf32>
    %66 = vector.shape_cast %63 : vector<3x16xf32> to vector<1x3x16xf32>
    tpu.vector_store %arg2[%c0_16, %c0_17, %c96], %66 {strides = array<i32>} : memref<1x3x256xf32, #tpu.memory_space<vmem>>, vector<1x3x16xf32>,
    %67 = vector.extract_strided_slice %38 {offsets = [0, 119], sizes = [3, 16], strides = [1, 1]} : vector<3x289xf32> to vector<3x16xf32>
    %c0_18 = arith.constant 0 : index
    %c0_19 = arith.constant 0 : index
    %c112 = arith.constant 112 : index
    %68 = vector.load %arg2[%c0_18, %c0_19, %c112] : memref<1x3x256xf32, #tpu.memory_space<vmem>>, vector<1x3x16xf32>
    %69 = vector.shape_cast %68 : vector<1x3x16xf32> to vector<3x16xf32>
    %70 = vector.shape_cast %67 : vector<3x16xf32> to vector<1x3x16xf32>
    tpu.vector_store %arg2[%c0_18, %c0_19, %c112], %70 {strides = array<i32>} : memref<1x3x256xf32, #tpu.memory_space<vmem>>, vector<1x3x16xf32>,
    %71 = vector.extract_strided_slice %38 {offsets = [0, 136], sizes = [3, 16], strides = [1, 1]} : vector<3x289xf32> to vector<3x16xf32>
    %c0_20 = arith.constant 0 : index
    %c0_21 = arith.constant 0 : index
    %c128 = arith.constant 128 : index
    %72 = vector.load %arg2[%c0_20, %c0_21, %c128] : memref<1x3x256xf32, #tpu.memory_space<vmem>>, vector<1x3x16xf32>
    %73 = vector.shape_cast %72 : vector<1x3x16xf32> to vector<3x16xf32>
    %74 = vector.shape_cast %71 : vector<3x16xf32> to vector<1x3x16xf32>
    tpu.vector_store %arg2[%c0_20, %c0_21, %c128], %74 {strides = array<i32>} : memref<1x3x256xf32, #tpu.memory_space<vmem>>, vector<1x3x16xf32>,
    %75 = vector.extract_strided_slice %38 {offsets = [0, 153], sizes = [3, 16], strides = [1, 1]} : vector<3x289xf32> to vector<3x16xf32>
    %c0_22 = arith.constant 0 : index
    %c0_23 = arith.constant 0 : index
    %c144 = arith.constant 144 : index
    %76 = vector.load %arg2[%c0_22, %c0_23, %c144] : memref<1x3x256xf32, #tpu.memory_space<vmem>>, vector<1x3x16xf32>
    %77 = vector.shape_cast %76 : vector<1x3x16xf32> to vector<3x16xf32>
    %78 = vector.shape_cast %75 : vector<3x16xf32> to vector<1x3x16xf32>
    tpu.vector_store %arg2[%c0_22, %c0_23, %c144], %78 {strides = array<i32>} : memref<1x3x256xf32, #tpu.memory_space<vmem>>, vector<1x3x16xf32>,
    %79 = vector.extract_strided_slice %38 {offsets = [0, 170], sizes = [3, 16], strides = [1, 1]} : vector<3x289xf32> to vector<3x16xf32>
    %c0_24 = arith.constant 0 : index
    %c0_25 = arith.constant 0 : index
    %c160 = arith.constant 160 : index
    %80 = vector.load %arg2[%c0_24, %c0_25, %c160] : memref<1x3x256xf32, #tpu.memory_space<vmem>>, vector<1x3x16xf32>
    %81 = vector.shape_cast %80 : vector<1x3x16xf32> to vector<3x16xf32>
    %82 = vector.shape_cast %79 : vector<3x16xf32> to vector<1x3x16xf32>
    tpu.vector_store %arg2[%c0_24, %c0_25, %c160], %82 {strides = array<i32>} : memref<1x3x256xf32, #tpu.memory_space<vmem>>, vector<1x3x16xf32>,
    %83 = vector.extract_strided_slice %38 {offsets = [0, 187], sizes = [3, 16], strides = [1, 1]} : vector<3x289xf32> to vector<3x16xf32>
    %c0_26 = arith.constant 0 : index
    %c0_27 = arith.constant 0 : index
    %c176 = arith.constant 176 : index
    %84 = vector.load %arg2[%c0_26, %c0_27, %c176] : memref<1x3x256xf32, #tpu.memory_space<vmem>>, vector<1x3x16xf32>
    %85 = vector.shape_cast %84 : vector<1x3x16xf32> to vector<3x16xf32>
    %86 = vector.shape_cast %83 : vector<3x16xf32> to vector<1x3x16xf32>
    tpu.vector_store %arg2[%c0_26, %c0_27, %c176], %86 {strides = array<i32>} : memref<1x3x256xf32, #tpu.memory_space<vmem>>, vector<1x3x16xf32>,
    %87 = vector.extract_strided_slice %38 {offsets = [0, 204], sizes = [3, 16], strides = [1, 1]} : vector<3x289xf32> to vector<3x16xf32>
    %c0_28 = arith.constant 0 : index
    %c0_29 = arith.constant 0 : index
    %c192 = arith.constant 192 : index
    %88 = vector.load %arg2[%c0_28, %c0_29, %c192] : memref<1x3x256xf32, #tpu.memory_space<vmem>>, vector<1x3x16xf32>
    %89 = vector.shape_cast %88 : vector<1x3x16xf32> to vector<3x16xf32>
    %90 = vector.shape_cast %87 : vector<3x16xf32> to vector<1x3x16xf32>
    tpu.vector_store %arg2[%c0_28, %c0_29, %c192], %90 {strides = array<i32>} : memref<1x3x256xf32, #tpu.memory_space<vmem>>, vector<1x3x16xf32>,
    %91 = vector.extract_strided_slice %38 {offsets = [0, 221], sizes = [3, 16], strides = [1, 1]} : vector<3x289xf32> to vector<3x16xf32>
    %c0_30 = arith.constant 0 : index
    %c0_31 = arith.constant 0 : index
    %c208 = arith.constant 208 : index
    %92 = vector.load %arg2[%c0_30, %c0_31, %c208] : memref<1x3x256xf32, #tpu.memory_space<vmem>>, vector<1x3x16xf32>
    %93 = vector.shape_cast %92 : vector<1x3x16xf32> to vector<3x16xf32>
    %94 = vector.shape_cast %91 : vector<3x16xf32> to vector<1x3x16xf32>
    tpu.vector_store %arg2[%c0_30, %c0_31, %c208], %94 {strides = array<i32>} : memref<1x3x256xf32, #tpu.memory_space<vmem>>, vector<1x3x16xf32>,
    %95 = vector.extract_strided_slice %38 {offsets = [0, 238], sizes = [3, 16], strides = [1, 1]} : vector<3x289xf32> to vector<3x16xf32>
    %c0_32 = arith.constant 0 : index
    %c0_33 = arith.constant 0 : index
    %c224 = arith.constant 224 : index
    %96 = vector.load %arg2[%c0_32, %c0_33, %c224] : memref<1x3x256xf32, #tpu.memory_space<vmem>>, vector<1x3x16xf32>
    %97 = vector.shape_cast %96 : vector<1x3x16xf32> to vector<3x16xf32>
    %98 = vector.shape_cast %95 : vector<3x16xf32> to vector<1x3x16xf32>
    tpu.vector_store %arg2[%c0_32, %c0_33, %c224], %98 {strides = array<i32>} : memref<1x3x256xf32, #tpu.memory_space<vmem>>, vector<1x3x16xf32>,
    %99 = vector.extract_strided_slice %38 {offsets = [0, 255], sizes = [3, 16], strides = [1, 1]} : vector<3x289xf32> to vector<3x16xf32>
    %c0_34 = arith.constant 0 : index
    %c0_35 = arith.constant 0 : index
    %c240 = arith.constant 240 : index
    %100 = vector.load %arg2[%c0_34, %c0_35, %c240] : memref<1x3x256xf32, #tpu.memory_space<vmem>>, vector<1x3x16xf32>
    %101 = vector.shape_cast %100 : vector<1x3x16xf32> to vector<3x16xf32>
    %102 = vector.shape_cast %99 : vector<3x16xf32> to vector<1x3x16xf32>
    tpu.vector_store %arg2[%c0_34, %c0_35, %c240], %102 {strides = array<i32>} : memref<1x3x256xf32, #tpu.memory_space<vmem>>, vector<1x3x16xf32>,
    return
  }
  func.func @transform_0(%arg0: i32) -> (i32, i32, i32, i32) {
    %c0_i32 = arith.constant 0 : i32
    %c0_i32_0 = arith.constant 0 : i32
    %c0_i32_1 = arith.constant 0 : i32
    %c0_i32_2 = arith.constant 0 : i32
    return %arg0, %c0_i32, %c0_i32_0, %c0_i32_1 : i32, i32, i32, i32
  }
  func.func @transform_1(%arg0: i32) -> (i32, i32, i32) {
    %c0_i32 = arith.constant 0 : i32
    %c0_i32_0 = arith.constant 0 : i32
    %c0_i32_1 = arith.constant 0 : i32
    return %arg0, %c0_i32, %c0_i32_0 : i32, i32, i32
  }
}

module attributes {stable_mosaic.version = 11 : i64} {
  func.func @_avgpool_kernel(%arg0: i32, %arg1: memref<1x4x3x91xf32, #tpu.memory_space<vmem>>, %arg2: memref<1x3x100xf32, #tpu.memory_space<vmem>>) attributes {dimension_semantics = [#tpu.dimension_semantics<parallel>], iteration_bounds = array<i64: 2>, scalar_prefetch = 0 : i64, scratch_operands = 0 : i64, tpu.core_type = #tpu.core_type<tc>, window_params = [{transform_indices = @transform_0, window_bounds = array<i64: 1, 4, 3, 91>}, {transform_indices = @transform_1, window_bounds = array<i64: 1, 3, 100>}]} {
    %c0 = arith.constant 0 : index
    %c0_0 = arith.constant 0 : index
    %c0_1 = arith.constant 0 : index
    %c0_2 = arith.constant 0 : index
    %0 = vector.load %arg1[%c0, %c0_0, %c0_1, %c0_2] : memref<1x4x3x91xf32, #tpu.memory_space<vmem>>, vector<1x4x3x91xf32>
    %1 = vector.shape_cast %0 : vector<1x4x3x91xf32> to vector<4x3x91xf32>
    %2 = vector.extract_strided_slice %1 {offsets = [0, 0, 0], sizes = [1, 3, 91], strides = [1, 1, 1]} : vector<4x3x91xf32> to vector<1x3x91xf32>
    %3 = vector.shape_cast %2 : vector<1x3x91xf32> to vector<3x91xf32>
    %4 = vector.extract_strided_slice %3 {offsets = [0, 0], sizes = [3, 81], strides = [1, 1]} : vector<3x91xf32> to vector<3x81xf32>
    %5 = vector.extract_strided_slice %1 {offsets = [1, 0, 0], sizes = [1, 3, 91], strides = [1, 1, 1]} : vector<4x3x91xf32> to vector<1x3x91xf32>
    %6 = vector.shape_cast %5 : vector<1x3x91xf32> to vector<3x91xf32>
    %7 = vector.extract_strided_slice %6 {offsets = [0, 0], sizes = [3, 81], strides = [1, 1]} : vector<3x91xf32> to vector<3x81xf32>
    %8 = arith.addf %4, %7 : vector<3x81xf32>
    %9 = vector.extract_strided_slice %1 {offsets = [0, 0, 0], sizes = [1, 3, 91], strides = [1, 1, 1]} : vector<4x3x91xf32> to vector<1x3x91xf32>
    %10 = vector.shape_cast %9 : vector<1x3x91xf32> to vector<3x91xf32>
    %11 = vector.extract_strided_slice %10 {offsets = [0, 1], sizes = [3, 81], strides = [1, 1]} : vector<3x91xf32> to vector<3x81xf32>
    %12 = arith.addf %8, %11 : vector<3x81xf32>
    %13 = vector.extract_strided_slice %1 {offsets = [2, 0, 0], sizes = [1, 3, 91], strides = [1, 1, 1]} : vector<4x3x91xf32> to vector<1x3x91xf32>
    %14 = vector.shape_cast %13 : vector<1x3x91xf32> to vector<3x91xf32>
    %15 = vector.extract_strided_slice %14 {offsets = [0, 0], sizes = [3, 81], strides = [1, 1]} : vector<3x91xf32> to vector<3x81xf32>
    %16 = arith.addf %12, %15 : vector<3x81xf32>
    %17 = vector.extract_strided_slice %1 {offsets = [3, 0, 0], sizes = [1, 3, 91], strides = [1, 1, 1]} : vector<4x3x91xf32> to vector<1x3x91xf32>
    %18 = vector.shape_cast %17 : vector<1x3x91xf32> to vector<3x91xf32>
    %19 = vector.extract_strided_slice %18 {offsets = [0, 0], sizes = [3, 81], strides = [1, 1]} : vector<3x91xf32> to vector<3x81xf32>
    %20 = arith.addf %16, %19 : vector<3x81xf32>
    %21 = vector.extract_strided_slice %1 {offsets = [2, 0, 0], sizes = [1, 3, 91], strides = [1, 1, 1]} : vector<4x3x91xf32> to vector<1x3x91xf32>
    %22 = vector.shape_cast %21 : vector<1x3x91xf32> to vector<3x91xf32>
    %23 = vector.extract_strided_slice %22 {offsets = [0, 1], sizes = [3, 81], strides = [1, 1]} : vector<3x91xf32> to vector<3x81xf32>
    %24 = arith.addf %20, %23 : vector<3x81xf32>
    %25 = vector.extract_strided_slice %1 {offsets = [0, 0, 0], sizes = [1, 3, 91], strides = [1, 1, 1]} : vector<4x3x91xf32> to vector<1x3x91xf32>
    %26 = vector.shape_cast %25 : vector<1x3x91xf32> to vector<3x91xf32>
    %27 = vector.extract_strided_slice %26 {offsets = [0, 9], sizes = [3, 81], strides = [1, 1]} : vector<3x91xf32> to vector<3x81xf32>
    %28 = arith.addf %24, %27 : vector<3x81xf32>
    %29 = vector.extract_strided_slice %1 {offsets = [1, 0, 0], sizes = [1, 3, 91], strides = [1, 1, 1]} : vector<4x3x91xf32> to vector<1x3x91xf32>
    %30 = vector.shape_cast %29 : vector<1x3x91xf32> to vector<3x91xf32>
    %31 = vector.extract_strided_slice %30 {offsets = [0, 9], sizes = [3, 81], strides = [1, 1]} : vector<3x91xf32> to vector<3x81xf32>
    %32 = arith.addf %28, %31 : vector<3x81xf32>
    %33 = vector.extract_strided_slice %1 {offsets = [0, 0, 0], sizes = [1, 3, 91], strides = [1, 1, 1]} : vector<4x3x91xf32> to vector<1x3x91xf32>
    %34 = vector.shape_cast %33 : vector<1x3x91xf32> to vector<3x91xf32>
    %35 = vector.extract_strided_slice %34 {offsets = [0, 10], sizes = [3, 81], strides = [1, 1]} : vector<3x91xf32> to vector<3x81xf32>
    %36 = arith.addf %32, %35 : vector<3x81xf32>
    %cst = arith.constant 0.111111112 : f32
    %37 = vector.broadcast %cst : f32 to vector<3x81xf32>
    %38 = arith.mulf %36, %37 : vector<3x81xf32>
    %cst_3 = arith.constant 0.000000e+00 : f32
    %39 = vector.broadcast %cst_3 : f32 to vector<3x100xf32>
    %c0_4 = arith.constant 0 : index
    %c0_5 = arith.constant 0 : index
    %c0_6 = arith.constant 0 : index
    %40 = vector.load %arg2[%c0_4, %c0_5, %c0_6] : memref<1x3x100xf32, #tpu.memory_space<vmem>>, vector<1x3x100xf32>
    %41 = vector.shape_cast %40 : vector<1x3x100xf32> to vector<3x100xf32>
    %42 = vector.shape_cast %39 : vector<3x100xf32> to vector<1x3x100xf32>
    tpu.vector_store %arg2[%c0_4, %c0_5, %c0_6], %42 {strides = array<i32>} : memref<1x3x100xf32, #tpu.memory_space<vmem>>, vector<1x3x100xf32>,
    %43 = vector.extract_strided_slice %38 {offsets = [0, 0], sizes = [3, 8], strides = [1, 1]} : vector<3x81xf32> to vector<3x8xf32>
    %c0_7 = arith.constant 0 : index
    %c0_8 = arith.constant 0 : index
    %c11 = arith.constant 11 : index
    %44 = vector.load %arg2[%c0_7, %c0_8, %c11] : memref<1x3x100xf32, #tpu.memory_space<vmem>>, vector<1x3x8xf32>
    %45 = vector.shape_cast %44 : vector<1x3x8xf32> to vector<3x8xf32>
    %46 = vector.shape_cast %43 : vector<3x8xf32> to vector<1x3x8xf32>
    tpu.vector_store %arg2[%c0_7, %c0_8, %c11], %46 {strides = array<i32>} : memref<1x3x100xf32, #tpu.memory_space<vmem>>, vector<1x3x8xf32>,
    %47 = vector.extract_strided_slice %38 {offsets = [0, 9], sizes = [3, 8], strides = [1, 1]} : vector<3x81xf32> to vector<3x8xf32>
    %c0_9 = arith.constant 0 : index
    %c0_10 = arith.constant 0 : index
    %c21 = arith.constant 21 : index
    %48 = vector.load %arg2[%c0_9, %c0_10, %c21] : memref<1x3x100xf32, #tpu.memory_space<vmem>>, vector<1x3x8xf32>
    %49 = vector.shape_cast %48 : vector<1x3x8xf32> to vector<3x8xf32>
    %50 = vector.shape_cast %47 : vector<3x8xf32> to vector<1x3x8xf32>
    tpu.vector_store %arg2[%c0_9, %c0_10, %c21], %50 {strides = array<i32>} : memref<1x3x100xf32, #tpu.memory_space<vmem>>, vector<1x3x8xf32>,
    %51 = vector.extract_strided_slice %38 {offsets = [0, 18], sizes = [3, 8], strides = [1, 1]} : vector<3x81xf32> to vector<3x8xf32>
    %c0_11 = arith.constant 0 : index
    %c0_12 = arith.constant 0 : index
    %c31 = arith.constant 31 : index
    %52 = vector.load %arg2[%c0_11, %c0_12, %c31] : memref<1x3x100xf32, #tpu.memory_space<vmem>>, vector<1x3x8xf32>
    %53 = vector.shape_cast %52 : vector<1x3x8xf32> to vector<3x8xf32>
    %54 = vector.shape_cast %51 : vector<3x8xf32> to vector<1x3x8xf32>
    tpu.vector_store %arg2[%c0_11, %c0_12, %c31], %54 {strides = array<i32>} : memref<1x3x100xf32, #tpu.memory_space<vmem>>, vector<1x3x8xf32>,
    %55 = vector.extract_strided_slice %38 {offsets = [0, 27], sizes = [3, 8], strides = [1, 1]} : vector<3x81xf32> to vector<3x8xf32>
    %c0_13 = arith.constant 0 : index
    %c0_14 = arith.constant 0 : index
    %c41 = arith.constant 41 : index
    %56 = vector.load %arg2[%c0_13, %c0_14, %c41] : memref<1x3x100xf32, #tpu.memory_space<vmem>>, vector<1x3x8xf32>
    %57 = vector.shape_cast %56 : vector<1x3x8xf32> to vector<3x8xf32>
    %58 = vector.shape_cast %55 : vector<3x8xf32> to vector<1x3x8xf32>
    tpu.vector_store %arg2[%c0_13, %c0_14, %c41], %58 {strides = array<i32>} : memref<1x3x100xf32, #tpu.memory_space<vmem>>, vector<1x3x8xf32>,
    %59 = vector.extract_strided_slice %38 {offsets = [0, 36], sizes = [3, 8], strides = [1, 1]} : vector<3x81xf32> to vector<3x8xf32>
    %c0_15 = arith.constant 0 : index
    %c0_16 = arith.constant 0 : index
    %c51 = arith.constant 51 : index
    %60 = vector.load %arg2[%c0_15, %c0_16, %c51] : memref<1x3x100xf32, #tpu.memory_space<vmem>>, vector<1x3x8xf32>
    %61 = vector.shape_cast %60 : vector<1x3x8xf32> to vector<3x8xf32>
    %62 = vector.shape_cast %59 : vector<3x8xf32> to vector<1x3x8xf32>
    tpu.vector_store %arg2[%c0_15, %c0_16, %c51], %62 {strides = array<i32>} : memref<1x3x100xf32, #tpu.memory_space<vmem>>, vector<1x3x8xf32>,
    %63 = vector.extract_strided_slice %38 {offsets = [0, 45], sizes = [3, 8], strides = [1, 1]} : vector<3x81xf32> to vector<3x8xf32>
    %c0_17 = arith.constant 0 : index
    %c0_18 = arith.constant 0 : index
    %c61 = arith.constant 61 : index
    %64 = vector.load %arg2[%c0_17, %c0_18, %c61] : memref<1x3x100xf32, #tpu.memory_space<vmem>>, vector<1x3x8xf32>
    %65 = vector.shape_cast %64 : vector<1x3x8xf32> to vector<3x8xf32>
    %66 = vector.shape_cast %63 : vector<3x8xf32> to vector<1x3x8xf32>
    tpu.vector_store %arg2[%c0_17, %c0_18, %c61], %66 {strides = array<i32>} : memref<1x3x100xf32, #tpu.memory_space<vmem>>, vector<1x3x8xf32>,
    %67 = vector.extract_strided_slice %38 {offsets = [0, 54], sizes = [3, 8], strides = [1, 1]} : vector<3x81xf32> to vector<3x8xf32>
    %c0_19 = arith.constant 0 : index
    %c0_20 = arith.constant 0 : index
    %c71 = arith.constant 71 : index
    %68 = vector.load %arg2[%c0_19, %c0_20, %c71] : memref<1x3x100xf32, #tpu.memory_space<vmem>>, vector<1x3x8xf32>
    %69 = vector.shape_cast %68 : vector<1x3x8xf32> to vector<3x8xf32>
    %70 = vector.shape_cast %67 : vector<3x8xf32> to vector<1x3x8xf32>
    tpu.vector_store %arg2[%c0_19, %c0_20, %c71], %70 {strides = array<i32>} : memref<1x3x100xf32, #tpu.memory_space<vmem>>, vector<1x3x8xf32>,
    %71 = vector.extract_strided_slice %38 {offsets = [0, 63], sizes = [3, 8], strides = [1, 1]} : vector<3x81xf32> to vector<3x8xf32>
    %c0_21 = arith.constant 0 : index
    %c0_22 = arith.constant 0 : index
    %c81 = arith.constant 81 : index
    %72 = vector.load %arg2[%c0_21, %c0_22, %c81] : memref<1x3x100xf32, #tpu.memory_space<vmem>>, vector<1x3x8xf32>
    %73 = vector.shape_cast %72 : vector<1x3x8xf32> to vector<3x8xf32>
    %74 = vector.shape_cast %71 : vector<3x8xf32> to vector<1x3x8xf32>
    tpu.vector_store %arg2[%c0_21, %c0_22, %c81], %74 {strides = array<i32>} : memref<1x3x100xf32, #tpu.memory_space<vmem>>, vector<1x3x8xf32>,
    return
  }
  func.func @transform_0(%arg0: i32) -> (i32, i32, i32, i32) {
    %c0_i32 = arith.constant 0 : i32
    %c0_i32_0 = arith.constant 0 : i32
    %c0_i32_1 = arith.constant 0 : i32
    %c0_i32_2 = arith.constant 0 : i32
    return %arg0, %c0_i32, %c0_i32_0, %c0_i32_1 : i32, i32, i32, i32
  }
  func.func @transform_1(%arg0: i32) -> (i32, i32, i32) {
    %c0_i32 = arith.constant 0 : i32
    %c0_i32_0 = arith.constant 0 : i32
    %c0_i32_1 = arith.constant 0 : i32
    return %arg0, %c0_i32, %c0_i32_0 : i32, i32, i32
  }
}

module attributes {stable_mosaic.version = 11 : i64} {
  func.func @_reinf_kernel(%arg0: i32, %arg1: memref<1x24x64xf32, #tpu.memory_space<vmem>>, %arg2: memref<1x3x100xf32, #tpu.memory_space<vmem>>, %arg3: memref<3x27xf32, #tpu.memory_space<vmem>>, %arg4: memref<24x3xf32, #tpu.memory_space<vmem>>, %arg5: memref<24x6xf32, #tpu.memory_space<vmem>>, %arg6: memref<1x24x64xf32, #tpu.memory_space<vmem>>) attributes {dimension_semantics = [#tpu.dimension_semantics<parallel>], iteration_bounds = array<i64: 2>, scalar_prefetch = 0 : i64, scratch_operands = 0 : i64, tpu.core_type = #tpu.core_type<tc>, window_params = [{transform_indices = @transform_0, window_bounds = array<i64: 1, 24, 64>}, {transform_indices = @transform_1, window_bounds = array<i64: 1, 3, 100>}, {pipeline_mode = #tpu.pipeline_mode<synchronous>, transform_indices = @transform_2, window_bounds = array<i64: 3, 27>}, {pipeline_mode = #tpu.pipeline_mode<synchronous>, transform_indices = @transform_3, window_bounds = array<i64: 24, 3>}, {pipeline_mode = #tpu.pipeline_mode<synchronous>, transform_indices = @transform_4, window_bounds = array<i64: 24, 6>}, {transform_indices = @transform_5, window_bounds = array<i64: 1, 24, 64>}]} {
    %c0 = arith.constant 0 : index
    %c0_0 = arith.constant 0 : index
    %c0_1 = arith.constant 0 : index
    %0 = vector.load %arg1[%c0, %c0_0, %c0_1] : memref<1x24x64xf32, #tpu.memory_space<vmem>>, vector<1x24x64xf32>
    %1 = vector.shape_cast %0 : vector<1x24x64xf32> to vector<24x64xf32>
    %c0_2 = arith.constant 0 : index
    %c0_3 = arith.constant 0 : index
    %c0_4 = arith.constant 0 : index
    %2 = vector.load %arg2[%c0_2, %c0_3, %c0_4] : memref<1x3x100xf32, #tpu.memory_space<vmem>>, vector<1x3x100xf32>
    %3 = vector.shape_cast %2 : vector<1x3x100xf32> to vector<3x100xf32>
    %c0_5 = arith.constant 0 : index
    %c0_6 = arith.constant 0 : index
    %4 = vector.load %arg3[%c0_5, %c0_6] : memref<3x27xf32, #tpu.memory_space<vmem>>, vector<3x27xf32>
    %c0_7 = arith.constant 0 : index
    %c0_8 = arith.constant 0 : index
    %5 = vector.load %arg4[%c0_7, %c0_8] : memref<24x3xf32, #tpu.memory_space<vmem>>, vector<24x3xf32>
    %c0_9 = arith.constant 0 : index
    %c0_10 = arith.constant 0 : index
    %6 = vector.load %arg5[%c0_9, %c0_10] : memref<24x6xf32, #tpu.memory_space<vmem>>, vector<24x6xf32>
    %cst = arith.constant 0.000000e+00 : f32
    %7 = vector.broadcast %cst : f32 to vector<3x78xf32>
    %8 = vector.extract_strided_slice %4 {offsets = [0, 0], sizes = [3, 3], strides = [1, 1]} : vector<3x27xf32> to vector<3x3xf32>
    %9 = vector.extract_strided_slice %3 {offsets = [0, 0], sizes = [3, 78], strides = [1, 1]} : vector<3x100xf32> to vector<3x78xf32>
    %cst_11 = arith.constant dense<0.000000e+00> : vector<3x78xf32>
    %10 = tpu.matmul %8, %9, %cst_11 {dimension_numbers = #tpu.dot_dimension_numbers<[1], [0], [0], [1], [0, 0, 1, 1], [], []>} : vector<3x3xf32>, vector<3x78xf32>, vector<3x78xf32> -> vector<3x78xf32>
    %11 = arith.addf %7, %10 : vector<3x78xf32>
    %12 = vector.extract_strided_slice %4 {offsets = [0, 3], sizes = [3, 3], strides = [1, 1]} : vector<3x27xf32> to vector<3x3xf32>
    %13 = vector.extract_strided_slice %3 {offsets = [0, 1], sizes = [3, 78], strides = [1, 1]} : vector<3x100xf32> to vector<3x78xf32>
    %cst_12 = arith.constant dense<0.000000e+00> : vector<3x78xf32>
    %14 = tpu.matmul %12, %13, %cst_12 {dimension_numbers = #tpu.dot_dimension_numbers<[1], [0], [0], [1], [0, 0, 1, 1], [], []>} : vector<3x3xf32>, vector<3x78xf32>, vector<3x78xf32> -> vector<3x78xf32>
    %15 = arith.addf %11, %14 : vector<3x78xf32>
    %16 = vector.extract_strided_slice %4 {offsets = [0, 6], sizes = [3, 3], strides = [1, 1]} : vector<3x27xf32> to vector<3x3xf32>
    %17 = vector.extract_strided_slice %3 {offsets = [0, 2], sizes = [3, 78], strides = [1, 1]} : vector<3x100xf32> to vector<3x78xf32>
    %cst_13 = arith.constant dense<0.000000e+00> : vector<3x78xf32>
    %18 = tpu.matmul %16, %17, %cst_13 {dimension_numbers = #tpu.dot_dimension_numbers<[1], [0], [0], [1], [0, 0, 1, 1], [], []>} : vector<3x3xf32>, vector<3x78xf32>, vector<3x78xf32> -> vector<3x78xf32>
    %19 = arith.addf %15, %18 : vector<3x78xf32>
    %20 = vector.extract_strided_slice %4 {offsets = [0, 9], sizes = [3, 3], strides = [1, 1]} : vector<3x27xf32> to vector<3x3xf32>
    %21 = vector.extract_strided_slice %3 {offsets = [0, 10], sizes = [3, 78], strides = [1, 1]} : vector<3x100xf32> to vector<3x78xf32>
    %cst_14 = arith.constant dense<0.000000e+00> : vector<3x78xf32>
    %22 = tpu.matmul %20, %21, %cst_14 {dimension_numbers = #tpu.dot_dimension_numbers<[1], [0], [0], [1], [0, 0, 1, 1], [], []>} : vector<3x3xf32>, vector<3x78xf32>, vector<3x78xf32> -> vector<3x78xf32>
    %23 = arith.addf %19, %22 : vector<3x78xf32>
    %24 = vector.extract_strided_slice %4 {offsets = [0, 12], sizes = [3, 3], strides = [1, 1]} : vector<3x27xf32> to vector<3x3xf32>
    %25 = vector.extract_strided_slice %3 {offsets = [0, 11], sizes = [3, 78], strides = [1, 1]} : vector<3x100xf32> to vector<3x78xf32>
    %cst_15 = arith.constant dense<0.000000e+00> : vector<3x78xf32>
    %26 = tpu.matmul %24, %25, %cst_15 {dimension_numbers = #tpu.dot_dimension_numbers<[1], [0], [0], [1], [0, 0, 1, 1], [], []>} : vector<3x3xf32>, vector<3x78xf32>, vector<3x78xf32> -> vector<3x78xf32>
    %27 = arith.addf %23, %26 : vector<3x78xf32>
    %28 = vector.extract_strided_slice %4 {offsets = [0, 15], sizes = [3, 3], strides = [1, 1]} : vector<3x27xf32> to vector<3x3xf32>
    %29 = vector.extract_strided_slice %3 {offsets = [0, 12], sizes = [3, 78], strides = [1, 1]} : vector<3x100xf32> to vector<3x78xf32>
    %cst_16 = arith.constant dense<0.000000e+00> : vector<3x78xf32>
    %30 = tpu.matmul %28, %29, %cst_16 {dimension_numbers = #tpu.dot_dimension_numbers<[1], [0], [0], [1], [0, 0, 1, 1], [], []>} : vector<3x3xf32>, vector<3x78xf32>, vector<3x78xf32> -> vector<3x78xf32>
    %31 = arith.addf %27, %30 : vector<3x78xf32>
    %32 = vector.extract_strided_slice %4 {offsets = [0, 18], sizes = [3, 3], strides = [1, 1]} : vector<3x27xf32> to vector<3x3xf32>
    %33 = vector.extract_strided_slice %3 {offsets = [0, 20], sizes = [3, 78], strides = [1, 1]} : vector<3x100xf32> to vector<3x78xf32>
    %cst_17 = arith.constant dense<0.000000e+00> : vector<3x78xf32>
    %34 = tpu.matmul %32, %33, %cst_17 {dimension_numbers = #tpu.dot_dimension_numbers<[1], [0], [0], [1], [0, 0, 1, 1], [], []>} : vector<3x3xf32>, vector<3x78xf32>, vector<3x78xf32> -> vector<3x78xf32>
    %35 = arith.addf %31, %34 : vector<3x78xf32>
    %36 = vector.extract_strided_slice %4 {offsets = [0, 21], sizes = [3, 3], strides = [1, 1]} : vector<3x27xf32> to vector<3x3xf32>
    %37 = vector.extract_strided_slice %3 {offsets = [0, 21], sizes = [3, 78], strides = [1, 1]} : vector<3x100xf32> to vector<3x78xf32>
    %cst_18 = arith.constant dense<0.000000e+00> : vector<3x78xf32>
    %38 = tpu.matmul %36, %37, %cst_18 {dimension_numbers = #tpu.dot_dimension_numbers<[1], [0], [0], [1], [0, 0, 1, 1], [], []>} : vector<3x3xf32>, vector<3x78xf32>, vector<3x78xf32> -> vector<3x78xf32>
    %39 = arith.addf %35, %38 : vector<3x78xf32>
    %40 = vector.extract_strided_slice %4 {offsets = [0, 24], sizes = [3, 3], strides = [1, 1]} : vector<3x27xf32> to vector<3x3xf32>
    %41 = vector.extract_strided_slice %3 {offsets = [0, 22], sizes = [3, 78], strides = [1, 1]} : vector<3x100xf32> to vector<3x78xf32>
    %cst_19 = arith.constant dense<0.000000e+00> : vector<3x78xf32>
    %42 = tpu.matmul %40, %41, %cst_19 {dimension_numbers = #tpu.dot_dimension_numbers<[1], [0], [0], [1], [0, 0, 1, 1], [], []>} : vector<3x3xf32>, vector<3x78xf32>, vector<3x78xf32> -> vector<3x78xf32>
    %43 = arith.addf %39, %42 : vector<3x78xf32>
    %44 = vector.extract_strided_slice %6 {offsets = [0, 0], sizes = [3, 1], strides = [1, 1]} : vector<24x6xf32> to vector<3x1xf32>
    %45 = vector.extract_strided_slice %6 {offsets = [0, 1], sizes = [3, 1], strides = [1, 1]} : vector<24x6xf32> to vector<3x1xf32>
    %46 = vector.extract_strided_slice %6 {offsets = [0, 2], sizes = [3, 1], strides = [1, 1]} : vector<24x6xf32> to vector<3x1xf32>
    %47 = vector.broadcast %44 : vector<3x1xf32> to vector<3x78xf32>
    %48 = arith.mulf %43, %47 : vector<3x78xf32>
    %49 = vector.broadcast %45 : vector<3x1xf32> to vector<3x78xf32>
    %50 = arith.addf %48, %49 : vector<3x78xf32>
    %cst_20 = arith.constant 0.000000e+00 : f32
    %51 = vector.broadcast %cst_20 : f32 to vector<3x78xf32>
    %52 = arith.cmpf ogt, %50, %51 : vector<3x78xf32>
    %53 = vector.broadcast %46 : vector<3x1xf32> to vector<3x78xf32>
    %54 = arith.mulf %50, %53 : vector<3x78xf32>
    %55 = arith.select %52, %50, %54 : vector<3x78xi1>, vector<3x78xf32>
    %cst_21 = arith.constant dense<0.000000e+00> : vector<24x78xf32>
    %56 = tpu.matmul %5, %55, %cst_21 {dimension_numbers = #tpu.dot_dimension_numbers<[1], [0], [0], [1], [0, 0, 1, 1], [], []>} : vector<24x3xf32>, vector<3x78xf32>, vector<24x78xf32> -> vector<24x78xf32>
    %57 = vector.extract_strided_slice %6 {offsets = [0, 3], sizes = [24, 1], strides = [1, 1]} : vector<24x6xf32> to vector<24x1xf32>
    %58 = vector.broadcast %57 : vector<24x1xf32> to vector<24x78xf32>
    %59 = arith.mulf %56, %58 : vector<24x78xf32>
    %60 = vector.extract_strided_slice %6 {offsets = [0, 4], sizes = [24, 1], strides = [1, 1]} : vector<24x6xf32> to vector<24x1xf32>
    %61 = vector.broadcast %60 : vector<24x1xf32> to vector<24x78xf32>
    %62 = arith.addf %59, %61 : vector<24x78xf32>
    %63 = vector.extract_strided_slice %6 {offsets = [0, 5], sizes = [24, 1], strides = [1, 1]} : vector<24x6xf32> to vector<24x1xf32>
    %64 = vector.extract_strided_slice %1 {offsets = [0, 0], sizes = [24, 8], strides = [1, 1]} : vector<24x64xf32> to vector<24x8xf32>
    %65 = vector.extract_strided_slice %62 {offsets = [0, 0], sizes = [24, 8], strides = [1, 1]} : vector<24x78xf32> to vector<24x8xf32>
    %66 = arith.addf %64, %65 : vector<24x8xf32>
    %cst_22 = arith.constant 0.000000e+00 : f32
    %67 = vector.broadcast %cst_22 : f32 to vector<24x8xf32>
    %68 = arith.cmpf ogt, %66, %67 : vector<24x8xf32>
    %69 = vector.broadcast %63 : vector<24x1xf32> to vector<24x8xf32>
    %70 = arith.mulf %66, %69 : vector<24x8xf32>
    %71 = arith.select %68, %66, %70 : vector<24x8xi1>, vector<24x8xf32>
    %c0_23 = arith.constant 0 : index
    %c0_24 = arith.constant 0 : index
    %c0_25 = arith.constant 0 : index
    %72 = vector.load %arg6[%c0_23, %c0_24, %c0_25] : memref<1x24x64xf32, #tpu.memory_space<vmem>>, vector<1x24x8xf32>
    %73 = vector.shape_cast %72 : vector<1x24x8xf32> to vector<24x8xf32>
    %74 = vector.shape_cast %71 : vector<24x8xf32> to vector<1x24x8xf32>
    tpu.vector_store %arg6[%c0_23, %c0_24, %c0_25], %74 {strides = array<i32>} : memref<1x24x64xf32, #tpu.memory_space<vmem>>, vector<1x24x8xf32>,
    %75 = vector.extract_strided_slice %1 {offsets = [0, 8], sizes = [24, 8], strides = [1, 1]} : vector<24x64xf32> to vector<24x8xf32>
    %76 = vector.extract_strided_slice %62 {offsets = [0, 10], sizes = [24, 8], strides = [1, 1]} : vector<24x78xf32> to vector<24x8xf32>
    %77 = arith.addf %75, %76 : vector<24x8xf32>
    %cst_26 = arith.constant 0.000000e+00 : f32
    %78 = vector.broadcast %cst_26 : f32 to vector<24x8xf32>
    %79 = arith.cmpf ogt, %77, %78 : vector<24x8xf32>
    %80 = vector.broadcast %63 : vector<24x1xf32> to vector<24x8xf32>
    %81 = arith.mulf %77, %80 : vector<24x8xf32>
    %82 = arith.select %79, %77, %81 : vector<24x8xi1>, vector<24x8xf32>
    %c0_27 = arith.constant 0 : index
    %c0_28 = arith.constant 0 : index
    %c8 = arith.constant 8 : index
    %83 = vector.load %arg6[%c0_27, %c0_28, %c8] : memref<1x24x64xf32, #tpu.memory_space<vmem>>, vector<1x24x8xf32>
    %84 = vector.shape_cast %83 : vector<1x24x8xf32> to vector<24x8xf32>
    %85 = vector.shape_cast %82 : vector<24x8xf32> to vector<1x24x8xf32>
    tpu.vector_store %arg6[%c0_27, %c0_28, %c8], %85 {strides = array<i32>} : memref<1x24x64xf32, #tpu.memory_space<vmem>>, vector<1x24x8xf32>,
    %86 = vector.extract_strided_slice %1 {offsets = [0, 16], sizes = [24, 8], strides = [1, 1]} : vector<24x64xf32> to vector<24x8xf32>
    %87 = vector.extract_strided_slice %62 {offsets = [0, 20], sizes = [24, 8], strides = [1, 1]} : vector<24x78xf32> to vector<24x8xf32>
    %88 = arith.addf %86, %87 : vector<24x8xf32>
    %cst_29 = arith.constant 0.000000e+00 : f32
    %89 = vector.broadcast %cst_29 : f32 to vector<24x8xf32>
    %90 = arith.cmpf ogt, %88, %89 : vector<24x8xf32>
    %91 = vector.broadcast %63 : vector<24x1xf32> to vector<24x8xf32>
    %92 = arith.mulf %88, %91 : vector<24x8xf32>
    %93 = arith.select %90, %88, %92 : vector<24x8xi1>, vector<24x8xf32>
    %c0_30 = arith.constant 0 : index
    %c0_31 = arith.constant 0 : index
    %c16 = arith.constant 16 : index
    %94 = vector.load %arg6[%c0_30, %c0_31, %c16] : memref<1x24x64xf32, #tpu.memory_space<vmem>>, vector<1x24x8xf32>
    %95 = vector.shape_cast %94 : vector<1x24x8xf32> to vector<24x8xf32>
    %96 = vector.shape_cast %93 : vector<24x8xf32> to vector<1x24x8xf32>
    tpu.vector_store %arg6[%c0_30, %c0_31, %c16], %96 {strides = array<i32>} : memref<1x24x64xf32, #tpu.memory_space<vmem>>, vector<1x24x8xf32>,
    %97 = vector.extract_strided_slice %1 {offsets = [0, 24], sizes = [24, 8], strides = [1, 1]} : vector<24x64xf32> to vector<24x8xf32>
    %98 = vector.extract_strided_slice %62 {offsets = [0, 30], sizes = [24, 8], strides = [1, 1]} : vector<24x78xf32> to vector<24x8xf32>
    %99 = arith.addf %97, %98 : vector<24x8xf32>
    %cst_32 = arith.constant 0.000000e+00 : f32
    %100 = vector.broadcast %cst_32 : f32 to vector<24x8xf32>
    %101 = arith.cmpf ogt, %99, %100 : vector<24x8xf32>
    %102 = vector.broadcast %63 : vector<24x1xf32> to vector<24x8xf32>
    %103 = arith.mulf %99, %102 : vector<24x8xf32>
    %104 = arith.select %101, %99, %103 : vector<24x8xi1>, vector<24x8xf32>
    %c0_33 = arith.constant 0 : index
    %c0_34 = arith.constant 0 : index
    %c24 = arith.constant 24 : index
    %105 = vector.load %arg6[%c0_33, %c0_34, %c24] : memref<1x24x64xf32, #tpu.memory_space<vmem>>, vector<1x24x8xf32>
    %106 = vector.shape_cast %105 : vector<1x24x8xf32> to vector<24x8xf32>
    %107 = vector.shape_cast %104 : vector<24x8xf32> to vector<1x24x8xf32>
    tpu.vector_store %arg6[%c0_33, %c0_34, %c24], %107 {strides = array<i32>} : memref<1x24x64xf32, #tpu.memory_space<vmem>>, vector<1x24x8xf32>,
    %108 = vector.extract_strided_slice %1 {offsets = [0, 32], sizes = [24, 8], strides = [1, 1]} : vector<24x64xf32> to vector<24x8xf32>
    %109 = vector.extract_strided_slice %62 {offsets = [0, 40], sizes = [24, 8], strides = [1, 1]} : vector<24x78xf32> to vector<24x8xf32>
    %110 = arith.addf %108, %109 : vector<24x8xf32>
    %cst_35 = arith.constant 0.000000e+00 : f32
    %111 = vector.broadcast %cst_35 : f32 to vector<24x8xf32>
    %112 = arith.cmpf ogt, %110, %111 : vector<24x8xf32>
    %113 = vector.broadcast %63 : vector<24x1xf32> to vector<24x8xf32>
    %114 = arith.mulf %110, %113 : vector<24x8xf32>
    %115 = arith.select %112, %110, %114 : vector<24x8xi1>, vector<24x8xf32>
    %c0_36 = arith.constant 0 : index
    %c0_37 = arith.constant 0 : index
    %c32 = arith.constant 32 : index
    %116 = vector.load %arg6[%c0_36, %c0_37, %c32] : memref<1x24x64xf32, #tpu.memory_space<vmem>>, vector<1x24x8xf32>
    %117 = vector.shape_cast %116 : vector<1x24x8xf32> to vector<24x8xf32>
    %118 = vector.shape_cast %115 : vector<24x8xf32> to vector<1x24x8xf32>
    tpu.vector_store %arg6[%c0_36, %c0_37, %c32], %118 {strides = array<i32>} : memref<1x24x64xf32, #tpu.memory_space<vmem>>, vector<1x24x8xf32>,
    %119 = vector.extract_strided_slice %1 {offsets = [0, 40], sizes = [24, 8], strides = [1, 1]} : vector<24x64xf32> to vector<24x8xf32>
    %120 = vector.extract_strided_slice %62 {offsets = [0, 50], sizes = [24, 8], strides = [1, 1]} : vector<24x78xf32> to vector<24x8xf32>
    %121 = arith.addf %119, %120 : vector<24x8xf32>
    %cst_38 = arith.constant 0.000000e+00 : f32
    %122 = vector.broadcast %cst_38 : f32 to vector<24x8xf32>
    %123 = arith.cmpf ogt, %121, %122 : vector<24x8xf32>
    %124 = vector.broadcast %63 : vector<24x1xf32> to vector<24x8xf32>
    %125 = arith.mulf %121, %124 : vector<24x8xf32>
    %126 = arith.select %123, %121, %125 : vector<24x8xi1>, vector<24x8xf32>
    %c0_39 = arith.constant 0 : index
    %c0_40 = arith.constant 0 : index
    %c40 = arith.constant 40 : index
    %127 = vector.load %arg6[%c0_39, %c0_40, %c40] : memref<1x24x64xf32, #tpu.memory_space<vmem>>, vector<1x24x8xf32>
    %128 = vector.shape_cast %127 : vector<1x24x8xf32> to vector<24x8xf32>
    %129 = vector.shape_cast %126 : vector<24x8xf32> to vector<1x24x8xf32>
    tpu.vector_store %arg6[%c0_39, %c0_40, %c40], %129 {strides = array<i32>} : memref<1x24x64xf32, #tpu.memory_space<vmem>>, vector<1x24x8xf32>,
    %130 = vector.extract_strided_slice %1 {offsets = [0, 48], sizes = [24, 8], strides = [1, 1]} : vector<24x64xf32> to vector<24x8xf32>
    %131 = vector.extract_strided_slice %62 {offsets = [0, 60], sizes = [24, 8], strides = [1, 1]} : vector<24x78xf32> to vector<24x8xf32>
    %132 = arith.addf %130, %131 : vector<24x8xf32>
    %cst_41 = arith.constant 0.000000e+00 : f32
    %133 = vector.broadcast %cst_41 : f32 to vector<24x8xf32>
    %134 = arith.cmpf ogt, %132, %133 : vector<24x8xf32>
    %135 = vector.broadcast %63 : vector<24x1xf32> to vector<24x8xf32>
    %136 = arith.mulf %132, %135 : vector<24x8xf32>
    %137 = arith.select %134, %132, %136 : vector<24x8xi1>, vector<24x8xf32>
    %c0_42 = arith.constant 0 : index
    %c0_43 = arith.constant 0 : index
    %c48 = arith.constant 48 : index
    %138 = vector.load %arg6[%c0_42, %c0_43, %c48] : memref<1x24x64xf32, #tpu.memory_space<vmem>>, vector<1x24x8xf32>
    %139 = vector.shape_cast %138 : vector<1x24x8xf32> to vector<24x8xf32>
    %140 = vector.shape_cast %137 : vector<24x8xf32> to vector<1x24x8xf32>
    tpu.vector_store %arg6[%c0_42, %c0_43, %c48], %140 {strides = array<i32>} : memref<1x24x64xf32, #tpu.memory_space<vmem>>, vector<1x24x8xf32>,
    %141 = vector.extract_strided_slice %1 {offsets = [0, 56], sizes = [24, 8], strides = [1, 1]} : vector<24x64xf32> to vector<24x8xf32>
    %142 = vector.extract_strided_slice %62 {offsets = [0, 70], sizes = [24, 8], strides = [1, 1]} : vector<24x78xf32> to vector<24x8xf32>
    %143 = arith.addf %141, %142 : vector<24x8xf32>
    %cst_44 = arith.constant 0.000000e+00 : f32
    %144 = vector.broadcast %cst_44 : f32 to vector<24x8xf32>
    %145 = arith.cmpf ogt, %143, %144 : vector<24x8xf32>
    %146 = vector.broadcast %63 : vector<24x1xf32> to vector<24x8xf32>
    %147 = arith.mulf %143, %146 : vector<24x8xf32>
    %148 = arith.select %145, %143, %147 : vector<24x8xi1>, vector<24x8xf32>
    %c0_45 = arith.constant 0 : index
    %c0_46 = arith.constant 0 : index
    %c56 = arith.constant 56 : index
    %149 = vector.load %arg6[%c0_45, %c0_46, %c56] : memref<1x24x64xf32, #tpu.memory_space<vmem>>, vector<1x24x8xf32>
    %150 = vector.shape_cast %149 : vector<1x24x8xf32> to vector<24x8xf32>
    %151 = vector.shape_cast %148 : vector<24x8xf32> to vector<1x24x8xf32>
    tpu.vector_store %arg6[%c0_45, %c0_46, %c56], %151 {strides = array<i32>} : memref<1x24x64xf32, #tpu.memory_space<vmem>>, vector<1x24x8xf32>,
    return
  }
  func.func @transform_0(%arg0: i32) -> (i32, i32, i32) {
    %c0_i32 = arith.constant 0 : i32
    %c0_i32_0 = arith.constant 0 : i32
    %c0_i32_1 = arith.constant 0 : i32
    return %arg0, %c0_i32, %c0_i32_0 : i32, i32, i32
  }
  func.func @transform_1(%arg0: i32) -> (i32, i32, i32) {
    %c0_i32 = arith.constant 0 : i32
    %c0_i32_0 = arith.constant 0 : i32
    %c0_i32_1 = arith.constant 0 : i32
    return %arg0, %c0_i32, %c0_i32_0 : i32, i32, i32
  }
  func.func @transform_2(%arg0: i32) -> (i32, i32) {
    %c0_i32 = arith.constant 0 : i32
    %c0_i32_0 = arith.constant 0 : i32
    %c0_i32_1 = arith.constant 0 : i32
    return %c0_i32, %c0_i32_0 : i32, i32
  }
  func.func @transform_3(%arg0: i32) -> (i32, i32) {
    %c0_i32 = arith.constant 0 : i32
    %c0_i32_0 = arith.constant 0 : i32
    %c0_i32_1 = arith.constant 0 : i32
    return %c0_i32, %c0_i32_0 : i32, i32
  }
  func.func @transform_4(%arg0: i32) -> (i32, i32) {
    %c0_i32 = arith.constant 0 : i32
    %c0_i32_0 = arith.constant 0 : i32
    %c0_i32_1 = arith.constant 0 : i32
    return %c0_i32, %c0_i32_0 : i32, i32
  }
  func.func @transform_5(%arg0: i32) -> (i32, i32, i32) {
    %c0_i32 = arith.constant 0 : i32
    %c0_i32_0 = arith.constant 0 : i32
    %c0_i32_1 = arith.constant 0 : i32
    return %arg0, %c0_i32, %c0_i32_0 : i32, i32, i32
  }
}

</mosaic_0001>

<llo_original>
// kernel: downsampler_forward.4
$region0: #{downsampler_forward.4}
  #allocation0 [shape = 'u32[]', space=smem, size = 0x4, offset = 0x4, fixed_abs, tag = 'smem constant byte address 0x4 - core index']
  #allocation1 [shape = 'u32[72,128]{1,0:T(1,128)}', space=vmem, size = 0x9000, scoped, tag = 'internal scratch']
  %s0 = inlined_call_operand.vmem [shape: f32[2,4,8,196], index: 0, kind: input, shape index: {}]
  %s1 = inlined_call_operand.vmem [shape: f32[4,8], index: 1, kind: input, shape index: {}]
  %s2 = inlined_call_operand.vmem [shape: f32[4,36], index: 2, kind: input, shape index: {}]
  %s3 = inlined_call_operand.vmem [shape: f32[16,16], index: 3, kind: input, shape index: {}]
  %s4 = inlined_call_operand.vmem [shape: f32[24,9], index: 4, kind: input, shape index: {}]
  %s5 = inlined_call_operand.vmem [shape: f32[1,196], index: 5, kind: input, shape index: {}]
  %s6 = inlined_call_operand.vmem [shape: f32[2,24,64], index: 6, kind: output, shape index: {}]
  %s7 = sld [smem:[#allocation0]]
  $region57: #{downsampler_forward.4} parent=0
    _
  %s9 = ssub.s32 1, %s7
  %s10 = scalar_select 0, %s9, %s7
  loop: start=0, step=1, limit=4
  $region2: #{downsampler_forward.4} parent=0 // loop_pre_header
    _
  $region3: #{downsampler_forward.4} parent=0 // loop_header
    %s12 = sphi 0, %s16
    %p13 = scmp.ge.s32.totalorder %s12, 4
    %s22 = sphi 0, %s24
    %s25 = sphi 0, %s22
    %s26 = sphi 0, %s25
    %s42 = sphi 0, %s26
    %s46 = sphi 0, %s46
    %s48 = sphi 0, %s46
    %s49 = sphi 0, %s48
    %s63 = sphi 0, %s49
    %s67 = sphi 0, %s67
    %s69 = sphi 0, %s67
    %s70 = sphi 0, %s69
    %s84 = sphi 0, %s70
    %s88 = sphi 0, %s88
    %s90 = sphi 0, %s88
    %s91 = sphi 0, %s90
    %s105 = sphi 0, %s91
    %s109 = sphi 0, %s109
    %s111 = sphi 0, %s109
    %s112 = sphi 0, %s111
    %s126 = sphi 0, %s112
    %s130 = sphi 0, %s130
    %s132 = sphi 0, %s130
    %s133 = sphi 0, %s132
    %s147 = sphi 0, %s133
    %s153 = sphi 0, %s155
    %s156 = sphi 0, %s153
    %s157 = sphi 0, %s156
    %s173 = sphi 0, %s157
  $region4: #{downsampler_forward.4} parent=0 // loop_header_branch
    %15 = sbr.rel (%p13) target = $region8
  $region5: #{downsampler_forward.4} parent=0 // loop_body
    %s17 = ssub.s32 %s12, 1
    %s18 = ssub.s32 %s12, 2
    %s19 = sadd.s32 %s12, 1
    %s20 = ssub.s32 %s12, %s19
    %p21 = scmp.eq.s32.totalorder %s20, 0
    %s23 = sadd.s32 %s22, 1
    %s24 = scalar_select %p21, %s22, %s23
    %p27 = pneg %p21
    %p28 = scmp.eq.s32.totalorder %s12, 1
    %p29 = por %p27, %p28
    %p30 = scmp.ne.s32.totalorder %s22, %s25
    %p31 = scmp.eq.s32.totalorder %s12, 0
    %p32 = por %p30, %p31
    %p33 = scmp.ne.s32.totalorder %s22, %s25
    %p34 = scmp.eq.s32.totalorder %s17, 1
    %p35 = por %p33, %p34
    %p36 = scmp.ne.s32.totalorder %s25, %s26
    %p37 = scmp.eq.s32.totalorder %s17, 0
    %p38 = por %p36, %p37
    %p39 = scmp.ne.s32.totalorder %s25, %s26
    %p40 = scmp.eq.s32.totalorder %s18, 1
    %p41 = por %p39, %p40
    %p43 = scmp.ne.s32.totalorder %s26, %s42
    %p44 = scmp.eq.s32.totalorder %s18, 0
    %p45 = por %p43, %p44
    %s47 = sadd.s32 %s46, 1
    %p50 = scmp.eq.s32.totalorder %s12, 1
    %p51 = scmp.ne.s32.totalorder %s46, %s48
    %p52 = scmp.eq.s32.totalorder %s12, 0
    %p53 = por %p51, %p52
    %p54 = scmp.ne.s32.totalorder %s46, %s48
    %p55 = scmp.eq.s32.totalorder %s17, 1
    %p56 = por %p54, %p55
    %p57 = scmp.ne.s32.totalorder %s48, %s49
    %p58 = scmp.eq.s32.totalorder %s17, 0
    %p59 = por %p57, %p58
    %p60 = scmp.ne.s32.totalorder %s48, %s49
    %p61 = scmp.eq.s32.totalorder %s18, 1
    %p62 = por %p60, %p61
    %p64 = scmp.ne.s32.totalorder %s49, %s63
    %p65 = scmp.eq.s32.totalorder %s18, 0
    %p66 = por %p64, %p65
    %s68 = sadd.s32 %s67, 1
    %p71 = scmp.eq.s32.totalorder %s12, 1
    %p72 = scmp.ne.s32.totalorder %s67, %s69
    %p73 = scmp.eq.s32.totalorder %s12, 0
    %p74 = por %p72, %p73
    %p75 = scmp.ne.s32.totalorder %s67, %s69
    %p76 = scmp.eq.s32.totalorder %s17, 1
    %p77 = por %p75, %p76
    %p78 = scmp.ne.s32.totalorder %s69, %s70
    %p79 = scmp.eq.s32.totalorder %s17, 0
    %p80 = por %p78, %p79
    %p81 = scmp.ne.s32.totalorder %s69, %s70
    %p82 = scmp.eq.s32.totalorder %s18, 1
    %p83 = por %p81, %p82
    %p85 = scmp.ne.s32.totalorder %s70, %s84
    %p86 = scmp.eq.s32.totalorder %s18, 0
    %p87 = por %p85, %p86
    %s89 = sadd.s32 %s88, 1
    %p92 = scmp.eq.s32.totalorder %s12, 1
    %p93 = scmp.ne.s32.totalorder %s88, %s90
    %p94 = scmp.eq.s32.totalorder %s12, 0
    %p95 = por %p93, %p94
    %p96 = scmp.ne.s32.totalorder %s88, %s90
    %p97 = scmp.eq.s32.totalorder %s17, 1
    %p98 = por %p96, %p97
    %p99 = scmp.ne.s32.totalorder %s90, %s91
    %p100 = scmp.eq.s32.totalorder %s17, 0
    %p101 = por %p99, %p100
    %p102 = scmp.ne.s32.totalorder %s90, %s91
    %p103 = scmp.eq.s32.totalorder %s18, 1
    %p104 = por %p102, %p103
    %p106 = scmp.ne.s32.totalorder %s91, %s105
    %p107 = scmp.eq.s32.totalorder %s18, 0
    %p108 = por %p106, %p107
    %s110 = sadd.s32 %s109, 1
    %p113 = scmp.eq.s32.totalorder %s12, 1
    %p114 = scmp.ne.s32.totalorder %s109, %s111
    %p115 = scmp.eq.s32.totalorder %s12, 0
    %p116 = por %p114, %p115
    %p117 = scmp.ne.s32.totalorder %s109, %s111
    %p118 = scmp.eq.s32.totalorder %s17, 1
    %p119 = por %p117, %p118
    %p120 = scmp.ne.s32.totalorder %s111, %s112
    %p121 = scmp.eq.s32.totalorder %s17, 0
    %p122 = por %p120, %p121
    %p123 = scmp.ne.s32.totalorder %s111, %s112
    %p124 = scmp.eq.s32.totalorder %s18, 1
    %p125 = por %p123, %p124
    %p127 = scmp.ne.s32.totalorder %s112, %s126
    %p128 = scmp.eq.s32.totalorder %s18, 0
    %p129 = por %p127, %p128
    %s131 = sadd.s32 %s130, 1
    %p134 = scmp.eq.s32.totalorder %s12, 1
    %p135 = scmp.ne.s32.totalorder %s130, %s132
    %p136 = scmp.eq.s32.totalorder %s12, 0
    %p137 = por %p135, %p136
    %p138 = scmp.ne.s32.totalorder %s130, %s132
    %p139 = scmp.eq.s32.totalorder %s17, 1
    %p140 = por %p138, %p139
    %p141 = scmp.ne.s32.totalorder %s132, %s133
    %p142 = scmp.eq.s32.totalorder %s17, 0
    %p143 = por %p141, %p142
    %p144 = scmp.ne.s32.totalorder %s132, %s133
    %p145 = scmp.eq.s32.totalorder %s18, 1
    %p146 = por %p144, %p145
    %p148 = scmp.ne.s32.totalorder %s133, %s147
    %p149 = scmp.eq.s32.totalorder %s18, 0
    %p150 = por %p148, %p149
    %s151 = ssub.s32 %s12, %s19
    %p152 = scmp.eq.s32.totalorder %s151, 0
    %s154 = sadd.s32 %s153, 1
    %s155 = scalar_select %p152, %s153, %s154
    %p158 = pneg %p152
    %p159 = scmp.eq.s32.totalorder %s12, 1
    %p160 = por %p158, %p159
    %p161 = scmp.ne.s32.totalorder %s153, %s156
    %p162 = scmp.eq.s32.totalorder %s12, 0
    %p163 = por %p161, %p162
    %p164 = scmp.ne.s32.totalorder %s153, %s156
    %p165 = scmp.eq.s32.totalorder %s17, 1
    %p166 = por %p164, %p165
    %p167 = scmp.ne.s32.totalorder %s156, %s157
    %p168 = scmp.eq.s32.totalorder %s17, 0
    %p169 = por %p167, %p168
    %p170 = scmp.ne.s32.totalorder %s156, %s157
    %p171 = scmp.eq.s32.totalorder %s18, 1
    %p172 = por %p170, %p171
    %p174 = scmp.ne.s32.totalorder %s157, %s173
    %p175 = scmp.eq.s32.totalorder %s18, 0
    %p176 = por %p174, %p175
    %p177 = scmp.le.s32.totalorder 1, %s12
    %p178 = scmp.lt.s32.totalorder %s12, 3
    %p179 = pnand %p177, %p178
    %p180 = pneg %p179
    // Predicated region
    $region9: #{downsampler_forward.4} parent=5 // pred_check
      _
    $region10: #{downsampler_forward.4} parent=5 // pred_check_branch
      %182 = sbr.rel (%p179) target = $region12
    $region11: #{downsampler_forward.4} parent=5 // pred_region
      %s183 = ssub.s32 %s12, 1
      // Predicated region
      $region13: #{downsampler_forward.4} parent=11 // pred_check
        %p184 = pneg %p59
      $region14: #{downsampler_forward.4} parent=11 // pred_check_branch
        %186 = sbr.rel (%p184) target = $region16
      $region15: #{downsampler_forward.4} parent=11 // pred_region
        _
      $region16: #{downsampler_forward.4} parent=11 // pred_fallthru
        _
      // Predicated region
      $region17: #{downsampler_forward.4} parent=11 // pred_check
        %p187 = pneg %p80
      $region18: #{downsampler_forward.4} parent=11 // pred_check_branch
        %189 = sbr.rel (%p187) target = $region20
      $region19: #{downsampler_forward.4} parent=11 // pred_region
        _
      $region20: #{downsampler_forward.4} parent=11 // pred_fallthru
        _
      // Predicated region
      $region21: #{downsampler_forward.4} parent=11 // pred_check
        %p190 = pneg %p101
      $region22: #{downsampler_forward.4} parent=11 // pred_check_branch
        %192 = sbr.rel (%p190) target = $region24
      $region23: #{downsampler_forward.4} parent=11 // pred_region
        _
      $region24: #{downsampler_forward.4} parent=11 // pred_fallthru
        _
      // Predicated region
      $region25: #{downsampler_forward.4} parent=11 // pred_check
        %p193 = pneg %p122
      $region26: #{downsampler_forward.4} parent=11 // pred_check_branch
        %195 = sbr.rel (%p193) target = $region28
      $region27: #{downsampler_forward.4} parent=11 // pred_region
        _
      $region28: #{downsampler_forward.4} parent=11 // pred_fallthru
        _
      // Predicated region
      $region29: #{downsampler_forward.4} parent=11 // pred_check
        %p196 = pneg %p143
      $region30: #{downsampler_forward.4} parent=11 // pred_check_branch
        %198 = sbr.rel (%p196) target = $region32
      $region31: #{downsampler_forward.4} parent=11 // pred_region
        _
      $region32: #{downsampler_forward.4} parent=11 // pred_fallthru
        _
    $region12: #{downsampler_forward.4} parent=5 // pred_fallthru
      _
    %p199 = scmp.lt.s32.totalorder %s12, 2
    // Predicated region
    $region33: #{downsampler_forward.4} parent=5 // pred_check
      %p200 = pneg %p199
    $region34: #{downsampler_forward.4} parent=5 // pred_check_branch
      %202 = sbr.rel (%p200) target = $region36
    $region35: #{downsampler_forward.4} parent=5 // pred_region
      // Predicated region
      $region37: #{downsampler_forward.4} parent=35 // pred_check
        %p203 = pneg %p32
      $region38: #{downsampler_forward.4} parent=35 // pred_check_branch
        %205 = sbr.rel (%p203) target = $region40
      $region39: #{downsampler_forward.4} parent=35 // pred_region
        %p206 = scmp.lt.s32.totalorder %s12, 1
        %s207 = scalar_select %p206, %s12, 1
        %s208 = smul.addr %s207, 8
        %s209 = smul.addr %s208, 8
        %s210 = scalar_lea.vmem %s0, %s209
      $region40: #{downsampler_forward.4} parent=35 // pred_fallthru
        _
    $region36: #{downsampler_forward.4} parent=5 // pred_fallthru
      _
    %p211 = scmp.le.s32.totalorder 1, %s12
    %p212 = scmp.lt.s32.totalorder %s12, 3
    %p213 = pnand %p211, %p212
    %p214 = pneg %p213
    // Predicated region
    $region41: #{downsampler_forward.4} parent=5 // pred_check
      _
    $region42: #{downsampler_forward.4} parent=5 // pred_check_branch
      %216 = sbr.rel (%p213) target = $region44
    $region43: #{downsampler_forward.4} parent=5 // pred_region
      %s217 = ssub.s32 %s12, 1
      %p218 = scmp.lt.s32.totalorder %s17, 1
      %s219 = scalar_select %p218, %s17, 1
      %s220 = smul.addr %s219, 8
      %s221 = smul.addr %s220, 8
      %s222 = scalar_lea.vmem %s0, %s221
      %p223 = pneg %p38
      %p224 = pneg %p35
      %p225 = pneg %p59
      %p226 = pneg %p56
      %p227 = pneg %p80
      %p228 = pneg %p77
      %p229 = pneg %p101
      %p230 = pneg %p98
      %p231 = pneg %p122
      %p232 = pneg %p119
      %p233 = pneg %p143
      %p234 = pneg %p140
      %p235 = pneg %p169
      %p236 = pneg %p166
      %p237 = scmp.lt.s32.totalorder %s17, 1
      %s238 = scalar_select %p237, %s17, 1
      %s239 = smul.addr %s238, 3
      %s240 = smul.addr %s239, 8
      %s241 = scalar_lea.vmem %s6, %s240
      %p242 = scmp.lt.s32.totalorder %s17, 1
      %s243 = scalar_select %p242, %s17, 1
      %s244 = smul.addr %s243, 8
      %s245 = smul.addr %s244, 8
      %s246 = scalar_lea.vmem %s0, %s245
      %p247 = scmp.lt.s32.totalorder %s17, 1
      %s248 = scalar_select %p247, %s17, 1
      %s249 = smul.addr %s248, 3
      %s250 = smul.addr %s249, 8
      %s251 = scalar_lea.vmem %s6, %s250
      %v252 = vld [vmem:[%s246] sm:$0xff]
      %v253 = vld [vmem:[%s246 + $0x8] sm:$0xff]
      %v254 = vld [vmem:[%s246 + $0x10] sm:$0xff]
      %v255 = vld [vmem:[%s246 + $0x18] sm:$0xff]
      %v256 = vld [vmem:[%s246 + $0x20] sm:$0xff]
      %v257 = vld [vmem:[%s246 + $0x28] sm:$0xff]
      %v258 = vld [vmem:[%s246 + $0x30] sm:$0xff]
      %v259 = vld [vmem:[%s246 + $0x38] sm:$0xff]
      %v260 = vld [vmem:[%s1] sm:$0xf]
      %v261 = vld [vmem:[%s2] sm:$0xf]
      %v262 = vld [vmem:[%s3] sm:$0xff]
      %v263 = vld [vmem:[%s3 + $0x8] sm:$0xff]
      %v264 = vld [vmem:[%s4] sm:$0xff]
      %v265 = vld [vmem:[%s4 + $0x8] sm:$0xff]
      %v266 = vld [vmem:[%s5] sm:$0x3]
      %269 = vrot.lane.b32.xlu0 %v256, 127
      %v270 = vpop.permute.xlu0 %269
      %271 = vrot.lane.b32.xlu0 %v257, 127
      %v272 = vpop.permute.xlu0 %271
      %vm273 = vcmask 1039360
      %v274 = vsel %vm273, %v270, %v272
      %v276 = vadd.f32 %v258, %v274
      %279 = vrot.lane.b32.xlu0 %v258, 127
      %v280 = vpop.permute.xlu0 %279
      %281 = vrot.lane.b32.xlu0 %v259, 127
      %v282 = vpop.permute.xlu0 %281
      %v283 = vsel %vm273, %v280, %v282
      %v285 = vadd.f32 %v276, %v283
      %288 = vrot.lane.b32.xlu0 %v254, 116
      %v289 = vpop.permute.xlu0 %288
      %290 = vrot.lane.b32.xlu0 %v255, 116
      %v291 = vpop.permute.xlu0 %290
      %vm292 = vcmask 949248
      %v293 = vsel %vm292, %v289, %v291
      %v295 = vadd.f32 %v285, %v293
      %298 = vrot.lane.b32.xlu0 %v252, 115
      %v299 = vpop.permute.xlu0 %298
      %300 = vrot.lane.b32.xlu0 %v253, 115
      %v301 = vpop.permute.xlu0 %300
      %vm302 = vcmask 941056
      %v303 = vsel %vm302, %v299, %v301
      %v305 = vadd.f32 %v295, %v303
      %306 = vrot.lane.b32.xlu0 %v254, 115
      %v307 = vpop.permute.xlu0 %306
      %308 = vrot.lane.b32.xlu0 %v255, 115
      %v309 = vpop.permute.xlu0 %308
      %v310 = vsel %vm302, %v307, %v309
      %v312 = vadd.f32 %v305, %v310
      %313 = vrot.lane.b32.xlu0 %v258, 116
      %v314 = vpop.permute.xlu0 %313
      %315 = vrot.lane.b32.xlu0 %v259, 116
      %v316 = vpop.permute.xlu0 %315
      %v317 = vsel %vm292, %v314, %v316
      %v319 = vadd.f32 %v312, %v317
      %320 = vrot.lane.b32.xlu0 %v256, 115
      %v321 = vpop.permute.xlu0 %320
      %322 = vrot.lane.b32.xlu0 %v257, 115
      %v323 = vpop.permute.xlu0 %322
      %v324 = vsel %vm302, %v321, %v323
      %v326 = vadd.f32 %v319, %v324
      %327 = vrot.lane.b32.xlu0 %v258, 115
      %v328 = vpop.permute.xlu0 %327
      %329 = vrot.lane.b32.xlu0 %v259, 115
      %v330 = vpop.permute.xlu0 %329
      %v331 = vsel %vm302, %v328, %v330
      %v333 = vadd.f32 %v326, %v331
      %v334 = vmul.f32 %v333, 0.11111111
      %vm335 = vcmask 64512
      %v337 = vsel %vm335, %v260, 0
      %339 = vmatpush.msra.mxu0 0.0
      %340 = vmatpush.msra.mxu0 0.0
      %341 = vmatpush.msra.mxu0 0.0
      %342 = vmatpush.msra.mxu0 0.0
      %343 = vmatpush.msra.mxu0 0.0
      %344 = vmatpush.msra.mxu0 0.0
      %345 = vmatpush.msra.mxu0 0.0
      %346 = vmatpush.msra.mxu0 0.0
      %347 = vmatpush.msra.mxu0 0.0
      %348 = vmatpush.msra.mxu0 0.0
      %349 = vmatpush.msra.mxu0 0.0
      %350 = vmatpush.msra.mxu0 0.0
      %351 = vmatpush.msra.mxu0 0.0
      %352 = vmatpush.msra.mxu0 0.0
      %353 = vmatpush.msra.mxu0 0.0
      %354 = vmatpush.msra.mxu0 %v252
      %355 = vmatmul.f32.gmra.mxu0 %v337
      %v356 = vpop.f32.mrf.mxu0
      %v357 = vadd.f32 0.0, %v356
      %358 = vdwg.mxu0
      %359 = vmatpush.msra.mxu0 0.0
      %360 = vmatpush.msra.mxu0 0.0
      %361 = vmatpush.msra.mxu0 0.0
      %362 = vmatpush.msra.mxu0 0.0
      %363 = vmatpush.msra.mxu0 0.0
      %364 = vmatpush.msra.mxu0 0.0
      %365 = vmatpush.msra.mxu0 0.0
      %366 = vmatpush.msra.mxu0 0.0
      %367 = vmatpush.msra.mxu0 0.0
      %368 = vmatpush.msra.mxu0 0.0
      %369 = vmatpush.msra.mxu0 0.0
      %370 = vmatpush.msra.mxu0 0.0
      %371 = vmatpush.msra.mxu0 0.0
      %372 = vmatpush.msra.mxu0 0.0
      %373 = vmatpush.msra.mxu0 0.0
      %374 = vmatpush.msra.mxu0 %v253
      %375 = vmatmul.f32.gmra.mxu0 %v337
      %v376 = vpop.f32.mrf.mxu0
      %v377 = vadd.f32 0.0, %v376
      %378 = vdwg.mxu0
      %380 = vset.pattern.permute.xlu0 0
      %381 = vperm.xlu0 %380, %v264
      %v382 = vpop.permute.xlu0 %381
      %v384 = vmul.f32 %v357, %v382
      %v385 = vmul.f32 %v377, %v382
      %386 = vset.pattern.permute.xlu0 1
      %387 = vperm.xlu0 %386, %v264
      %v388 = vpop.permute.xlu0 %387
      %v390 = vadd.f32 %v384, %v388
      %v391 = vadd.f32 %v385, %v388
      %vm392 = vcmp.gt.f32.partialorder %v390, 0.0
      %vm393 = vcmp.gt.f32.partialorder %v391, 0.0
      %394 = vset.pattern.permute.xlu0 2
      %395 = vperm.xlu0 %394, %v264
      %v396 = vpop.permute.xlu0 %395
      %v398 = vmul.f32 %v390, %v396
      %v399 = vmul.f32 %v391, %v396
      %v400 = vsel %vm392, %v390, %v398
      %v401 = vsel %vm393, %v391, %v399
      %v403 = vperm.slane %v266, 0
      %v404 = vperm.slane %v266, 1
      %v407 = vmul.f32 %v400, %v403
      %v408 = vmul.f32 %v401, %v404
      %409 = vmatpush.msra.mxu0 0.0
      %410 = vmatpush.msra.mxu0 0.0
      %411 = vmatpush.msra.mxu0 0.0
      %412 = vmatpush.msra.mxu0 0.0
      %413 = vmatpush.msra.mxu0 0.0
      %414 = vmatpush.msra.mxu0 0.0
      %415 = vmatpush.msra.mxu0 0.0
      %416 = vmatpush.msra.mxu0 0.0
      %417 = vmatpush.msra.mxu0 0.0
      %418 = vmatpush.msra.mxu0 0.0
      %419 = vmatpush.msra.mxu0 0.0
      %420 = vmatpush.msra.mxu0 0.0
      %421 = vmatpush.msra.mxu0 0.0
      %422 = vmatpush.msra.mxu0 0.0
      %423 = vmatpush.msra.mxu0 0.0
      %424 = vmatpush.msra.mxu0 %v254
      %425 = vmatmul.f32.gmra.mxu0 %v337
      %v426 = vpop.f32.mrf.mxu0
      %v427 = vadd.f32 0.0, %v426
      %428 = vdwg.mxu0
      %429 = vmatpush.msra.mxu0 0.0
      %430 = vmatpush.msra.mxu0 0.0
      %431 = vmatpush.msra.mxu0 0.0
      %432 = vmatpush.msra.mxu0 0.0
      %433 = vmatpush.msra.mxu0 0.0
      %434 = vmatpush.msra.mxu0 0.0
      %435 = vmatpush.msra.mxu0 0.0
      %436 = vmatpush.msra.mxu0 0.0
      %437 = vmatpush.msra.mxu0 0.0
      %438 = vmatpush.msra.mxu0 0.0
      %439 = vmatpush.msra.mxu0 0.0
      %440 = vmatpush.msra.mxu0 0.0
      %441 = vmatpush.msra.mxu0 0.0
      %442 = vmatpush.msra.mxu0 0.0
      %443 = vmatpush.msra.mxu0 0.0
      %444 = vmatpush.msra.mxu0 %v255
      %445 = vmatmul.f32.gmra.mxu0 %v337
      %v446 = vpop.f32.mrf.mxu0
      %v447 = vadd.f32 0.0, %v446
      %448 = vdwg.mxu0
      %v449 = vmul.f32 %v427, %v382
      %v450 = vmul.f32 %v447, %v382
      %v451 = vadd.f32 %v449, %v388
      %v452 = vadd.f32 %v450, %v388
      %vm453 = vcmp.gt.f32.partialorder %v451, 0.0
      %vm454 = vcmp.gt.f32.partialorder %v452, 0.0
      %v455 = vmul.f32 %v451, %v396
      %v456 = vmul.f32 %v452, %v396
      %v457 = vsel %vm453, %v451, %v455
      %v458 = vsel %vm454, %v452, %v456
      %v459 = vmul.f32 %v457, %v403
      %v460 = vmul.f32 %v458, %v404
      %461 = vmatpush.msra.mxu0 0.0
      %462 = vmatpush.msra.mxu0 0.0
      %463 = vmatpush.msra.mxu0 0.0
      %464 = vmatpush.msra.mxu0 0.0
      %465 = vmatpush.msra.mxu0 0.0
      %466 = vmatpush.msra.mxu0 0.0
      %467 = vmatpush.msra.mxu0 0.0
      %468 = vmatpush.msra.mxu0 0.0
      %469 = vmatpush.msra.mxu0 0.0
      %470 = vmatpush.msra.mxu0 0.0
      %471 = vmatpush.msra.mxu0 0.0
      %472 = vmatpush.msra.mxu0 0.0
      %473 = vmatpush.msra.mxu0 0.0
      %474 = vmatpush.msra.mxu0 0.0
      %475 = vmatpush.msra.mxu0 0.0
      %476 = vmatpush.msra.mxu0 %v256
      %477 = vmatmul.f32.gmra.mxu0 %v337
      %v478 = vpop.f32.mrf.mxu0
      %v479 = vadd.f32 0.0, %v478
      %480 = vdwg.mxu0
      %481 = vmatpush.msra.mxu0 0.0
      %482 = vmatpush.msra.mxu0 0.0
      %483 = vmatpush.msra.mxu0 0.0
      %484 = vmatpush.msra.mxu0 0.0
      %485 = vmatpush.msra.mxu0 0.0
      %486 = vmatpush.msra.mxu0 0.0
      %487 = vmatpush.msra.mxu0 0.0
      %488 = vmatpush.msra.mxu0 0.0
      %489 = vmatpush.msra.mxu0 0.0
      %490 = vmatpush.msra.mxu0 0.0
      %491 = vmatpush.msra.mxu0 0.0
      %492 = vmatpush.msra.mxu0 0.0
      %493 = vmatpush.msra.mxu0 0.0
      %494 = vmatpush.msra.mxu0 0.0
      %495 = vmatpush.msra.mxu0 0.0
      %496 = vmatpush.msra.mxu0 %v257
      %497 = vmatmul.f32.gmra.mxu0 %v337
      %v498 = vpop.f32.mrf.mxu0
      %v499 = vadd.f32 0.0, %v498
      %500 = vdwg.mxu0
      %v501 = vmul.f32 %v479, %v382
      %v502 = vmul.f32 %v499, %v382
      %v503 = vadd.f32 %v501, %v388
      %v504 = vadd.f32 %v502, %v388
      %vm505 = vcmp.gt.f32.partialorder %v503, 0.0
      %vm506 = vcmp.gt.f32.partialorder %v504, 0.0
      %v507 = vmul.f32 %v503, %v396
      %v508 = vmul.f32 %v504, %v396
      %v509 = vsel %vm505, %v503, %v507
      %v510 = vsel %vm506, %v504, %v508
      %v511 = vmul.f32 %v509, %v403
      %v512 = vmul.f32 %v510, %v404
      %513 = vmatpush.msra.mxu0 0.0
      %514 = vmatpush.msra.mxu0 0.0
      %515 = vmatpush.msra.mxu0 0.0
      %516 = vmatpush.msra.mxu0 0.0
      %517 = vmatpush.msra.mxu0 0.0
      %518 = vmatpush.msra.mxu0 0.0
      %519 = vmatpush.msra.mxu0 0.0
      %520 = vmatpush.msra.mxu0 0.0
      %521 = vmatpush.msra.mxu0 0.0
      %522 = vmatpush.msra.mxu0 0.0
      %523 = vmatpush.msra.mxu0 0.0
      %524 = vmatpush.msra.mxu0 0.0
      %525 = vmatpush.msra.mxu0 0.0
      %526 = vmatpush.msra.mxu0 0.0
      %527 = vmatpush.msra.mxu0 0.0
      %528 = vmatpush.msra.mxu0 %v258
      %529 = vmatmul.f32.gmra.mxu0 %v337
      %v530 = vpop.f32.mrf.mxu0
      %v531 = vadd.f32 0.0, %v530
      %532 = vdwg.mxu0
      %533 = vmatpush.msra.mxu0 0.0
      %534 = vmatpush.msra.mxu0 0.0
      %535 = vmatpush.msra.mxu0 0.0
      %536 = vmatpush.msra.mxu0 0.0
      %537 = vmatpush.msra.mxu0 0.0
      %538 = vmatpush.msra.mxu0 0.0
      %539 = vmatpush.msra.mxu0 0.0
      %540 = vmatpush.msra.mxu0 0.0
      %541 = vmatpush.msra.mxu0 0.0
      %542 = vmatpush.msra.mxu0 0.0
      %543 = vmatpush.msra.mxu0 0.0
      %544 = vmatpush.msra.mxu0 0.0
      %545 = vmatpush.msra.mxu0 0.0
      %546 = vmatpush.msra.mxu0 0.0
      %547 = vmatpush.msra.mxu0 0.0
      %548 = vmatpush.msra.mxu0 %v259
      %549 = vmatmul.f32.gmra.mxu0 %v337
      %v550 = vpop.f32.mrf.mxu0
      %v551 = vadd.f32 0.0, %v550
      %552 = vdwg.mxu0
      %v553 = vmul.f32 %v531, %v382
      %v554 = vmul.f32 %v551, %v382
      %v555 = vadd.f32 %v553, %v388
      %v556 = vadd.f32 %v554, %v388
      %vm557 = vcmp.gt.f32.partialorder %v555, 0.0
      %vm558 = vcmp.gt.f32.partialorder %v556, 0.0
      %v559 = vmul.f32 %v555, %v396
      %v560 = vmul.f32 %v556, %v396
      %v561 = vsel %vm557, %v555, %v559
      %v562 = vsel %vm558, %v556, %v560
      %v563 = vmul.f32 %v561, %v403
      %v564 = vmul.f32 %v562, %v404
      %566 = vset.pattern.permute.xlu0 0
      %567 = vperm.xlu0 %566, %v261
      %v568 = vpop.permute.xlu0 %567
      %v570 = vmul.f32 %v563, %v568
      %v571 = vmul.f32 %v564, %v568
      %v572 = vadd.f32 %v570, 0.0
      %v573 = vadd.f32 %v571, 0.0
      %574 = vset.pattern.permute.xlu0 1
      %575 = vperm.xlu0 %574, %v261
      %v576 = vpop.permute.xlu0 %575
      %v578 = vmul.f32 %v511, %v576
      %v579 = vmul.f32 %v512, %v576
      %582 = vrot.lane.b32.xlu0 %v578, 127
      %v583 = vpop.permute.xlu0 %582
      %584 = vrot.lane.b32.xlu0 %v579, 127
      %v585 = vpop.permute.xlu0 %584
      %v586 = vsel %vm273, %v583, %v585
      %v589 = vadd.f32 %v572, %v586
      %v590 = vadd.f32 %v573, %v585
      %591 = vset.pattern.permute.xlu0 2
      %592 = vperm.xlu0 %591, %v261
      %v593 = vpop.permute.xlu0 %592
      %v595 = vmul.f32 %v563, %v593
      %v596 = vmul.f32 %v564, %v593
      %599 = vrot.lane.b32.xlu0 %v595, 127
      %v600 = vpop.permute.xlu0 %599
      %601 = vrot.lane.b32.xlu0 %v596, 127
      %v602 = vpop.permute.xlu0 %601
      %v603 = vsel %vm273, %v600, %v602
      %v606 = vadd.f32 %v589, %v603
      %v607 = vadd.f32 %v590, %v602
      %608 = vset.pattern.permute.xlu0 3
      %609 = vperm.xlu0 %608, %v261
      %v610 = vpop.permute.xlu0 %609
      %v612 = vmul.f32 %v459, %v610
      %v613 = vmul.f32 %v460, %v610
      %616 = vrot.lane.b32.xlu0 %v612, 116
      %v617 = vpop.permute.xlu0 %616
      %618 = vrot.lane.b32.xlu0 %v613, 116
      %v619 = vpop.permute.xlu0 %618
      %v620 = vsel %vm292, %v617, %v619
      %v623 = vadd.f32 %v606, %v620
      %v624 = vadd.f32 %v607, %v619
      %625 = vset.pattern.permute.xlu0 4
      %626 = vperm.xlu0 %625, %v261
      %v627 = vpop.permute.xlu0 %626
      %v629 = vmul.f32 %v407, %v627
      %v630 = vmul.f32 %v408, %v627
      %633 = vrot.lane.b32.xlu0 %v629, 115
      %v634 = vpop.permute.xlu0 %633
      %635 = vrot.lane.b32.xlu0 %v630, 115
      %v636 = vpop.permute.xlu0 %635
      %v637 = vsel %vm302, %v634, %v636
      %v640 = vadd.f32 %v623, %v637
      %v641 = vadd.f32 %v624, %v636
      %642 = vset.pattern.permute.xlu0 5
      %643 = vperm.xlu0 %642, %v261
      %v644 = vpop.permute.xlu0 %643
      %v646 = vmul.f32 %v459, %v644
      %v647 = vmul.f32 %v460, %v644
      %650 = vrot.lane.b32.xlu0 %v646, 115
      %v651 = vpop.permute.xlu0 %650
      %652 = vrot.lane.b32.xlu0 %v647, 115
      %v653 = vpop.permute.xlu0 %652
      %v654 = vsel %vm302, %v651, %v653
      %v657 = vadd.f32 %v640, %v654
      %v658 = vadd.f32 %v641, %v653
      %659 = vset.pattern.permute.xlu0 6
      %660 = vperm.xlu0 %659, %v261
      %v661 = vpop.permute.xlu0 %660
      %v663 = vmul.f32 %v563, %v661
      %v664 = vmul.f32 %v564, %v661
      %667 = vrot.lane.b32.xlu0 %v663, 116
      %v668 = vpop.permute.xlu0 %667
      %669 = vrot.lane.b32.xlu0 %v664, 116
      %v670 = vpop.permute.xlu0 %669
      %v671 = vsel %vm292, %v668, %v670
      %v674 = vadd.f32 %v657, %v671
      %v675 = vadd.f32 %v658, %v670
      %676 = vset.pattern.permute.xlu0 7
      %677 = vperm.xlu0 %676, %v261
      %v678 = vpop.permute.xlu0 %677
      %v680 = vmul.f32 %v511, %v678
      %v681 = vmul.f32 %v512, %v678
      %684 = vrot.lane.b32.xlu0 %v680, 115
      %v685 = vpop.permute.xlu0 %684
      %686 = vrot.lane.b32.xlu0 %v681, 115
      %v687 = vpop.permute.xlu0 %686
      %v688 = vsel %vm302, %v685, %v687
      %v691 = vadd.f32 %v674, %v688
      %v692 = vadd.f32 %v675, %v687
      %693 = vset.pattern.permute.xlu0 8
      %694 = vperm.xlu0 %693, %v261
      %v695 = vpop.permute.xlu0 %694
      %v697 = vmul.f32 %v563, %v695
      %v698 = vmul.f32 %v564, %v695
      %701 = vrot.lane.b32.xlu0 %v697, 115
      %v702 = vpop.permute.xlu0 %701
      %703 = vrot.lane.b32.xlu0 %v698, 115
      %v704 = vpop.permute.xlu0 %703
      %v705 = vsel %vm302, %v702, %v704
      %v708 = vadd.f32 %v691, %v705
      %v709 = vadd.f32 %v692, %v704
      %710 = vset.pattern.permute.xlu0 3
      %711 = vperm.xlu0 %710, %v264
      %v712 = vpop.permute.xlu0 %711
      %v714 = vmul.f32 %v708, %v712
      %v715 = vmul.f32 %v709, %v712
      %716 = vset.pattern.permute.xlu0 4
      %717 = vperm.xlu0 %716, %v264
      %v718 = vpop.permute.xlu0 %717
      %v720 = vadd.f32 %v714, %v718
      %v721 = vadd.f32 %v715, %v718
      %vm722 = vcmp.gt.f32.partialorder %v720, 0.0
      %vm723 = vcmp.gt.f32.partialorder %v721, 0.0
      %724 = vset.pattern.permute.xlu0 5
      %725 = vperm.xlu0 %724, %v264
      %v726 = vpop.permute.xlu0 %725
      %v728 = vmul.f32 %v720, %v726
      %v729 = vmul.f32 %v721, %v726
      %v730 = vsel %vm722, %v720, %v728
      %v731 = vsel %vm723, %v721, %v729
      %732 = vset.pattern.permute.xlu0 9
      %733 = vperm.xlu0 %732, %v261
      %v734 = vpop.permute.xlu0 %733
      %v736 = vmul.f32 %v407, %v734
      %v737 = vmul.f32 %v408, %v734
      %v738 = vadd.f32 %v736, 0.0
      %v739 = vadd.f32 %v737, 0.0
      %740 = vset.pattern.permute.xlu0 10
      %741 = vperm.xlu0 %740, %v261
      %v742 = vpop.permute.xlu0 %741
      %v744 = vmul.f32 %v407, %v742
      %v745 = vmul.f32 %v408, %v742
      %748 = vrot.lane.b32.xlu0 %v744, 127
      %v749 = vpop.permute.xlu0 %748
      %750 = vrot.lane.b32.xlu0 %v745, 127
      %v751 = vpop.permute.xlu0 %750
      %v752 = vsel %vm273, %v749, %v751
      %v755 = vadd.f32 %v738, %v752
      %v756 = vadd.f32 %v739, %v751
      %757 = vset.pattern.permute.xlu0 11
      %758 = vperm.xlu0 %757, %v261
      %v759 = vpop.permute.xlu0 %758
      %v761 = vmul.f32 %v407, %v759
      %v762 = vmul.f32 %v408, %v759
      %765 = vrot.lane.b32.xlu0 %v761, 126
      %v766 = vpop.permute.xlu0 %765
      %767 = vrot.lane.b32.xlu0 %v762, 126
      %v768 = vpop.permute.xlu0 %767
      %vm769 = vcmask 1031168
      %v770 = vsel %vm769, %v766, %v768
      %v773 = vadd.f32 %v755, %v770
      %v774 = vadd.f32 %v756, %v768
      %775 = vset.pattern.permute.xlu0 12
      %776 = vperm.xlu0 %775, %v261
      %v777 = vpop.permute.xlu0 %776
      %v779 = vmul.f32 %v407, %v777
      %v780 = vmul.f32 %v408, %v777
      %783 = vrot.lane.b32.xlu0 %v779, 116
      %v784 = vpop.permute.xlu0 %783
      %785 = vrot.lane.b32.xlu0 %v780, 116
      %v786 = vpop.permute.xlu0 %785
      %v787 = vsel %vm292, %v784, %v786
      %v790 = vadd.f32 %v773, %v787
      %v791 = vadd.f32 %v774, %v786
      %792 = vset.pattern.permute.xlu0 13
      %793 = vperm.xlu0 %792, %v261
      %v794 = vpop.permute.xlu0 %793
      %v796 = vmul.f32 %v407, %v794
      %v797 = vmul.f32 %v408, %v794
      %800 = vrot.lane.b32.xlu0 %v796, 115
      %v801 = vpop.permute.xlu0 %800
      %802 = vrot.lane.b32.xlu0 %v797, 115
      %v803 = vpop.permute.xlu0 %802
      %v804 = vsel %vm302, %v801, %v803
      %v807 = vadd.f32 %v790, %v804
      %v808 = vadd.f32 %v791, %v803
      %809 = vset.pattern.permute.xlu0 14
      %810 = vperm.xlu0 %809, %v261
      %v811 = vpop.permute.xlu0 %810
      %v813 = vmul.f32 %v407, %v811
      %v814 = vmul.f32 %v408, %v811
      %817 = vrot.lane.b32.xlu0 %v813, 114
      %v818 = vpop.permute.xlu0 %817
      %819 = vrot.lane.b32.xlu0 %v814, 114
      %v820 = vpop.permute.xlu0 %819
      %vm821 = vcmask 932864
      %v822 = vsel %vm821, %v818, %v820
      %v825 = vadd.f32 %v807, %v822
      %v826 = vadd.f32 %v808, %v820
      %827 = vset.pattern.permute.xlu0 15
      %828 = vperm.xlu0 %827, %v261
      %v829 = vpop.permute.xlu0 %828
      %v831 = vmul.f32 %v407, %v829
      %v832 = vmul.f32 %v408, %v829
      %835 = vrot.lane.b32.xlu0 %v831, 104
      %v836 = vpop.permute.xlu0 %835
      %837 = vrot.lane.b32.xlu0 %v832, 104
      %v838 = vpop.permute.xlu0 %837
      %vm839 = vcmask 850944
      %v840 = vsel %vm839, %v836, %v838
      %v843 = vadd.f32 %v825, %v840
      %v844 = vadd.f32 %v826, %v838
      %845 = vset.pattern.permute.xlu0 16
      %846 = vperm.xlu0 %845, %v261
      %v847 = vpop.permute.xlu0 %846
      %v849 = vmul.f32 %v407, %v847
      %v850 = vmul.f32 %v408, %v847
      %853 = vrot.lane.b32.xlu0 %v849, 103
      %v854 = vpop.permute.xlu0 %853
      %855 = vrot.lane.b32.xlu0 %v850, 103
      %v856 = vpop.permute.xlu0 %855
      %vm857 = vcmask 842752
      %v858 = vsel %vm857, %v854, %v856
      %v861 = vadd.f32 %v843, %v858
      %v862 = vadd.f32 %v844, %v856
      %863 = vset.pattern.permute.xlu0 17
      %864 = vperm.xlu0 %863, %v261
      %v865 = vpop.permute.xlu0 %864
      %v867 = vmul.f32 %v407, %v865
      %v868 = vmul.f32 %v408, %v865
      %871 = vrot.lane.b32.xlu0 %v867, 102
      %v872 = vpop.permute.xlu0 %871
      %873 = vrot.lane.b32.xlu0 %v868, 102
      %v874 = vpop.permute.xlu0 %873
      %vm875 = vcmask 834560
      %v876 = vsel %vm875, %v872, %v874
      %v879 = vadd.f32 %v861, %v876
      %v880 = vadd.f32 %v862, %v874
      %v881 = vadd.f32 %v879, %v708
      %v882 = vadd.f32 %v880, %v709
      %v883 = vrot.slane %v712, 4
      %v885 = vmul.f32 %v881, %v883
      %v886 = vmul.f32 %v882, %v883
      %v887 = vrot.slane %v718, 4
      %v889 = vadd.f32 %v885, %v887
      %v890 = vadd.f32 %v886, %v887
      %vm891 = vcmp.gt.f32.partialorder %v889, 0.0
      %vm892 = vcmp.gt.f32.partialorder %v890, 0.0
      %v893 = vrot.slane %v726, 4
      %v895 = vmul.f32 %v889, %v893
      %v896 = vmul.f32 %v890, %v893
      %v897 = vsel %vm891, %v889, %v895
      %v898 = vsel %vm892, %v890, %v896
      %901 = vrot.lane.b32.xlu0 %v262, 124
      %v902 = vpop.permute.xlu0 %901
      %903 = vrot.lane.b32.xlu0 %v263, 124
      %v904 = vpop.permute.xlu0 %903
      %907 = vrot.lane.b32.xlu0 %v897, 115
      %v908 = vpop.permute.xlu0 %907
      %909 = vrot.lane.b32.xlu0 %v898, 115
      %v910 = vpop.permute.xlu0 %909
      %v911 = vsel %vm302, %v908, %v910
      %vm912 = vcmask 31744
      %v913 = vsel %vm912, %v902, 0
      %v915 = vsel %vm912, %v904, 0
      %vm917 = vcmask 1043456
      %v918 = vsel %vm917, %v911, 0
      %920 = vmatpush.msra.mxu0 0.0
      %921 = vmatpush.msra.mxu0 0.0
      %922 = vmatpush.msra.mxu0 0.0
      %923 = vmatpush.msra.mxu0 0.0
      %924 = vmatpush.msra.mxu0 0.0
      %925 = vmatpush.msra.mxu0 0.0
      %926 = vmatpush.msra.mxu0 0.0
      %927 = vmatpush.msra.mxu0 0.0
      %928 = vmatpush.msra.mxu0 0.0
      %929 = vmatpush.msra.mxu0 0.0
      %930 = vmatpush.msra.mxu0 0.0
      %931 = vmatpush.msra.mxu0 0.0
      %932 = vmatpush.msra.mxu0 0.0
      %933 = vmatpush.msra.mxu0 0.0
      %934 = vmatpush.msra.mxu0 0.0
      %935 = vmatpush.msra.mxu0 %v918
      %936 = vmatmul.f32.gmra.mxu0 %v913
      %v937 = vpop.f32.mrf.mxu0
      %v938 = vadd.f32 0.0, %v937
      %939 = vmatmul.f32.gmra.mxu0 %v915
      %v940 = vpop.f32.mrf.mxu0
      %v941 = vadd.f32 0.0, %v940
      %942 = vdwg.mxu0
      %945 = vrot.lane.b32.xlu0 %v730, 115
      %v946 = vpop.permute.xlu0 %945
      %947 = vrot.lane.b32.xlu0 %v731, 115
      %v948 = vpop.permute.xlu0 %947
      %v949 = vsel %vm302, %v946, %v948
      %v950 = vsel %vm912, %v262, 0
      %v952 = vsel %vm912, %v263, 0
      %v954 = vsel %vm917, %v949, 0
      %956 = vmatpush.msra.mxu0 0.0
      %957 = vmatpush.msra.mxu0 0.0
      %958 = vmatpush.msra.mxu0 0.0
      %959 = vmatpush.msra.mxu0 0.0
      %960 = vmatpush.msra.mxu0 0.0
      %961 = vmatpush.msra.mxu0 0.0
      %962 = vmatpush.msra.mxu0 0.0
      %963 = vmatpush.msra.mxu0 0.0
      %964 = vmatpush.msra.mxu0 0.0
      %965 = vmatpush.msra.mxu0 0.0
      %966 = vmatpush.msra.mxu0 0.0
      %967 = vmatpush.msra.mxu0 0.0
      %968 = vmatpush.msra.mxu0 0.0
      %969 = vmatpush.msra.mxu0 0.0
      %970 = vmatpush.msra.mxu0 0.0
      %971 = vmatpush.msra.mxu0 %v954
      %972 = vmatmul.f32.gmra.mxu0 %v950
      %v973 = vpop.f32.mrf.mxu0
      %v974 = vadd.f32 %v938, %v973
      %975 = vmatmul.f32.gmra.mxu0 %v952
      %v976 = vpop.f32.mrf.mxu0
      %v977 = vadd.f32 %v941, %v976
      %978 = vdwg.mxu0
      %979 = vset.pattern.permute.xlu0 18
      %980 = vperm.xlu0 %979, %v261
      %v981 = vpop.permute.xlu0 %980
      %v983 = vmul.f32 %v563, %v981
      %v984 = vadd.f32 %v983, 0.0
      %985 = vset.pattern.permute.xlu0 19
      %986 = vperm.xlu0 %985, %v261
      %v987 = vpop.permute.xlu0 %986
      %v989 = vmul.f32 %v511, %v987
      %v990 = vmul.f32 %v512, %v987
      %993 = vrot.lane.b32.xlu0 %v989, 126
      %v994 = vpop.permute.xlu0 %993
      %995 = vrot.lane.b32.xlu0 %v990, 126
      %v996 = vpop.permute.xlu0 %995
      %v997 = vsel %vm769, %v994, %v996
      %v999 = vadd.f32 %v984, %v997
      %1000 = vset.pattern.permute.xlu0 20
      %1001 = vperm.xlu0 %1000, %v261
      %v1002 = vpop.permute.xlu0 %1001
      %v1004 = vmul.f32 %v563, %v1002
      %v1005 = vmul.f32 %v564, %v1002
      %1008 = vrot.lane.b32.xlu0 %v1004, 125
      %v1009 = vpop.permute.xlu0 %1008
      %1010 = vrot.lane.b32.xlu0 %v1005, 125
      %v1011 = vpop.permute.xlu0 %1010
      %vm1012 = vcmask 1022976
      %v1013 = vsel %vm1012, %v1009, %v1011
      %v1015 = vadd.f32 %v999, %v1013
      %1016 = vset.pattern.permute.xlu0 21
      %1017 = vperm.xlu0 %1016, %v261
      %v1018 = vpop.permute.xlu0 %1017
      %v1020 = vmul.f32 %v459, %v1018
      %v1021 = vmul.f32 %v460, %v1018
      %1024 = vrot.lane.b32.xlu0 %v1020, 104
      %v1025 = vpop.permute.xlu0 %1024
      %1026 = vrot.lane.b32.xlu0 %v1021, 104
      %v1027 = vpop.permute.xlu0 %1026
      %v1028 = vsel %vm839, %v1025, %v1027
      %v1030 = vadd.f32 %v1015, %v1028
      %1031 = vset.pattern.permute.xlu0 22
      %1032 = vperm.xlu0 %1031, %v261
      %v1033 = vpop.permute.xlu0 %1032
      %v1035 = vmul.f32 %v407, %v1033
      %v1036 = vmul.f32 %v408, %v1033
      %1039 = vrot.lane.b32.xlu0 %v1035, 102
      %v1040 = vpop.permute.xlu0 %1039
      %1041 = vrot.lane.b32.xlu0 %v1036, 102
      %v1042 = vpop.permute.xlu0 %1041
      %v1043 = vsel %vm875, %v1040, %v1042
      %v1045 = vadd.f32 %v1030, %v1043
      %1046 = vset.pattern.permute.xlu0 23
      %1047 = vperm.xlu0 %1046, %v261
      %v1048 = vpop.permute.xlu0 %1047
      %v1050 = vmul.f32 %v459, %v1048
      %v1051 = vmul.f32 %v460, %v1048
      %1054 = vrot.lane.b32.xlu0 %v1050, 101
      %v1055 = vpop.permute.xlu0 %1054
      %1056 = vrot.lane.b32.xlu0 %v1051, 101
      %v1057 = vpop.permute.xlu0 %1056
      %vm1058 = vcmask 826368
      %v1059 = vsel %vm1058, %v1055, %v1057
      %v1061 = vadd.f32 %v1045, %v1059
      %1062 = vset.pattern.permute.xlu0 24
      %1063 = vperm.xlu0 %1062, %v261
      %v1064 = vpop.permute.xlu0 %1063
      %v1066 = vmul.f32 %v563, %v1064
      %v1067 = vmul.f32 %v564, %v1064
      %1070 = vrot.lane.b32.xlu0 %v1066, 92
      %v1071 = vpop.permute.xlu0 %1070
      %1072 = vrot.lane.b32.xlu0 %v1067, 92
      %v1073 = vpop.permute.xlu0 %1072
      %vm1074 = vcmask 752640
      %v1075 = vsel %vm1074, %v1071, %v1073
      %v1077 = vadd.f32 %v1061, %v1075
      %1078 = vset.pattern.permute.xlu0 25
      %1079 = vperm.xlu0 %1078, %v261
      %v1080 = vpop.permute.xlu0 %1079
      %v1082 = vmul.f32 %v511, %v1080
      %v1083 = vmul.f32 %v512, %v1080
      %1086 = vrot.lane.b32.xlu0 %v1082, 90
      %v1087 = vpop.permute.xlu0 %1086
      %1088 = vrot.lane.b32.xlu0 %v1083, 90
      %v1089 = vpop.permute.xlu0 %1088
      %vm1090 = vcmask 736256
      %v1091 = vsel %vm1090, %v1087, %v1089
      %v1093 = vadd.f32 %v1077, %v1091
      %1094 = vset.pattern.permute.xlu0 26
      %1095 = vperm.xlu0 %1094, %v261
      %v1096 = vpop.permute.xlu0 %1095
      %v1098 = vmul.f32 %v563, %v1096
      %v1099 = vmul.f32 %v564, %v1096
      %1102 = vrot.lane.b32.xlu0 %v1098, 89
      %v1103 = vpop.permute.xlu0 %1102
      %1104 = vrot.lane.b32.xlu0 %v1099, 89
      %v1105 = vpop.permute.xlu0 %1104
      %vm1106 = vcmask 728064
      %v1107 = vsel %vm1106, %v1103, %v1105
      %v1109 = vadd.f32 %v1093, %v1107
      %1112 = vrot.lane.b32.xlu0 %v881, 115
      %v1113 = vpop.permute.xlu0 %1112
      %1114 = vrot.lane.b32.xlu0 %v882, 115
      %v1115 = vpop.permute.xlu0 %1114
      %v1116 = vsel %vm302, %v1113, %v1115
      %v1118 = vadd.f32 %v1109, %v1116
      %1120 = vset.pattern.permute.xlu0 3
      %1121 = vperm.xlu0 %1120, %v265
      %v1122 = vpop.permute.xlu0 %1121
      %v1124 = vmul.f32 %v1118, %v1122
      %1125 = vset.pattern.permute.xlu0 4
      %1126 = vperm.xlu0 %1125, %v265
      %v1127 = vpop.permute.xlu0 %1126
      %v1129 = vadd.f32 %v1124, %v1127
      %vm1130 = vcmp.gt.f32.partialorder %v1129, 0.0
      %1131 = vset.pattern.permute.xlu0 5
      %1132 = vperm.xlu0 %1131, %v265
      %v1133 = vpop.permute.xlu0 %1132
      %v1135 = vmul.f32 %v1129, %v1133
      %v1136 = vsel %vm1130, %v1129, %v1135
      %1137 = vrot.lane.b32.xlu0 %v262, 120
      %v1138 = vpop.permute.xlu0 %1137
      %1139 = vrot.lane.b32.xlu0 %v263, 120
      %v1140 = vpop.permute.xlu0 %1139
      %v1141 = vsel %vm912, %v1138, 0
      %v1143 = vsel %vm912, %v1140, 0
      %v1146 = vsel %vm917, %v1136, 0
      %1148 = vmatpush.msra.mxu0 0.0
      %1149 = vmatpush.msra.mxu0 0.0
      %1150 = vmatpush.msra.mxu0 0.0
      %1151 = vmatpush.msra.mxu0 0.0
      %1152 = vmatpush.msra.mxu0 0.0
      %1153 = vmatpush.msra.mxu0 0.0
      %1154 = vmatpush.msra.mxu0 0.0
      %1155 = vmatpush.msra.mxu0 0.0
      %1156 = vmatpush.msra.mxu0 0.0
      %1157 = vmatpush.msra.mxu0 0.0
      %1158 = vmatpush.msra.mxu0 0.0
      %1159 = vmatpush.msra.mxu0 0.0
      %1160 = vmatpush.msra.mxu0 0.0
      %1161 = vmatpush.msra.mxu0 0.0
      %1162 = vmatpush.msra.mxu0 0.0
      %1163 = vmatpush.msra.mxu0 %v1146
      %1164 = vmatmul.f32.gmra.mxu0 %v1141
      %v1165 = vpop.f32.mrf.mxu0
      %v1166 = vadd.f32 0.0, %v1165
      %1167 = vmatmul.f32.gmra.mxu0 %v1143
      %v1168 = vpop.f32.mrf.mxu0
      %v1169 = vadd.f32 0.0, %v1168
      %1170 = vdwg.mxu0
      %v1171 = vadd.f32 %v974, %v1166
      %v1172 = vadd.f32 %v977, %v1169
      %1173 = vset.pattern.permute.xlu0 27
      %1174 = vperm.xlu0 %1173, %v261
      %v1175 = vpop.permute.xlu0 %1174
      %v1177 = vmul.f32 %v407, %v1175
      %v1178 = vadd.f32 %v1177, 0.0
      %1179 = vset.pattern.permute.xlu0 28
      %1180 = vperm.xlu0 %1179, %v261
      %v1181 = vpop.permute.xlu0 %1180
      %v1183 = vmul.f32 %v407, %v1181
      %v1184 = vmul.f32 %v408, %v1181
      %1187 = vrot.lane.b32.xlu0 %v1183, 126
      %v1188 = vpop.permute.xlu0 %1187
      %1189 = vrot.lane.b32.xlu0 %v1184, 126
      %v1190 = vpop.permute.xlu0 %1189
      %v1191 = vsel %vm769, %v1188, %v1190
      %v1193 = vadd.f32 %v1178, %v1191
      %1194 = vset.pattern.permute.xlu0 29
      %1195 = vperm.xlu0 %1194, %v261
      %v1196 = vpop.permute.xlu0 %1195
      %v1198 = vmul.f32 %v407, %v1196
      %v1199 = vmul.f32 %v408, %v1196
      %1202 = vrot.lane.b32.xlu0 %v1198, 124
      %v1203 = vpop.permute.xlu0 %1202
      %1204 = vrot.lane.b32.xlu0 %v1199, 124
      %v1205 = vpop.permute.xlu0 %1204
      %vm1206 = vcmask 1014784
      %v1207 = vsel %vm1206, %v1203, %v1205
      %v1209 = vadd.f32 %v1193, %v1207
      %1210 = vset.pattern.permute.xlu0 30
      %1211 = vperm.xlu0 %1210, %v261
      %v1212 = vpop.permute.xlu0 %1211
      %v1214 = vmul.f32 %v407, %v1212
      %v1215 = vmul.f32 %v408, %v1212
      %1218 = vrot.lane.b32.xlu0 %v1214, 104
      %v1219 = vpop.permute.xlu0 %1218
      %1220 = vrot.lane.b32.xlu0 %v1215, 104
      %v1221 = vpop.permute.xlu0 %1220
      %v1222 = vsel %vm839, %v1219, %v1221
      %v1224 = vadd.f32 %v1209, %v1222
      %1225 = vset.pattern.permute.xlu0 31
      %1226 = vperm.xlu0 %1225, %v261
      %v1227 = vpop.permute.xlu0 %1226
      %v1229 = vmul.f32 %v407, %v1227
      %v1230 = vmul.f32 %v408, %v1227
      %1233 = vrot.lane.b32.xlu0 %v1229, 102
      %v1234 = vpop.permute.xlu0 %1233
      %1235 = vrot.lane.b32.xlu0 %v1230, 102
      %v1236 = vpop.permute.xlu0 %1235
      %v1237 = vsel %vm875, %v1234, %v1236
      %v1239 = vadd.f32 %v1224, %v1237
      %1240 = vset.pattern.permute.xlu0 32
      %1241 = vperm.xlu0 %1240, %v261
      %v1242 = vpop.permute.xlu0 %1241
      %v1244 = vmul.f32 %v407, %v1242
      %v1245 = vmul.f32 %v408, %v1242
      %1248 = vrot.lane.b32.xlu0 %v1244, 100
      %v1249 = vpop.permute.xlu0 %1248
      %1250 = vrot.lane.b32.xlu0 %v1245, 100
      %v1251 = vpop.permute.xlu0 %1250
      %vm1252 = vcmask 818176
      %v1253 = vsel %vm1252, %v1249, %v1251
      %v1255 = vadd.f32 %v1239, %v1253
      %1256 = vset.pattern.permute.xlu0 33
      %1257 = vperm.xlu0 %1256, %v261
      %v1258 = vpop.permute.xlu0 %1257
      %v1260 = vmul.f32 %v407, %v1258
      %v1261 = vmul.f32 %v408, %v1258
      %1264 = vrot.lane.b32.xlu0 %v1260, 80
      %v1265 = vpop.permute.xlu0 %1264
      %1266 = vrot.lane.b32.xlu0 %v1261, 80
      %v1267 = vpop.permute.xlu0 %1266
      %vm1268 = vcmask 654336
      %v1269 = vsel %vm1268, %v1265, %v1267
      %v1271 = vadd.f32 %v1255, %v1269
      %1272 = vset.pattern.permute.xlu0 34
      %1273 = vperm.xlu0 %1272, %v261
      %v1274 = vpop.permute.xlu0 %1273
      %v1276 = vmul.f32 %v407, %v1274
      %v1277 = vmul.f32 %v408, %v1274
      %1280 = vrot.lane.b32.xlu0 %v1276, 78
      %v1281 = vpop.permute.xlu0 %1280
      %1282 = vrot.lane.b32.xlu0 %v1277, 78
      %v1283 = vpop.permute.xlu0 %1282
      %vm1284 = vcmask 637952
      %v1285 = vsel %vm1284, %v1281, %v1283
      %v1287 = vadd.f32 %v1271, %v1285
      %1288 = vset.pattern.permute.xlu0 35
      %1289 = vperm.xlu0 %1288, %v261
      %v1290 = vpop.permute.xlu0 %1289
      %v1292 = vmul.f32 %v407, %v1290
      %v1293 = vmul.f32 %v408, %v1290
      %1296 = vrot.lane.b32.xlu0 %v1292, 76
      %v1297 = vpop.permute.xlu0 %1296
      %1298 = vrot.lane.b32.xlu0 %v1293, 76
      %v1299 = vpop.permute.xlu0 %1298
      %vm1300 = vcmask 621568
      %v1301 = vsel %vm1300, %v1297, %v1299
      %v1303 = vadd.f32 %v1287, %v1301
      %v1304 = vadd.f32 %v1303, %v1118
      %v1305 = vrot.slane %v1122, 4
      %v1307 = vmul.f32 %v1304, %v1305
      %v1308 = vrot.slane %v1127, 4
      %v1310 = vadd.f32 %v1307, %v1308
      %vm1311 = vcmp.gt.f32.partialorder %v1310, 0.0
      %v1312 = vrot.slane %v1133, 4
      %v1314 = vmul.f32 %v1310, %v1312
      %v1315 = vsel %vm1311, %v1310, %v1314
      %1316 = vrot.lane.b32.xlu0 %v262, 116
      %v1317 = vpop.permute.xlu0 %1316
      %1318 = vrot.lane.b32.xlu0 %v263, 116
      %v1319 = vpop.permute.xlu0 %1318
      %v1320 = vsel %vm912, %v1317, 0
      %v1322 = vsel %vm912, %v1319, 0
      %v1325 = vsel %vm917, %v1315, 0
      %1327 = vmatpush.msra.mxu0 0.0
      %1328 = vmatpush.msra.mxu0 0.0
      %1329 = vmatpush.msra.mxu0 0.0
      %1330 = vmatpush.msra.mxu0 0.0
      %1331 = vmatpush.msra.mxu0 0.0
      %1332 = vmatpush.msra.mxu0 0.0
      %1333 = vmatpush.msra.mxu0 0.0
      %1334 = vmatpush.msra.mxu0 0.0
      %1335 = vmatpush.msra.mxu0 0.0
      %1336 = vmatpush.msra.mxu0 0.0
      %1337 = vmatpush.msra.mxu0 0.0
      %1338 = vmatpush.msra.mxu0 0.0
      %1339 = vmatpush.msra.mxu0 0.0
      %1340 = vmatpush.msra.mxu0 0.0
      %1341 = vmatpush.msra.mxu0 0.0
      %1342 = vmatpush.msra.mxu0 %v1325
      %1343 = vmatmul.f32.gmra.mxu0 %v1320
      %v1344 = vpop.f32.mrf.mxu0
      %v1345 = vadd.f32 0.0, %v1344
      %1346 = vmatmul.f32.gmra.mxu0 %v1322
      %v1347 = vpop.f32.mrf.mxu0
      %v1348 = vadd.f32 0.0, %v1347
      %1349 = vdwg.mxu0
      %v1350 = vadd.f32 %v1171, %v1345
      %v1351 = vadd.f32 %v1172, %v1348
      %1352 = vset.pattern.permute.xlu0 6
      %1353 = vperm.xlu0 %1352, %v264
      %v1354 = vpop.permute.xlu0 %1353
      %1356 = vset.pattern.permute.xlu0 6
      %1357 = vperm.xlu0 %1356, %v265
      %v1358 = vpop.permute.xlu0 %1357
      %v1360 = vmul.f32 %v1350, %v1354
      %v1361 = vmul.f32 %v1351, %v1358
      %1362 = vset.pattern.permute.xlu0 7
      %1363 = vperm.xlu0 %1362, %v264
      %v1364 = vpop.permute.xlu0 %1363
      %1366 = vset.pattern.permute.xlu0 7
      %1367 = vperm.xlu0 %1366, %v265
      %v1368 = vpop.permute.xlu0 %1367
      %v1370 = vadd.f32 %v1360, %v1364
      %v1371 = vadd.f32 %v1361, %v1368
      %1373 = vrot.lane.b32.xlu0 %v334, 115
      %v1374 = vpop.permute.xlu0 %1373
      %1376 = vst.msk [vmem:[%s251] sm:$0xff] %vm335, %v1374
      %1377 = vst.msk [vmem:[%s251 + $0x8] sm:$0xff] %vm335, %v1370
      %1378 = vst.msk [vmem:[%s251 + $0x10] sm:$0xff] %vm335, %v1371
      %1379 = vrot.lane.b32.xlu0 %v334, 111
      %v1380 = vpop.permute.xlu0 %1379
      %vm1382 = vcmask 130112
      %1383 = vst.msk [vmem:[%s251] sm:$0xff] %vm1382, %v1380
      %1386 = vrot.lane.b32.xlu0 %v1370, 124
      %v1387 = vpop.permute.xlu0 %1386
      %1388 = vrot.lane.b32.xlu0 %v1371, 124
      %v1389 = vpop.permute.xlu0 %1388
      %1392 = vst.msk [vmem:[%s251 + $0x8] sm:$0xff] %vm1382, %v1387
      %1393 = vst.msk [vmem:[%s251 + $0x10] sm:$0xff] %vm1382, %v1389
      %1394 = vrot.lane.b32.xlu0 %v334, 107
      %v1395 = vpop.permute.xlu0 %1394
      %vm1397 = vcmask 195712
      %1398 = vst.msk [vmem:[%s251] sm:$0xff] %vm1397, %v1395
      %1399 = vrot.lane.b32.xlu0 %v1370, 120
      %v1400 = vpop.permute.xlu0 %1399
      %1401 = vrot.lane.b32.xlu0 %v1371, 120
      %v1402 = vpop.permute.xlu0 %1401
      %1405 = vst.msk [vmem:[%s251 + $0x8] sm:$0xff] %vm1397, %v1400
      %1406 = vst.msk [vmem:[%s251 + $0x10] sm:$0xff] %vm1397, %v1402
      %1407 = vrot.lane.b32.xlu0 %v334, 103
      %v1408 = vpop.permute.xlu0 %1407
      %vm1410 = vcmask 261312
      %1411 = vst.msk [vmem:[%s251] sm:$0xff] %vm1410, %v1408
      %1412 = vrot.lane.b32.xlu0 %v1370, 116
      %v1413 = vpop.permute.xlu0 %1412
      %1414 = vrot.lane.b32.xlu0 %v1371, 116
      %v1415 = vpop.permute.xlu0 %1414
      %1418 = vst.msk [vmem:[%s251 + $0x8] sm:$0xff] %vm1410, %v1413
      %1419 = vst.msk [vmem:[%s251 + $0x10] sm:$0xff] %vm1410, %v1415
      %1420 = vrot.lane.b32.xlu0 %v334, 99
      %v1421 = vpop.permute.xlu0 %1420
      %vm1423 = vcmask 326912
      %1424 = vst.msk [vmem:[%s251] sm:$0xff] %vm1423, %v1421
      %1425 = vrot.lane.b32.xlu0 %v1370, 112
      %v1426 = vpop.permute.xlu0 %1425
      %1427 = vrot.lane.b32.xlu0 %v1371, 112
      %v1428 = vpop.permute.xlu0 %1427
      %1431 = vst.msk [vmem:[%s251 + $0x8] sm:$0xff] %vm1423, %v1426
      %1432 = vst.msk [vmem:[%s251 + $0x10] sm:$0xff] %vm1423, %v1428
      %1433 = vrot.lane.b32.xlu0 %v334, 95
      %v1434 = vpop.permute.xlu0 %1433
      %vm1436 = vcmask 392512
      %1437 = vst.msk [vmem:[%s251] sm:$0xff] %vm1436, %v1434
      %1438 = vrot.lane.b32.xlu0 %v1370, 108
      %v1439 = vpop.permute.xlu0 %1438
      %1440 = vrot.lane.b32.xlu0 %v1371, 108
      %v1441 = vpop.permute.xlu0 %1440
      %1444 = vst.msk [vmem:[%s251 + $0x8] sm:$0xff] %vm1436, %v1439
      %1445 = vst.msk [vmem:[%s251 + $0x10] sm:$0xff] %vm1436, %v1441
      %1446 = vrot.lane.b32.xlu0 %v334, 91
      %v1447 = vpop.permute.xlu0 %1446
      %vm1449 = vcmask 458112
      %1450 = vst.msk [vmem:[%s251] sm:$0xff] %vm1449, %v1447
      %1451 = vrot.lane.b32.xlu0 %v1370, 104
      %v1452 = vpop.permute.xlu0 %1451
      %1453 = vrot.lane.b32.xlu0 %v1371, 104
      %v1454 = vpop.permute.xlu0 %1453
      %1457 = vst.msk [vmem:[%s251 + $0x8] sm:$0xff] %vm1449, %v1452
      %1458 = vst.msk [vmem:[%s251 + $0x10] sm:$0xff] %vm1449, %v1454
      %1459 = vrot.lane.b32.xlu0 %v334, 87
      %v1460 = vpop.permute.xlu0 %1459
      %vm1462 = vcmask 523712
      %1463 = vst.msk [vmem:[%s251] sm:$0xff] %vm1462, %v1460
      %1464 = vrot.lane.b32.xlu0 %v1370, 100
      %v1465 = vpop.permute.xlu0 %1464
      %1466 = vrot.lane.b32.xlu0 %v1371, 100
      %v1467 = vpop.permute.xlu0 %1466
      %1470 = vst.msk [vmem:[%s251 + $0x8] sm:$0xff] %vm1462, %v1465
      %1471 = vst.msk [vmem:[%s251 + $0x10] sm:$0xff] %vm1462, %v1467
      %p1472 = scmp.lt.s32.totalorder %s17, 1
      %s1473 = scalar_select %p1472, %s17, 1
      %s1474 = smul.addr %s1473, 3
      %s1475 = smul.addr %s1474, 8
      %s1476 = scalar_lea.vmem %s6, %s1475
      // Predicated region
      $region45: #{downsampler_forward.4} parent=43 // pred_check
        %p1477 = pneg %p166
      $region46: #{downsampler_forward.4} parent=43 // pred_check_branch
        %1479 = sbr.rel (%p1477) target = $region48
      $region47: #{downsampler_forward.4} parent=43 // pred_region
        _
      $region48: #{downsampler_forward.4} parent=43 // pred_fallthru
        _
    $region44: #{downsampler_forward.4} parent=5 // pred_fallthru
      _
    %p1480 = scmp.le.s32.totalorder 2, %s12
    // Predicated region
    $region49: #{downsampler_forward.4} parent=5 // pred_check
      %p1481 = pneg %p1480
    $region50: #{downsampler_forward.4} parent=5 // pred_check_branch
      %1483 = sbr.rel (%p1481) target = $region52
    $region51: #{downsampler_forward.4} parent=5 // pred_region
      %s1484 = ssub.s32 %s12, 2
      // Predicated region
      $region53: #{downsampler_forward.4} parent=51 // pred_check
        %p1485 = pneg %p172
      $region54: #{downsampler_forward.4} parent=51 // pred_check_branch
        %1487 = sbr.rel (%p1485) target = $region56
      $region55: #{downsampler_forward.4} parent=51 // pred_region
        %p1488 = scmp.lt.s32.totalorder %s18, 1
        %s1489 = scalar_select %p1488, %s18, 1
        %s1490 = smul.addr %s1489, 3
        %s1491 = smul.addr %s1490, 8
        %s1492 = scalar_lea.vmem %s6, %s1491
      $region56: #{downsampler_forward.4} parent=51 // pred_fallthru
        _
    $region52: #{downsampler_forward.4} parent=5 // pred_fallthru
      _
  $region6: #{downsampler_forward.4} parent=0 // loop_footer
    %s16 = sadd.s32 1, %s12
  $region7: #{downsampler_forward.4} parent=0 // loop_footer_branch
    %11 = sbr.rel target = $region3
  $region8: #{downsampler_forward.4} parent=0 // loop_exit
    _

// kernel: downsampler_forward.5
$region0: #{downsampler_forward.5}
  #allocation0 [shape = 'u32[]', space=smem, size = 0x4, offset = 0x4, fixed_abs, tag = 'smem constant byte address 0x4 - core index']
  #allocation1 [shape = 'u32[72,128]{1,0:T(1,128)}', space=vmem, size = 0x9000, scoped, tag = 'internal scratch']
  %s0 = inlined_call_operand.vmem [shape: f32[2,4,3,307], index: 0, kind: input, shape index: {}]
  %s1 = inlined_call_operand.vmem [shape: f32[2,3,256], index: 1, kind: output, shape index: {}]
  %s2 = sld [smem:[#allocation0]]
  $region37: #{downsampler_forward.5} parent=0
    _
  %s4 = ssub.s32 1, %s2
  %s5 = scalar_select 0, %s4, %s2
  loop: start=0, step=1, limit=4
  $region2: #{downsampler_forward.5} parent=0 // loop_pre_header
    _
  $region3: #{downsampler_forward.5} parent=0 // loop_header
    %s7 = sphi 0, %s11
    %p8 = scmp.ge.s32.totalorder %s7, 4
    %s17 = sphi 0, %s19
    %s20 = sphi 0, %s17
    %s21 = sphi 0, %s20
    %s37 = sphi 0, %s21
    %s43 = sphi 0, %s45
    %s46 = sphi 0, %s43
    %s47 = sphi 0, %s46
    %s63 = sphi 0, %s47
  $region4: #{downsampler_forward.5} parent=0 // loop_header_branch
    %10 = sbr.rel (%p8) target = $region8
  $region5: #{downsampler_forward.5} parent=0 // loop_body
    %s12 = ssub.s32 %s7, 1
    %s13 = ssub.s32 %s7, 2
    %s14 = sadd.s32 %s7, 1
    %s15 = ssub.s32 %s7, %s14
    %p16 = scmp.eq.s32.totalorder %s15, 0
    %s18 = sadd.s32 %s17, 1
    %s19 = scalar_select %p16, %s17, %s18
    %p22 = pneg %p16
    %p23 = scmp.eq.s32.totalorder %s7, 1
    %p24 = por %p22, %p23
    %p25 = scmp.ne.s32.totalorder %s17, %s20
    %p26 = scmp.eq.s32.totalorder %s7, 0
    %p27 = por %p25, %p26
    %p28 = scmp.ne.s32.totalorder %s17, %s20
    %p29 = scmp.eq.s32.totalorder %s12, 1
    %p30 = por %p28, %p29
    %p31 = scmp.ne.s32.totalorder %s20, %s21
    %p32 = scmp.eq.s32.totalorder %s12, 0
    %p33 = por %p31, %p32
    %p34 = scmp.ne.s32.totalorder %s20, %s21
    %p35 = scmp.eq.s32.totalorder %s13, 1
    %p36 = por %p34, %p35
    %p38 = scmp.ne.s32.totalorder %s21, %s37
    %p39 = scmp.eq.s32.totalorder %s13, 0
    %p40 = por %p38, %p39
    %s41 = ssub.s32 %s7, %s14
    %p42 = scmp.eq.s32.totalorder %s41, 0
    %s44 = sadd.s32 %s43, 1
    %s45 = scalar_select %p42, %s43, %s44
    %p48 = pneg %p42
    %p49 = scmp.eq.s32.totalorder %s7, 1
    %p50 = por %p48, %p49
    %p51 = scmp.ne.s32.totalorder %s43, %s46
    %p52 = scmp.eq.s32.totalorder %s7, 0
    %p53 = por %p51, %p52
    %p54 = scmp.ne.s32.totalorder %s43, %s46
    %p55 = scmp.eq.s32.totalorder %s12, 1
    %p56 = por %p54, %p55
    %p57 = scmp.ne.s32.totalorder %s46, %s47
    %p58 = scmp.eq.s32.totalorder %s12, 0
    %p59 = por %p57, %p58
    %p60 = scmp.ne.s32.totalorder %s46, %s47
    %p61 = scmp.eq.s32.totalorder %s13, 1
    %p62 = por %p60, %p61
    %p64 = scmp.ne.s32.totalorder %s47, %s63
    %p65 = scmp.eq.s32.totalorder %s13, 0
    %p66 = por %p64, %p65
    %p67 = scmp.le.s32.totalorder 1, %s7
    %p68 = scmp.lt.s32.totalorder %s7, 3
    %p69 = pnand %p67, %p68
    %p70 = pneg %p69
    // Predicated region
    $region9: #{downsampler_forward.5} parent=5 // pred_check
      _
    $region10: #{downsampler_forward.5} parent=5 // pred_check_branch
      %72 = sbr.rel (%p69) target = $region12
    $region11: #{downsampler_forward.5} parent=5 // pred_region
      %s73 = ssub.s32 %s7, 1
    $region12: #{downsampler_forward.5} parent=5 // pred_fallthru
      _
    %p74 = scmp.lt.s32.totalorder %s7, 2
    // Predicated region
    $region13: #{downsampler_forward.5} parent=5 // pred_check
      %p75 = pneg %p74
    $region14: #{downsampler_forward.5} parent=5 // pred_check_branch
      %77 = sbr.rel (%p75) target = $region16
    $region15: #{downsampler_forward.5} parent=5 // pred_region
      // Predicated region
      $region17: #{downsampler_forward.5} parent=15 // pred_check
        %p78 = pneg %p27
      $region18: #{downsampler_forward.5} parent=15 // pred_check_branch
        %80 = sbr.rel (%p78) target = $region20
      $region19: #{downsampler_forward.5} parent=15 // pred_region
        %p81 = scmp.lt.s32.totalorder %s7, 1
        %s82 = scalar_select %p81, %s7, 1
        %s83 = smul.addr %s82, 12
        %s84 = smul.addr %s83, 4
        %s85 = scalar_lea.vmem %s0, %s84
      $region20: #{downsampler_forward.5} parent=15 // pred_fallthru
        _
    $region16: #{downsampler_forward.5} parent=5 // pred_fallthru
      _
    %p86 = scmp.le.s32.totalorder 1, %s7
    %p87 = scmp.lt.s32.totalorder %s7, 3
    %p88 = pnand %p86, %p87
    %p89 = pneg %p88
    // Predicated region
    $region21: #{downsampler_forward.5} parent=5 // pred_check
      _
    $region22: #{downsampler_forward.5} parent=5 // pred_check_branch
      %91 = sbr.rel (%p88) target = $region24
    $region23: #{downsampler_forward.5} parent=5 // pred_region
      %s92 = ssub.s32 %s7, 1
      %p93 = scmp.lt.s32.totalorder %s12, 1
      %s94 = scalar_select %p93, %s12, 1
      %s95 = smul.addr %s94, 12
      %s96 = smul.addr %s95, 4
      %s97 = scalar_lea.vmem %s0, %s96
      %p98 = pneg %p33
      %p99 = pneg %p30
      %p100 = pneg %p59
      %p101 = pneg %p56
      %p102 = scmp.lt.s32.totalorder %s12, 1
      %s103 = scalar_select %p102, %s12, 1
      %s104 = smul.addr %s103, 2
      %s105 = smul.addr %s104, 4
      %s106 = scalar_lea.vmem %s1, %s105
      %p107 = scmp.lt.s32.totalorder %s12, 1
      %s108 = scalar_select %p107, %s12, 1
      %s109 = smul.addr %s108, 12
      %s110 = smul.addr %s109, 4
      %s111 = scalar_lea.vmem %s0, %s110
      %p112 = scmp.lt.s32.totalorder %s12, 1
      %s113 = scalar_select %p112, %s12, 1
      %s114 = smul.addr %s113, 2
      %s115 = smul.addr %s114, 4
      %s116 = scalar_lea.vmem %s1, %s115
      %v117 = vld [vmem:[%s111] sm:$0x77]
      %v118 = vld [vmem:[%s111 + $0x8] sm:$0x7]
      %v119 = vld [vmem:[%s111 + $0xc] sm:$0x77]
      %v120 = vld [vmem:[%s111 + $0x14] sm:$0x7]
      %v121 = vld [vmem:[%s111 + $0x18] sm:$0x77]
      %v122 = vld [vmem:[%s111 + $0x20] sm:$0x7]
      %v123 = vld [vmem:[%s111 + $0x24] sm:$0x77]
      %v124 = vld [vmem:[%s111 + $0x2c] sm:$0x7]
      %v125 = vadd.f32 %v117, %v119
      %v126 = vadd.f32 %v118, %v120
      %129 = vrot.lane.b32.xlu0 %v117, 127
      %v130 = vpop.permute.xlu0 %129
      %131 = vrot.lane.b32.xlu0 %v118, 127
      %v132 = vpop.permute.xlu0 %131
      %v133 = vrot.slane %v130, 4
      %v134 = vrot.slane %v132, 4
      %vm135 = vcmask 1043456
      %v136 = vsel %vm135, %v133, %v134
      %vm137 = vcmask 1039360
      %v138 = vsel %vm137, %v130, %v136
      %v141 = vadd.f32 %v125, %v138
      %v142 = vadd.f32 %v126, %v132
      %v143 = vadd.f32 %v141, %v121
      %v144 = vadd.f32 %v142, %v122
      %v145 = vadd.f32 %v143, %v123
      %v146 = vadd.f32 %v144, %v124
      %149 = vrot.lane.b32.xlu0 %v121, 127
      %v150 = vpop.permute.xlu0 %149
      %151 = vrot.lane.b32.xlu0 %v122, 127
      %v152 = vpop.permute.xlu0 %151
      %v153 = vrot.slane %v150, 4
      %v154 = vrot.slane %v152, 4
      %v155 = vsel %vm135, %v153, %v154
      %v156 = vsel %vm137, %v150, %v155
      %v159 = vadd.f32 %v145, %v156
      %v160 = vadd.f32 %v146, %v152
      %161 = vrot.lane.b32.xlu0 %v117, 111
      %v162 = vpop.permute.xlu0 %161
      %163 = vrot.lane.b32.xlu0 %v118, 111
      %v164 = vpop.permute.xlu0 %163
      %v165 = vrot.slane %v162, 4
      %v166 = vrot.slane %v164, 4
      %v167 = vsel %vm135, %v165, %v166
      %vm168 = vcmask 908288
      %v169 = vsel %vm168, %v162, %v167
      %v172 = vadd.f32 %v159, %v169
      %v173 = vadd.f32 %v160, %v164
      %176 = vrot.lane.b32.xlu0 %v119, 111
      %v177 = vpop.permute.xlu0 %176
      %178 = vrot.lane.b32.xlu0 %v120, 111
      %v179 = vpop.permute.xlu0 %178
      %v180 = vrot.slane %v177, 4
      %v181 = vrot.slane %v179, 4
      %v182 = vsel %vm135, %v180, %v181
      %v183 = vsel %vm168, %v177, %v182
      %v186 = vadd.f32 %v172, %v183
      %v187 = vadd.f32 %v173, %v179
      %188 = vrot.lane.b32.xlu0 %v117, 110
      %v189 = vpop.permute.xlu0 %188
      %190 = vrot.lane.b32.xlu0 %v118, 110
      %v191 = vpop.permute.xlu0 %190
      %v192 = vrot.slane %v189, 4
      %v193 = vrot.slane %v191, 4
      %v194 = vsel %vm135, %v192, %v193
      %vm195 = vcmask 900096
      %v196 = vsel %vm195, %v189, %v194
      %v199 = vadd.f32 %v186, %v196
      %v200 = vadd.f32 %v187, %v191
      %v201 = vmul.f32 %v199, 0.11111111
      %v202 = vmul.f32 %v200, 0.11111111
      %vm203 = vcmask 124928
      %204 = vst.msk [vmem:[%s116] sm:$0x7] %vm203, %v201
      %206 = vrot.lane.b32.xlu0 %v201, 127
      %v207 = vpop.permute.xlu0 %206
      %vm209 = vcmask 256128
      %210 = vst.msk [vmem:[%s116] sm:$0x7] %vm209, %v207
      %211 = vrot.lane.b32.xlu0 %v201, 126
      %v212 = vpop.permute.xlu0 %211
      %vm214 = vcmask 387328
      %215 = vst.msk [vmem:[%s116] sm:$0x7] %vm214, %v212
      %216 = vrot.lane.b32.xlu0 %v201, 125
      %v217 = vpop.permute.xlu0 %216
      %vm219 = vcmask 518528
      %220 = vst.msk [vmem:[%s116] sm:$0x7] %vm219, %v217
      %221 = vrot.lane.b32.xlu0 %v201, 124
      %v222 = vpop.permute.xlu0 %221
      %vm224 = vcmask 649728
      %225 = vst.msk [vmem:[%s116] sm:$0x7] %vm224, %v222
      %226 = vrot.lane.b32.xlu0 %v201, 123
      %v227 = vpop.permute.xlu0 %226
      %vm229 = vcmask 780928
      %230 = vst.msk [vmem:[%s116] sm:$0x7] %vm229, %v227
      %231 = vrot.lane.b32.xlu0 %v201, 122
      %v232 = vpop.permute.xlu0 %231
      %vm234 = vcmask 912128
      %235 = vst.msk [vmem:[%s116] sm:$0x7] %vm234, %v232
      %236 = vrot.lane.b32.xlu0 %v201, 121
      %v237 = vpop.permute.xlu0 %236
      %v238 = vrot.slane %v237, 4
      %vm239 = vcmask 990208
      %v240 = vsel %vm239, %v237, %v238
      %vm242 = vcmask 1043328
      %243 = vst.msk [vmem:[%s116] sm:$0x7] %vm242, %v240
      %244 = vrot.lane.b32.xlu0 %v201, 120
      %v245 = vpop.permute.xlu0 %244
      %v246 = vrot.slane %v245, 4
      %248 = vst.msk [vmem:[%s116 + $0x4] sm:$0x7] %vm203, %v246
      %249 = vrot.lane.b32.xlu0 %v201, 103
      %v250 = vpop.permute.xlu0 %249
      %v251 = vrot.slane %v250, 4
      %252 = vrot.lane.b32.xlu0 %v251, 16
      %v253 = vpop.permute.xlu0 %252
      %255 = vst.msk [vmem:[%s116 + $0x4] sm:$0x7] %vm209, %v253
      %256 = vrot.lane.b32.xlu0 %v201, 86
      %v257 = vpop.permute.xlu0 %256
      %v258 = vrot.slane %v257, 4
      %259 = vrot.lane.b32.xlu0 %v258, 32
      %v260 = vpop.permute.xlu0 %259
      %262 = vst.msk [vmem:[%s116 + $0x4] sm:$0x7] %vm214, %v260
      %263 = vrot.lane.b32.xlu0 %v201, 69
      %v264 = vpop.permute.xlu0 %263
      %v265 = vrot.slane %v264, 4
      %266 = vrot.lane.b32.xlu0 %v265, 48
      %v267 = vpop.permute.xlu0 %266
      %269 = vst.msk [vmem:[%s116 + $0x4] sm:$0x7] %vm219, %v267
      %270 = vrot.lane.b32.xlu0 %v201, 52
      %v271 = vpop.permute.xlu0 %270
      %v272 = vrot.slane %v271, 4
      %273 = vrot.lane.b32.xlu0 %v272, 64
      %v274 = vpop.permute.xlu0 %273
      %276 = vst.msk [vmem:[%s116 + $0x4] sm:$0x7] %vm224, %v274
      %277 = vrot.lane.b32.xlu0 %v201, 35
      %v278 = vpop.permute.xlu0 %277
      %v279 = vrot.slane %v278, 4
      %280 = vrot.lane.b32.xlu0 %v279, 80
      %v281 = vpop.permute.xlu0 %280
      %283 = vst.msk [vmem:[%s116 + $0x4] sm:$0x7] %vm229, %v281
      %284 = vrot.lane.b32.xlu0 %v201, 18
      %v285 = vpop.permute.xlu0 %284
      %v286 = vrot.slane %v285, 4
      %287 = vrot.lane.b32.xlu0 %v286, 96
      %v288 = vpop.permute.xlu0 %287
      %290 = vst.msk [vmem:[%s116 + $0x4] sm:$0x7] %vm234, %v288
      %292 = vrot.lane.b32.xlu0 %v201, 1
      %v293 = vpop.permute.xlu0 %292
      %294 = vrot.lane.b32.xlu0 %v202, 1
      %v295 = vpop.permute.xlu0 %294
      %v296 = vrot.slane %v293, 4
      %vm297 = vcmask 7168
      %v298 = vsel %vm297, %v296, %v295
      %299 = vrot.lane.b32.xlu0 %v298, 112
      %v300 = vpop.permute.xlu0 %299
      %302 = vst.msk [vmem:[%s116 + $0x4] sm:$0x7] %vm242, %v300
      %p303 = scmp.lt.s32.totalorder %s12, 1
      %s304 = scalar_select %p303, %s12, 1
      %s305 = smul.addr %s304, 2
      %s306 = smul.addr %s305, 4
      %s307 = scalar_lea.vmem %s1, %s306
      // Predicated region
      $region25: #{downsampler_forward.5} parent=23 // pred_check
        %p308 = pneg %p56
      $region26: #{downsampler_forward.5} parent=23 // pred_check_branch
        %310 = sbr.rel (%p308) target = $region28
      $region27: #{downsampler_forward.5} parent=23 // pred_region
        _
      $region28: #{downsampler_forward.5} parent=23 // pred_fallthru
        _
    $region24: #{downsampler_forward.5} parent=5 // pred_fallthru
      _
    %p311 = scmp.le.s32.totalorder 2, %s7
    // Predicated region
    $region29: #{downsampler_forward.5} parent=5 // pred_check
      %p312 = pneg %p311
    $region30: #{downsampler_forward.5} parent=5 // pred_check_branch
      %314 = sbr.rel (%p312) target = $region32
    $region31: #{downsampler_forward.5} parent=5 // pred_region
      %s315 = ssub.s32 %s7, 2
      // Predicated region
      $region33: #{downsampler_forward.5} parent=31 // pred_check
        %p316 = pneg %p62
      $region34: #{downsampler_forward.5} parent=31 // pred_check_branch
        %318 = sbr.rel (%p316) target = $region36
      $region35: #{downsampler_forward.5} parent=31 // pred_region
        %p319 = scmp.lt.s32.totalorder %s13, 1
        %s320 = scalar_select %p319, %s13, 1
        %s321 = smul.addr %s320, 2
        %s322 = smul.addr %s321, 4
        %s323 = scalar_lea.vmem %s1, %s322
      $region36: #{downsampler_forward.5} parent=31 // pred_fallthru
        _
    $region32: #{downsampler_forward.5} parent=5 // pred_fallthru
      _
  $region6: #{downsampler_forward.5} parent=0 // loop_footer
    %s11 = sadd.s32 1, %s7
  $region7: #{downsampler_forward.5} parent=0 // loop_footer_branch
    %6 = sbr.rel target = $region3
  $region8: #{downsampler_forward.5} parent=0 // loop_exit
    _

// kernel: downsampler_forward.6
$region0: #{downsampler_forward.6}
  #allocation0 [shape = 'u32[]', space=smem, size = 0x4, offset = 0x4, fixed_abs, tag = 'smem constant byte address 0x4 - core index']
  #allocation1 [shape = 'u32[72,128]{1,0:T(1,128)}', space=vmem, size = 0x9000, scoped, tag = 'internal scratch']
  %s0 = inlined_call_operand.vmem [shape: f32[2,4,3,91], index: 0, kind: input, shape index: {}]
  %s1 = inlined_call_operand.vmem [shape: f32[2,3,100], index: 1, kind: output, shape index: {}]
  %s2 = sld [smem:[#allocation0]]
  $region37: #{downsampler_forward.6} parent=0
    _
  %s4 = ssub.s32 1, %s2
  %s5 = scalar_select 0, %s4, %s2
  loop: start=0, step=1, limit=4
  $region2: #{downsampler_forward.6} parent=0 // loop_pre_header
    _
  $region3: #{downsampler_forward.6} parent=0 // loop_header
    %s7 = sphi 0, %s11
    %p8 = scmp.ge.s32.totalorder %s7, 4
    %s17 = sphi 0, %s19
    %s20 = sphi 0, %s17
    %s21 = sphi 0, %s20
    %s37 = sphi 0, %s21
    %s43 = sphi 0, %s45
    %s46 = sphi 0, %s43
    %s47 = sphi 0, %s46
    %s63 = sphi 0, %s47
  $region4: #{downsampler_forward.6} parent=0 // loop_header_branch
    %10 = sbr.rel (%p8) target = $region8
  $region5: #{downsampler_forward.6} parent=0 // loop_body
    %s12 = ssub.s32 %s7, 1
    %s13 = ssub.s32 %s7, 2
    %s14 = sadd.s32 %s7, 1
    %s15 = ssub.s32 %s7, %s14
    %p16 = scmp.eq.s32.totalorder %s15, 0
    %s18 = sadd.s32 %s17, 1
    %s19 = scalar_select %p16, %s17, %s18
    %p22 = pneg %p16
    %p23 = scmp.eq.s32.totalorder %s7, 1
    %p24 = por %p22, %p23
    %p25 = scmp.ne.s32.totalorder %s17, %s20
    %p26 = scmp.eq.s32.totalorder %s7, 0
    %p27 = por %p25, %p26
    %p28 = scmp.ne.s32.totalorder %s17, %s20
    %p29 = scmp.eq.s32.totalorder %s12, 1
    %p30 = por %p28, %p29
    %p31 = scmp.ne.s32.totalorder %s20, %s21
    %p32 = scmp.eq.s32.totalorder %s12, 0
    %p33 = por %p31, %p32
    %p34 = scmp.ne.s32.totalorder %s20, %s21
    %p35 = scmp.eq.s32.totalorder %s13, 1
    %p36 = por %p34, %p35
    %p38 = scmp.ne.s32.totalorder %s21, %s37
    %p39 = scmp.eq.s32.totalorder %s13, 0
    %p40 = por %p38, %p39
    %s41 = ssub.s32 %s7, %s14
    %p42 = scmp.eq.s32.totalorder %s41, 0
    %s44 = sadd.s32 %s43, 1
    %s45 = scalar_select %p42, %s43, %s44
    %p48 = pneg %p42
    %p49 = scmp.eq.s32.totalorder %s7, 1
    %p50 = por %p48, %p49
    %p51 = scmp.ne.s32.totalorder %s43, %s46
    %p52 = scmp.eq.s32.totalorder %s7, 0
    %p53 = por %p51, %p52
    %p54 = scmp.ne.s32.totalorder %s43, %s46
    %p55 = scmp.eq.s32.totalorder %s12, 1
    %p56 = por %p54, %p55
    %p57 = scmp.ne.s32.totalorder %s46, %s47
    %p58 = scmp.eq.s32.totalorder %s12, 0
    %p59 = por %p57, %p58
    %p60 = scmp.ne.s32.totalorder %s46, %s47
    %p61 = scmp.eq.s32.totalorder %s13, 1
    %p62 = por %p60, %p61
    %p64 = scmp.ne.s32.totalorder %s47, %s63
    %p65 = scmp.eq.s32.totalorder %s13, 0
    %p66 = por %p64, %p65
    %p67 = scmp.le.s32.totalorder 1, %s7
    %p68 = scmp.lt.s32.totalorder %s7, 3
    %p69 = pnand %p67, %p68
    %p70 = pneg %p69
    // Predicated region
    $region9: #{downsampler_forward.6} parent=5 // pred_check
      _
    $region10: #{downsampler_forward.6} parent=5 // pred_check_branch
      %72 = sbr.rel (%p69) target = $region12
    $region11: #{downsampler_forward.6} parent=5 // pred_region
      %s73 = ssub.s32 %s7, 1
    $region12: #{downsampler_forward.6} parent=5 // pred_fallthru
      _
    %p74 = scmp.lt.s32.totalorder %s7, 2
    // Predicated region
    $region13: #{downsampler_forward.6} parent=5 // pred_check
      %p75 = pneg %p74
    $region14: #{downsampler_forward.6} parent=5 // pred_check_branch
      %77 = sbr.rel (%p75) target = $region16
    $region15: #{downsampler_forward.6} parent=5 // pred_region
      // Predicated region
      $region17: #{downsampler_forward.6} parent=15 // pred_check
        %p78 = pneg %p27
      $region18: #{downsampler_forward.6} parent=15 // pred_check_branch
        %80 = sbr.rel (%p78) target = $region20
      $region19: #{downsampler_forward.6} parent=15 // pred_region
        %p81 = scmp.lt.s32.totalorder %s7, 1
        %s82 = scalar_select %p81, %s7, 1
        %s83 = smul.addr %s82, 4
        %s84 = smul.addr %s83, 4
        %s85 = scalar_lea.vmem %s0, %s84
      $region20: #{downsampler_forward.6} parent=15 // pred_fallthru
        _
    $region16: #{downsampler_forward.6} parent=5 // pred_fallthru
      _
    %p86 = scmp.le.s32.totalorder 1, %s7
    %p87 = scmp.lt.s32.totalorder %s7, 3
    %p88 = pnand %p86, %p87
    %p89 = pneg %p88
    // Predicated region
    $region21: #{downsampler_forward.6} parent=5 // pred_check
      _
    $region22: #{downsampler_forward.6} parent=5 // pred_check_branch
      %91 = sbr.rel (%p88) target = $region24
    $region23: #{downsampler_forward.6} parent=5 // pred_region
      %s92 = ssub.s32 %s7, 1
      %p93 = scmp.lt.s32.totalorder %s12, 1
      %s94 = scalar_select %p93, %s12, 1
      %s95 = smul.addr %s94, 4
      %s96 = smul.addr %s95, 4
      %s97 = scalar_lea.vmem %s0, %s96
      %p98 = pneg %p33
      %p99 = pneg %p30
      %p100 = pneg %p59
      %p101 = pneg %p56
      %p102 = scmp.lt.s32.totalorder %s12, 1
      %s103 = scalar_select %p102, %s12, 1
      %s104 = smul.addr %s103, 4
      %s105 = scalar_lea.vmem %s1, %s104
      %p106 = scmp.lt.s32.totalorder %s12, 1
      %s107 = scalar_select %p106, %s12, 1
      %s108 = smul.addr %s107, 4
      %s109 = smul.addr %s108, 4
      %s110 = scalar_lea.vmem %s0, %s109
      %p111 = scmp.lt.s32.totalorder %s12, 1
      %s112 = scalar_select %p111, %s12, 1
      %s113 = smul.addr %s112, 4
      %s114 = scalar_lea.vmem %s1, %s113
      %v115 = vld [vmem:[%s110] sm:$0x7]
      %v116 = vld [vmem:[%s110 + $0x4] sm:$0x7]
      %v117 = vld [vmem:[%s110 + $0x8] sm:$0x7]
      %v118 = vld [vmem:[%s110 + $0xc] sm:$0x7]
      %v119 = vadd.f32 %v115, %v116
      %121 = vrot.lane.b32.xlu0 %v115, 127
      %v122 = vpop.permute.xlu0 %121
      %v124 = vadd.f32 %v119, %v122
      %v125 = vadd.f32 %v124, %v117
      %v126 = vadd.f32 %v125, %v118
      %128 = vrot.lane.b32.xlu0 %v117, 127
      %v129 = vpop.permute.xlu0 %128
      %v131 = vadd.f32 %v126, %v129
      %132 = vrot.lane.b32.xlu0 %v115, 119
      %v133 = vpop.permute.xlu0 %132
      %v135 = vadd.f32 %v131, %v133
      %137 = vrot.lane.b32.xlu0 %v116, 119
      %v138 = vpop.permute.xlu0 %137
      %v140 = vadd.f32 %v135, %v138
      %141 = vrot.lane.b32.xlu0 %v115, 118
      %v142 = vpop.permute.xlu0 %141
      %v144 = vadd.f32 %v140, %v142
      %v145 = vmul.f32 %v144, 0.11111111
      %vm146 = vcmask 813056
      %147 = vst.msk [vmem:[%s114] sm:$0x7] %vm146, 0.0
      %149 = vrot.lane.b32.xlu0 %v145, 11
      %v150 = vpop.permute.xlu0 %149
      %vm152 = vcmask 149592
      %153 = vst.msk [vmem:[%s114] sm:$0x7] %vm152, %v150
      %154 = vrot.lane.b32.xlu0 %v145, 12
      %v155 = vpop.permute.xlu0 %154
      %vm157 = vcmask 231592
      %158 = vst.msk [vmem:[%s114] sm:$0x7] %vm157, %v155
      %159 = vrot.lane.b32.xlu0 %v145, 13
      %v160 = vpop.permute.xlu0 %159
      %vm162 = vcmask 313592
      %163 = vst.msk [vmem:[%s114] sm:$0x7] %vm162, %v160
      %164 = vrot.lane.b32.xlu0 %v145, 14
      %v165 = vpop.permute.xlu0 %164
      %vm167 = vcmask 395592
      %168 = vst.msk [vmem:[%s114] sm:$0x7] %vm167, %v165
      %169 = vrot.lane.b32.xlu0 %v145, 15
      %v170 = vpop.permute.xlu0 %169
      %vm172 = vcmask 477592
      %173 = vst.msk [vmem:[%s114] sm:$0x7] %vm172, %v170
      %174 = vrot.lane.b32.xlu0 %v145, 16
      %v175 = vpop.permute.xlu0 %174
      %vm177 = vcmask 559592
      %178 = vst.msk [vmem:[%s114] sm:$0x7] %vm177, %v175
      %179 = vrot.lane.b32.xlu0 %v145, 17
      %v180 = vpop.permute.xlu0 %179
      %vm182 = vcmask 641592
      %183 = vst.msk [vmem:[%s114] sm:$0x7] %vm182, %v180
      %184 = vrot.lane.b32.xlu0 %v145, 18
      %v185 = vpop.permute.xlu0 %184
      %vm187 = vcmask 723592
      %188 = vst.msk [vmem:[%s114] sm:$0x7] %vm187, %v185
      %p189 = scmp.lt.s32.totalorder %s12, 1
      %s190 = scalar_select %p189, %s12, 1
      %s191 = smul.addr %s190, 4
      %s192 = scalar_lea.vmem %s1, %s191
      // Predicated region
      $region25: #{downsampler_forward.6} parent=23 // pred_check
        %p193 = pneg %p56
      $region26: #{downsampler_forward.6} parent=23 // pred_check_branch
        %195 = sbr.rel (%p193) target = $region28
      $region27: #{downsampler_forward.6} parent=23 // pred_region
        _
      $region28: #{downsampler_forward.6} parent=23 // pred_fallthru
        _
    $region24: #{downsampler_forward.6} parent=5 // pred_fallthru
      _
    %p196 = scmp.le.s32.totalorder 2, %s7
    // Predicated region
    $region29: #{downsampler_forward.6} parent=5 // pred_check
      %p197 = pneg %p196
    $region30: #{downsampler_forward.6} parent=5 // pred_check_branch
      %199 = sbr.rel (%p197) target = $region32
    $region31: #{downsampler_forward.6} parent=5 // pred_region
      %s200 = ssub.s32 %s7, 2
      // Predicated region
      $region33: #{downsampler_forward.6} parent=31 // pred_check
        %p201 = pneg %p62
      $region34: #{downsampler_forward.6} parent=31 // pred_check_branch
        %203 = sbr.rel (%p201) target = $region36
      $region35: #{downsampler_forward.6} parent=31 // pred_region
        %p204 = scmp.lt.s32.totalorder %s13, 1
        %s205 = scalar_select %p204, %s13, 1
        %s206 = smul.addr %s205, 4
        %s207 = scalar_lea.vmem %s1, %s206
      $region36: #{downsampler_forward.6} parent=31 // pred_fallthru
        _
    $region32: #{downsampler_forward.6} parent=5 // pred_fallthru
      _
  $region6: #{downsampler_forward.6} parent=0 // loop_footer
    %s11 = sadd.s32 1, %s7
  $region7: #{downsampler_forward.6} parent=0 // loop_footer_branch
    %6 = sbr.rel target = $region3
  $region8: #{downsampler_forward.6} parent=0 // loop_exit
    _

// kernel: downsampler_forward.7
$region0: #{downsampler_forward.7}
  #allocation0 [shape = 'u32[]', space=smem, size = 0x4, offset = 0x4, fixed_abs, tag = 'smem constant byte address 0x4 - core index']
  #allocation1 [shape = 'u32[72,128]{1,0:T(1,128)}', space=vmem, size = 0x9000, scoped, tag = 'internal scratch']
  %s0 = inlined_call_operand.vmem [shape: f32[2,24,64], index: 0, kind: input, shape index: {}]
  %s1 = inlined_call_operand.vmem [shape: f32[2,3,100], index: 1, kind: input, shape index: {}]
  %s2 = inlined_call_operand.vmem [shape: f32[3,27], index: 2, kind: input, shape index: {}]
  %s3 = inlined_call_operand.vmem [shape: f32[24,3], index: 3, kind: input, shape index: {}]
  %s4 = inlined_call_operand.vmem [shape: f32[24,6], index: 4, kind: input, shape index: {}]
  %s5 = inlined_call_operand.vmem [shape: f32[2,24,64], index: 5, kind: output, shape index: {}]
  %s6 = sld [smem:[#allocation0]]
  $region53: #{downsampler_forward.7} parent=0
    _
  %s8 = ssub.s32 1, %s6
  %s9 = scalar_select 0, %s8, %s6
  loop: start=0, step=1, limit=4
  $region2: #{downsampler_forward.7} parent=0 // loop_pre_header
    _
  $region3: #{downsampler_forward.7} parent=0 // loop_header
    %s11 = sphi 0, %s15
    %p12 = scmp.ge.s32.totalorder %s11, 4
    %s21 = sphi 0, %s23
    %s24 = sphi 0, %s21
    %s25 = sphi 0, %s24
    %s41 = sphi 0, %s25
    %s47 = sphi 0, %s49
    %s50 = sphi 0, %s47
    %s51 = sphi 0, %s50
    %s67 = sphi 0, %s51
    %s71 = sphi 0, %s71
    %s73 = sphi 0, %s71
    %s74 = sphi 0, %s73
    %s88 = sphi 0, %s74
    %s92 = sphi 0, %s92
    %s94 = sphi 0, %s92
    %s95 = sphi 0, %s94
    %s109 = sphi 0, %s95
    %s113 = sphi 0, %s113
    %s115 = sphi 0, %s113
    %s116 = sphi 0, %s115
    %s130 = sphi 0, %s116
    %s136 = sphi 0, %s138
    %s139 = sphi 0, %s136
    %s140 = sphi 0, %s139
    %s156 = sphi 0, %s140
  $region4: #{downsampler_forward.7} parent=0 // loop_header_branch
    %14 = sbr.rel (%p12) target = $region8
  $region5: #{downsampler_forward.7} parent=0 // loop_body
    %s16 = ssub.s32 %s11, 1
    %s17 = ssub.s32 %s11, 2
    %s18 = sadd.s32 %s11, 1
    %s19 = ssub.s32 %s11, %s18
    %p20 = scmp.eq.s32.totalorder %s19, 0
    %s22 = sadd.s32 %s21, 1
    %s23 = scalar_select %p20, %s21, %s22
    %p26 = pneg %p20
    %p27 = scmp.eq.s32.totalorder %s11, 1
    %p28 = por %p26, %p27
    %p29 = scmp.ne.s32.totalorder %s21, %s24
    %p30 = scmp.eq.s32.totalorder %s11, 0
    %p31 = por %p29, %p30
    %p32 = scmp.ne.s32.totalorder %s21, %s24
    %p33 = scmp.eq.s32.totalorder %s16, 1
    %p34 = por %p32, %p33
    %p35 = scmp.ne.s32.totalorder %s24, %s25
    %p36 = scmp.eq.s32.totalorder %s16, 0
    %p37 = por %p35, %p36
    %p38 = scmp.ne.s32.totalorder %s24, %s25
    %p39 = scmp.eq.s32.totalorder %s17, 1
    %p40 = por %p38, %p39
    %p42 = scmp.ne.s32.totalorder %s25, %s41
    %p43 = scmp.eq.s32.totalorder %s17, 0
    %p44 = por %p42, %p43
    %s45 = ssub.s32 %s11, %s18
    %p46 = scmp.eq.s32.totalorder %s45, 0
    %s48 = sadd.s32 %s47, 1
    %s49 = scalar_select %p46, %s47, %s48
    %p52 = pneg %p46
    %p53 = scmp.eq.s32.totalorder %s11, 1
    %p54 = por %p52, %p53
    %p55 = scmp.ne.s32.totalorder %s47, %s50
    %p56 = scmp.eq.s32.totalorder %s11, 0
    %p57 = por %p55, %p56
    %p58 = scmp.ne.s32.totalorder %s47, %s50
    %p59 = scmp.eq.s32.totalorder %s16, 1
    %p60 = por %p58, %p59
    %p61 = scmp.ne.s32.totalorder %s50, %s51
    %p62 = scmp.eq.s32.totalorder %s16, 0
    %p63 = por %p61, %p62
    %p64 = scmp.ne.s32.totalorder %s50, %s51
    %p65 = scmp.eq.s32.totalorder %s17, 1
    %p66 = por %p64, %p65
    %p68 = scmp.ne.s32.totalorder %s51, %s67
    %p69 = scmp.eq.s32.totalorder %s17, 0
    %p70 = por %p68, %p69
    %s72 = sadd.s32 %s71, 1
    %p75 = scmp.eq.s32.totalorder %s11, 1
    %p76 = scmp.ne.s32.totalorder %s71, %s73
    %p77 = scmp.eq.s32.totalorder %s11, 0
    %p78 = por %p76, %p77
    %p79 = scmp.ne.s32.totalorder %s71, %s73
    %p80 = scmp.eq.s32.totalorder %s16, 1
    %p81 = por %p79, %p80
    %p82 = scmp.ne.s32.totalorder %s73, %s74
    %p83 = scmp.eq.s32.totalorder %s16, 0
    %p84 = por %p82, %p83
    %p85 = scmp.ne.s32.totalorder %s73, %s74
    %p86 = scmp.eq.s32.totalorder %s17, 1
    %p87 = por %p85, %p86
    %p89 = scmp.ne.s32.totalorder %s74, %s88
    %p90 = scmp.eq.s32.totalorder %s17, 0
    %p91 = por %p89, %p90
    %s93 = sadd.s32 %s92, 1
    %p96 = scmp.eq.s32.totalorder %s11, 1
    %p97 = scmp.ne.s32.totalorder %s92, %s94
    %p98 = scmp.eq.s32.totalorder %s11, 0
    %p99 = por %p97, %p98
    %p100 = scmp.ne.s32.totalorder %s92, %s94
    %p101 = scmp.eq.s32.totalorder %s16, 1
    %p102 = por %p100, %p101
    %p103 = scmp.ne.s32.totalorder %s94, %s95
    %p104 = scmp.eq.s32.totalorder %s16, 0
    %p105 = por %p103, %p104
    %p106 = scmp.ne.s32.totalorder %s94, %s95
    %p107 = scmp.eq.s32.totalorder %s17, 1
    %p108 = por %p106, %p107
    %p110 = scmp.ne.s32.totalorder %s95, %s109
    %p111 = scmp.eq.s32.totalorder %s17, 0
    %p112 = por %p110, %p111
    %s114 = sadd.s32 %s113, 1
    %p117 = scmp.eq.s32.totalorder %s11, 1
    %p118 = scmp.ne.s32.totalorder %s113, %s115
    %p119 = scmp.eq.s32.totalorder %s11, 0
    %p120 = por %p118, %p119
    %p121 = scmp.ne.s32.totalorder %s113, %s115
    %p122 = scmp.eq.s32.totalorder %s16, 1
    %p123 = por %p121, %p122
    %p124 = scmp.ne.s32.totalorder %s115, %s116
    %p125 = scmp.eq.s32.totalorder %s16, 0
    %p126 = por %p124, %p125
    %p127 = scmp.ne.s32.totalorder %s115, %s116
    %p128 = scmp.eq.s32.totalorder %s17, 1
    %p129 = por %p127, %p128
    %p131 = scmp.ne.s32.totalorder %s116, %s130
    %p132 = scmp.eq.s32.totalorder %s17, 0
    %p133 = por %p131, %p132
    %s134 = ssub.s32 %s11, %s18
    %p135 = scmp.eq.s32.totalorder %s134, 0
    %s137 = sadd.s32 %s136, 1
    %s138 = scalar_select %p135, %s136, %s137
    %p141 = pneg %p135
    %p142 = scmp.eq.s32.totalorder %s11, 1
    %p143 = por %p141, %p142
    %p144 = scmp.ne.s32.totalorder %s136, %s139
    %p145 = scmp.eq.s32.totalorder %s11, 0
    %p146 = por %p144, %p145
    %p147 = scmp.ne.s32.totalorder %s136, %s139
    %p148 = scmp.eq.s32.totalorder %s16, 1
    %p149 = por %p147, %p148
    %p150 = scmp.ne.s32.totalorder %s139, %s140
    %p151 = scmp.eq.s32.totalorder %s16, 0
    %p152 = por %p150, %p151
    %p153 = scmp.ne.s32.totalorder %s139, %s140
    %p154 = scmp.eq.s32.totalorder %s17, 1
    %p155 = por %p153, %p154
    %p157 = scmp.ne.s32.totalorder %s140, %s156
    %p158 = scmp.eq.s32.totalorder %s17, 0
    %p159 = por %p157, %p158
    %p160 = scmp.le.s32.totalorder 1, %s11
    %p161 = scmp.lt.s32.totalorder %s11, 3
    %p162 = pnand %p160, %p161
    %p163 = pneg %p162
    // Predicated region
    $region9: #{downsampler_forward.7} parent=5 // pred_check
      _
    $region10: #{downsampler_forward.7} parent=5 // pred_check_branch
      %165 = sbr.rel (%p162) target = $region12
    $region11: #{downsampler_forward.7} parent=5 // pred_region
      %s166 = ssub.s32 %s11, 1
      // Predicated region
      $region13: #{downsampler_forward.7} parent=11 // pred_check
        %p167 = pneg %p84
      $region14: #{downsampler_forward.7} parent=11 // pred_check_branch
        %169 = sbr.rel (%p167) target = $region16
      $region15: #{downsampler_forward.7} parent=11 // pred_region
        _
      $region16: #{downsampler_forward.7} parent=11 // pred_fallthru
        _
      // Predicated region
      $region17: #{downsampler_forward.7} parent=11 // pred_check
        %p170 = pneg %p105
      $region18: #{downsampler_forward.7} parent=11 // pred_check_branch
        %172 = sbr.rel (%p170) target = $region20
      $region19: #{downsampler_forward.7} parent=11 // pred_region
        _
      $region20: #{downsampler_forward.7} parent=11 // pred_fallthru
        _
      // Predicated region
      $region21: #{downsampler_forward.7} parent=11 // pred_check
        %p173 = pneg %p126
      $region22: #{downsampler_forward.7} parent=11 // pred_check_branch
        %175 = sbr.rel (%p173) target = $region24
      $region23: #{downsampler_forward.7} parent=11 // pred_region
        _
      $region24: #{downsampler_forward.7} parent=11 // pred_fallthru
        _
    $region12: #{downsampler_forward.7} parent=5 // pred_fallthru
      _
    %p176 = scmp.lt.s32.totalorder %s11, 2
    // Predicated region
    $region25: #{downsampler_forward.7} parent=5 // pred_check
      %p177 = pneg %p176
    $region26: #{downsampler_forward.7} parent=5 // pred_check_branch
      %179 = sbr.rel (%p177) target = $region28
    $region27: #{downsampler_forward.7} parent=5 // pred_region
      // Predicated region
      $region29: #{downsampler_forward.7} parent=27 // pred_check
        %p180 = pneg %p31
      $region30: #{downsampler_forward.7} parent=27 // pred_check_branch
        %182 = sbr.rel (%p180) target = $region32
      $region31: #{downsampler_forward.7} parent=27 // pred_region
        %p183 = scmp.lt.s32.totalorder %s11, 1
        %s184 = scalar_select %p183, %s11, 1
        %s185 = smul.addr %s184, 3
        %s186 = smul.addr %s185, 8
        %s187 = scalar_lea.vmem %s0, %s186
      $region32: #{downsampler_forward.7} parent=27 // pred_fallthru
        _
      // Predicated region
      $region33: #{downsampler_forward.7} parent=27 // pred_check
        %p188 = pneg %p57
      $region34: #{downsampler_forward.7} parent=27 // pred_check_branch
        %190 = sbr.rel (%p188) target = $region36
      $region35: #{downsampler_forward.7} parent=27 // pred_region
        %p191 = scmp.lt.s32.totalorder %s11, 1
        %s192 = scalar_select %p191, %s11, 1
        %s193 = smul.addr %s192, 4
        %s194 = scalar_lea.vmem %s1, %s193
      $region36: #{downsampler_forward.7} parent=27 // pred_fallthru
        _
    $region28: #{downsampler_forward.7} parent=5 // pred_fallthru
      _
    %p195 = scmp.le.s32.totalorder 1, %s11
    %p196 = scmp.lt.s32.totalorder %s11, 3
    %p197 = pnand %p195, %p196
    %p198 = pneg %p197
    // Predicated region
    $region37: #{downsampler_forward.7} parent=5 // pred_check
      _
    $region38: #{downsampler_forward.7} parent=5 // pred_check_branch
      %200 = sbr.rel (%p197) target = $region40
    $region39: #{downsampler_forward.7} parent=5 // pred_region
      %s201 = ssub.s32 %s11, 1
      %p202 = scmp.lt.s32.totalorder %s16, 1
      %s203 = scalar_select %p202, %s16, 1
      %s204 = smul.addr %s203, 3
      %s205 = smul.addr %s204, 8
      %s206 = scalar_lea.vmem %s0, %s205
      %p207 = pneg %p37
      %p208 = pneg %p34
      %p209 = scmp.lt.s32.totalorder %s16, 1
      %s210 = scalar_select %p209, %s16, 1
      %s211 = smul.addr %s210, 4
      %s212 = scalar_lea.vmem %s1, %s211
      %p213 = pneg %p63
      %p214 = pneg %p60
      %p215 = pneg %p84
      %p216 = pneg %p81
      %p217 = pneg %p105
      %p218 = pneg %p102
      %p219 = pneg %p126
      %p220 = pneg %p123
      %p221 = pneg %p152
      %p222 = pneg %p149
      %p223 = scmp.lt.s32.totalorder %s16, 1
      %s224 = scalar_select %p223, %s16, 1
      %s225 = smul.addr %s224, 3
      %s226 = smul.addr %s225, 8
      %s227 = scalar_lea.vmem %s5, %s226
      %p228 = scmp.lt.s32.totalorder %s16, 1
      %s229 = scalar_select %p228, %s16, 1
      %s230 = smul.addr %s229, 3
      %s231 = smul.addr %s230, 8
      %s232 = scalar_lea.vmem %s0, %s231
      %p233 = scmp.lt.s32.totalorder %s16, 1
      %s234 = scalar_select %p233, %s16, 1
      %s235 = smul.addr %s234, 4
      %s236 = scalar_lea.vmem %s1, %s235
      %p237 = scmp.lt.s32.totalorder %s16, 1
      %s238 = scalar_select %p237, %s16, 1
      %s239 = smul.addr %s238, 3
      %s240 = smul.addr %s239, 8
      %s241 = scalar_lea.vmem %s5, %s240
      %v242 = vld [vmem:[%s232] sm:$0xff]
      %v243 = vld [vmem:[%s232 + $0x8] sm:$0xff]
      %v244 = vld [vmem:[%s232 + $0x10] sm:$0xff]
      %v245 = vld [vmem:[%s236] sm:$0x7]
      %v246 = vld [vmem:[%s2] sm:$0x7]
      %v247 = vld [vmem:[%s3] sm:$0xff]
      %v248 = vld [vmem:[%s3 + $0x8] sm:$0xff]
      %v249 = vld [vmem:[%s3 + $0x10] sm:$0xff]
      %v250 = vld [vmem:[%s4] sm:$0xff]
      %v251 = vld [vmem:[%s4 + $0x8] sm:$0xff]
      %v252 = vld [vmem:[%s4 + $0x10] sm:$0xff]
      %254 = vrot.lane.b32.xlu0 %v246, 125
      %v255 = vpop.permute.xlu0 %254
      %257 = vrot.lane.b32.xlu0 %v245, 127
      %v258 = vpop.permute.xlu0 %257
      %vm259 = vcmask 23552
      %v260 = vsel %vm259, %v255, 0
      %vm262 = vcmask 1042432
      %v263 = vsel %vm262, %v258, 0
      %265 = vmatpush.msra.mxu0 0.0
      %266 = vmatpush.msra.mxu0 0.0
      %267 = vmatpush.msra.mxu0 0.0
      %268 = vmatpush.msra.mxu0 0.0
      %269 = vmatpush.msra.mxu0 0.0
      %270 = vmatpush.msra.mxu0 0.0
      %271 = vmatpush.msra.mxu0 0.0
      %272 = vmatpush.msra.mxu0 0.0
      %273 = vmatpush.msra.mxu0 0.0
      %274 = vmatpush.msra.mxu0 0.0
      %275 = vmatpush.msra.mxu0 0.0
      %276 = vmatpush.msra.mxu0 0.0
      %277 = vmatpush.msra.mxu0 0.0
      %278 = vmatpush.msra.mxu0 0.0
      %279 = vmatpush.msra.mxu0 0.0
      %280 = vmatpush.msra.mxu0 %v263
      %281 = vmatmul.f32.gmra.mxu0 %v260
      %v282 = vpop.f32.mrf.mxu0
      %v283 = vadd.f32 0.0, %v282
      %284 = vdwg.mxu0
      %v285 = vsel %vm259, %v246, 0
      %v287 = vsel %vm262, %v245, 0
      %289 = vmatpush.msra.mxu0 0.0
      %290 = vmatpush.msra.mxu0 0.0
      %291 = vmatpush.msra.mxu0 0.0
      %292 = vmatpush.msra.mxu0 0.0
      %293 = vmatpush.msra.mxu0 0.0
      %294 = vmatpush.msra.mxu0 0.0
      %295 = vmatpush.msra.mxu0 0.0
      %296 = vmatpush.msra.mxu0 0.0
      %297 = vmatpush.msra.mxu0 0.0
      %298 = vmatpush.msra.mxu0 0.0
      %299 = vmatpush.msra.mxu0 0.0
      %300 = vmatpush.msra.mxu0 0.0
      %301 = vmatpush.msra.mxu0 0.0
      %302 = vmatpush.msra.mxu0 0.0
      %303 = vmatpush.msra.mxu0 0.0
      %304 = vmatpush.msra.mxu0 %v287
      %305 = vmatmul.f32.gmra.mxu0 %v285
      %v306 = vpop.f32.mrf.mxu0
      %v307 = vadd.f32 %v283, %v306
      %308 = vdwg.mxu0
      %309 = vrot.lane.b32.xlu0 %v246, 122
      %v310 = vpop.permute.xlu0 %309
      %311 = vrot.lane.b32.xlu0 %v245, 126
      %v312 = vpop.permute.xlu0 %311
      %v313 = vsel %vm259, %v310, 0
      %v315 = vsel %vm262, %v312, 0
      %317 = vmatpush.msra.mxu0 0.0
      %318 = vmatpush.msra.mxu0 0.0
      %319 = vmatpush.msra.mxu0 0.0
      %320 = vmatpush.msra.mxu0 0.0
      %321 = vmatpush.msra.mxu0 0.0
      %322 = vmatpush.msra.mxu0 0.0
      %323 = vmatpush.msra.mxu0 0.0
      %324 = vmatpush.msra.mxu0 0.0
      %325 = vmatpush.msra.mxu0 0.0
      %326 = vmatpush.msra.mxu0 0.0
      %327 = vmatpush.msra.mxu0 0.0
      %328 = vmatpush.msra.mxu0 0.0
      %329 = vmatpush.msra.mxu0 0.0
      %330 = vmatpush.msra.mxu0 0.0
      %331 = vmatpush.msra.mxu0 0.0
      %332 = vmatpush.msra.mxu0 %v315
      %333 = vmatmul.f32.gmra.mxu0 %v313
      %v334 = vpop.f32.mrf.mxu0
      %v335 = vadd.f32 0.0, %v334
      %336 = vdwg.mxu0
      %v337 = vadd.f32 %v307, %v335
      %338 = vrot.lane.b32.xlu0 %v246, 119
      %v339 = vpop.permute.xlu0 %338
      %340 = vrot.lane.b32.xlu0 %v245, 118
      %v341 = vpop.permute.xlu0 %340
      %v342 = vsel %vm259, %v339, 0
      %v344 = vsel %vm262, %v341, 0
      %346 = vmatpush.msra.mxu0 0.0
      %347 = vmatpush.msra.mxu0 0.0
      %348 = vmatpush.msra.mxu0 0.0
      %349 = vmatpush.msra.mxu0 0.0
      %350 = vmatpush.msra.mxu0 0.0
      %351 = vmatpush.msra.mxu0 0.0
      %352 = vmatpush.msra.mxu0 0.0
      %353 = vmatpush.msra.mxu0 0.0
      %354 = vmatpush.msra.mxu0 0.0
      %355 = vmatpush.msra.mxu0 0.0
      %356 = vmatpush.msra.mxu0 0.0
      %357 = vmatpush.msra.mxu0 0.0
      %358 = vmatpush.msra.mxu0 0.0
      %359 = vmatpush.msra.mxu0 0.0
      %360 = vmatpush.msra.mxu0 0.0
      %361 = vmatpush.msra.mxu0 %v344
      %362 = vmatmul.f32.gmra.mxu0 %v342
      %v363 = vpop.f32.mrf.mxu0
      %v364 = vadd.f32 0.0, %v363
      %365 = vdwg.mxu0
      %v366 = vadd.f32 %v337, %v364
      %367 = vrot.lane.b32.xlu0 %v246, 116
      %v368 = vpop.permute.xlu0 %367
      %369 = vrot.lane.b32.xlu0 %v245, 117
      %v370 = vpop.permute.xlu0 %369
      %v371 = vsel %vm259, %v368, 0
      %v373 = vsel %vm262, %v370, 0
      %375 = vmatpush.msra.mxu0 0.0
      %376 = vmatpush.msra.mxu0 0.0
      %377 = vmatpush.msra.mxu0 0.0
      %378 = vmatpush.msra.mxu0 0.0
      %379 = vmatpush.msra.mxu0 0.0
      %380 = vmatpush.msra.mxu0 0.0
      %381 = vmatpush.msra.mxu0 0.0
      %382 = vmatpush.msra.mxu0 0.0
      %383 = vmatpush.msra.mxu0 0.0
      %384 = vmatpush.msra.mxu0 0.0
      %385 = vmatpush.msra.mxu0 0.0
      %386 = vmatpush.msra.mxu0 0.0
      %387 = vmatpush.msra.mxu0 0.0
      %388 = vmatpush.msra.mxu0 0.0
      %389 = vmatpush.msra.mxu0 0.0
      %390 = vmatpush.msra.mxu0 %v373
      %391 = vmatmul.f32.gmra.mxu0 %v371
      %v392 = vpop.f32.mrf.mxu0
      %v393 = vadd.f32 0.0, %v392
      %394 = vdwg.mxu0
      %v395 = vadd.f32 %v366, %v393
      %396 = vrot.lane.b32.xlu0 %v246, 113
      %v397 = vpop.permute.xlu0 %396
      %398 = vrot.lane.b32.xlu0 %v245, 116
      %v399 = vpop.permute.xlu0 %398
      %v400 = vsel %vm259, %v397, 0
      %v402 = vsel %vm262, %v399, 0
      %404 = vmatpush.msra.mxu0 0.0
      %405 = vmatpush.msra.mxu0 0.0
      %406 = vmatpush.msra.mxu0 0.0
      %407 = vmatpush.msra.mxu0 0.0
      %408 = vmatpush.msra.mxu0 0.0
      %409 = vmatpush.msra.mxu0 0.0
      %410 = vmatpush.msra.mxu0 0.0
      %411 = vmatpush.msra.mxu0 0.0
      %412 = vmatpush.msra.mxu0 0.0
      %413 = vmatpush.msra.mxu0 0.0
      %414 = vmatpush.msra.mxu0 0.0
      %415 = vmatpush.msra.mxu0 0.0
      %416 = vmatpush.msra.mxu0 0.0
      %417 = vmatpush.msra.mxu0 0.0
      %418 = vmatpush.msra.mxu0 0.0
      %419 = vmatpush.msra.mxu0 %v402
      %420 = vmatmul.f32.gmra.mxu0 %v400
      %v421 = vpop.f32.mrf.mxu0
      %v422 = vadd.f32 0.0, %v421
      %423 = vdwg.mxu0
      %v424 = vadd.f32 %v395, %v422
      %425 = vrot.lane.b32.xlu0 %v246, 110
      %v426 = vpop.permute.xlu0 %425
      %427 = vrot.lane.b32.xlu0 %v245, 108
      %v428 = vpop.permute.xlu0 %427
      %v429 = vsel %vm259, %v426, 0
      %v431 = vsel %vm262, %v428, 0
      %433 = vmatpush.msra.mxu0 0.0
      %434 = vmatpush.msra.mxu0 0.0
      %435 = vmatpush.msra.mxu0 0.0
      %436 = vmatpush.msra.mxu0 0.0
      %437 = vmatpush.msra.mxu0 0.0
      %438 = vmatpush.msra.mxu0 0.0
      %439 = vmatpush.msra.mxu0 0.0
      %440 = vmatpush.msra.mxu0 0.0
      %441 = vmatpush.msra.mxu0 0.0
      %442 = vmatpush.msra.mxu0 0.0
      %443 = vmatpush.msra.mxu0 0.0
      %444 = vmatpush.msra.mxu0 0.0
      %445 = vmatpush.msra.mxu0 0.0
      %446 = vmatpush.msra.mxu0 0.0
      %447 = vmatpush.msra.mxu0 0.0
      %448 = vmatpush.msra.mxu0 %v431
      %449 = vmatmul.f32.gmra.mxu0 %v429
      %v450 = vpop.f32.mrf.mxu0
      %v451 = vadd.f32 0.0, %v450
      %452 = vdwg.mxu0
      %v453 = vadd.f32 %v424, %v451
      %454 = vrot.lane.b32.xlu0 %v246, 107
      %v455 = vpop.permute.xlu0 %454
      %456 = vrot.lane.b32.xlu0 %v245, 107
      %v457 = vpop.permute.xlu0 %456
      %v458 = vsel %vm259, %v455, 0
      %v460 = vsel %vm262, %v457, 0
      %462 = vmatpush.msra.mxu0 0.0
      %463 = vmatpush.msra.mxu0 0.0
      %464 = vmatpush.msra.mxu0 0.0
      %465 = vmatpush.msra.mxu0 0.0
      %466 = vmatpush.msra.mxu0 0.0
      %467 = vmatpush.msra.mxu0 0.0
      %468 = vmatpush.msra.mxu0 0.0
      %469 = vmatpush.msra.mxu0 0.0
      %470 = vmatpush.msra.mxu0 0.0
      %471 = vmatpush.msra.mxu0 0.0
      %472 = vmatpush.msra.mxu0 0.0
      %473 = vmatpush.msra.mxu0 0.0
      %474 = vmatpush.msra.mxu0 0.0
      %475 = vmatpush.msra.mxu0 0.0
      %476 = vmatpush.msra.mxu0 0.0
      %477 = vmatpush.msra.mxu0 %v460
      %478 = vmatmul.f32.gmra.mxu0 %v458
      %v479 = vpop.f32.mrf.mxu0
      %v480 = vadd.f32 0.0, %v479
      %481 = vdwg.mxu0
      %v482 = vadd.f32 %v453, %v480
      %483 = vrot.lane.b32.xlu0 %v246, 104
      %v484 = vpop.permute.xlu0 %483
      %485 = vrot.lane.b32.xlu0 %v245, 106
      %v486 = vpop.permute.xlu0 %485
      %v487 = vsel %vm259, %v484, 0
      %v489 = vsel %vm262, %v486, 0
      %491 = vmatpush.msra.mxu0 0.0
      %492 = vmatpush.msra.mxu0 0.0
      %493 = vmatpush.msra.mxu0 0.0
      %494 = vmatpush.msra.mxu0 0.0
      %495 = vmatpush.msra.mxu0 0.0
      %496 = vmatpush.msra.mxu0 0.0
      %497 = vmatpush.msra.mxu0 0.0
      %498 = vmatpush.msra.mxu0 0.0
      %499 = vmatpush.msra.mxu0 0.0
      %500 = vmatpush.msra.mxu0 0.0
      %501 = vmatpush.msra.mxu0 0.0
      %502 = vmatpush.msra.mxu0 0.0
      %503 = vmatpush.msra.mxu0 0.0
      %504 = vmatpush.msra.mxu0 0.0
      %505 = vmatpush.msra.mxu0 0.0
      %506 = vmatpush.msra.mxu0 %v489
      %507 = vmatmul.f32.gmra.mxu0 %v487
      %v508 = vpop.f32.mrf.mxu0
      %v509 = vadd.f32 0.0, %v508
      %510 = vdwg.mxu0
      %v511 = vadd.f32 %v482, %v509
      %513 = vset.pattern.permute.xlu0 0
      %514 = vperm.xlu0 %513, %v250
      %v515 = vpop.permute.xlu0 %514
      %v517 = vmul.f32 %v511, %v515
      %518 = vset.pattern.permute.xlu0 1
      %519 = vperm.xlu0 %518, %v250
      %v520 = vpop.permute.xlu0 %519
      %v522 = vadd.f32 %v517, %v520
      %vm523 = vcmp.gt.f32.partialorder %v522, 0.0
      %524 = vset.pattern.permute.xlu0 2
      %525 = vperm.xlu0 %524, %v250
      %v526 = vpop.permute.xlu0 %525
      %v528 = vmul.f32 %v522, %v526
      %v529 = vsel %vm523, %v522, %v528
      %v531 = vsel %vm259, %v247, 0
      %v534 = vsel %vm259, %v248, 0
      %v537 = vsel %vm259, %v249, 0
      %v540 = vsel %vm262, %v529, 0
      %542 = vmatpush.msra.mxu0 0.0
      %543 = vmatpush.msra.mxu0 0.0
      %544 = vmatpush.msra.mxu0 0.0
      %545 = vmatpush.msra.mxu0 0.0
      %546 = vmatpush.msra.mxu0 0.0
      %547 = vmatpush.msra.mxu0 0.0
      %548 = vmatpush.msra.mxu0 0.0
      %549 = vmatpush.msra.mxu0 0.0
      %550 = vmatpush.msra.mxu0 0.0
      %551 = vmatpush.msra.mxu0 0.0
      %552 = vmatpush.msra.mxu0 0.0
      %553 = vmatpush.msra.mxu0 0.0
      %554 = vmatpush.msra.mxu0 0.0
      %555 = vmatpush.msra.mxu0 0.0
      %556 = vmatpush.msra.mxu0 0.0
      %557 = vmatpush.msra.mxu0 %v540
      %558 = vmatmul.f32.gmra.mxu0 %v531
      %v559 = vpop.f32.mrf.mxu0
      %v560 = vadd.f32 0.0, %v559
      %561 = vmatmul.f32.gmra.mxu0 %v534
      %v562 = vpop.f32.mrf.mxu0
      %v563 = vadd.f32 0.0, %v562
      %564 = vmatmul.f32.gmra.mxu0 %v537
      %v565 = vpop.f32.mrf.mxu0
      %v566 = vadd.f32 0.0, %v565
      %567 = vdwg.mxu0
      %568 = vset.pattern.permute.xlu0 3
      %569 = vperm.xlu0 %568, %v250
      %v570 = vpop.permute.xlu0 %569
      %573 = vset.pattern.permute.xlu0 3
      %574 = vperm.xlu0 %573, %v251
      %v575 = vpop.permute.xlu0 %574
      %578 = vset.pattern.permute.xlu0 3
      %579 = vperm.xlu0 %578, %v252
      %v580 = vpop.permute.xlu0 %579
      %v582 = vmul.f32 %v560, %v570
      %v583 = vmul.f32 %v563, %v575
      %v584 = vmul.f32 %v566, %v580
      %585 = vset.pattern.permute.xlu0 4
      %586 = vperm.xlu0 %585, %v250
      %v587 = vpop.permute.xlu0 %586
      %589 = vset.pattern.permute.xlu0 4
      %590 = vperm.xlu0 %589, %v251
      %v591 = vpop.permute.xlu0 %590
      %593 = vset.pattern.permute.xlu0 4
      %594 = vperm.xlu0 %593, %v252
      %v595 = vpop.permute.xlu0 %594
      %v597 = vadd.f32 %v582, %v587
      %v598 = vadd.f32 %v583, %v591
      %v599 = vadd.f32 %v584, %v595
      %v600 = vadd.f32 %v242, %v597
      %v601 = vadd.f32 %v243, %v598
      %v602 = vadd.f32 %v244, %v599
      %vm603 = vcmp.gt.f32.partialorder %v600, 0.0
      %vm604 = vcmp.gt.f32.partialorder %v601, 0.0
      %vm605 = vcmp.gt.f32.partialorder %v602, 0.0
      %606 = vset.pattern.permute.xlu0 5
      %607 = vperm.xlu0 %606, %v250
      %v608 = vpop.permute.xlu0 %607
      %610 = vset.pattern.permute.xlu0 5
      %611 = vperm.xlu0 %610, %v251
      %v612 = vpop.permute.xlu0 %611
      %614 = vset.pattern.permute.xlu0 5
      %615 = vperm.xlu0 %614, %v252
      %v616 = vpop.permute.xlu0 %615
      %v618 = vmul.f32 %v600, %v608
      %v619 = vmul.f32 %v601, %v612
      %v620 = vmul.f32 %v602, %v616
      %v621 = vsel %vm603, %v600, %v618
      %v622 = vsel %vm604, %v601, %v619
      %v623 = vsel %vm605, %v602, %v620
      %vm624 = vcmask 64512
      %625 = vst.msk [vmem:[%s241] sm:$0xff] %vm624, %v621
      %626 = vst.msk [vmem:[%s241 + $0x8] sm:$0xff] %vm624, %v622
      %627 = vst.msk [vmem:[%s241 + $0x10] sm:$0xff] %vm624, %v623
      %631 = vrot.lane.b32.xlu0 %v597, 126
      %v632 = vpop.permute.xlu0 %631
      %633 = vrot.lane.b32.xlu0 %v598, 126
      %v634 = vpop.permute.xlu0 %633
      %635 = vrot.lane.b32.xlu0 %v599, 126
      %v636 = vpop.permute.xlu0 %635
      %v640 = vadd.f32 %v242, %v632
      %v641 = vadd.f32 %v243, %v634
      %v642 = vadd.f32 %v244, %v636
      %vm643 = vcmp.gt.f32.partialorder %v640, 0.0
      %vm644 = vcmp.gt.f32.partialorder %v641, 0.0
      %vm645 = vcmp.gt.f32.partialorder %v642, 0.0
      %v646 = vmul.f32 %v640, %v608
      %v647 = vmul.f32 %v641, %v612
      %v648 = vmul.f32 %v642, %v616
      %v649 = vsel %vm643, %v640, %v646
      %v650 = vsel %vm644, %v641, %v647
      %v651 = vsel %vm645, %v642, %v648
      %vm652 = vcmask 130112
      %653 = vst.msk [vmem:[%s241] sm:$0xff] %vm652, %v649
      %654 = vst.msk [vmem:[%s241 + $0x8] sm:$0xff] %vm652, %v650
      %655 = vst.msk [vmem:[%s241 + $0x10] sm:$0xff] %vm652, %v651
      %656 = vrot.lane.b32.xlu0 %v597, 124
      %v657 = vpop.permute.xlu0 %656
      %658 = vrot.lane.b32.xlu0 %v598, 124
      %v659 = vpop.permute.xlu0 %658
      %660 = vrot.lane.b32.xlu0 %v599, 124
      %v661 = vpop.permute.xlu0 %660
      %v665 = vadd.f32 %v242, %v657
      %v666 = vadd.f32 %v243, %v659
      %v667 = vadd.f32 %v244, %v661
      %vm668 = vcmp.gt.f32.partialorder %v665, 0.0
      %vm669 = vcmp.gt.f32.partialorder %v666, 0.0
      %vm670 = vcmp.gt.f32.partialorder %v667, 0.0
      %v671 = vmul.f32 %v665, %v608
      %v672 = vmul.f32 %v666, %v612
      %v673 = vmul.f32 %v667, %v616
      %v674 = vsel %vm668, %v665, %v671
      %v675 = vsel %vm669, %v666, %v672
      %v676 = vsel %vm670, %v667, %v673
      %vm677 = vcmask 195712
      %678 = vst.msk [vmem:[%s241] sm:$0xff] %vm677, %v674
      %679 = vst.msk [vmem:[%s241 + $0x8] sm:$0xff] %vm677, %v675
      %680 = vst.msk [vmem:[%s241 + $0x10] sm:$0xff] %vm677, %v676
      %681 = vrot.lane.b32.xlu0 %v597, 122
      %v682 = vpop.permute.xlu0 %681
      %683 = vrot.lane.b32.xlu0 %v598, 122
      %v684 = vpop.permute.xlu0 %683
      %685 = vrot.lane.b32.xlu0 %v599, 122
      %v686 = vpop.permute.xlu0 %685
      %v690 = vadd.f32 %v242, %v682
      %v691 = vadd.f32 %v243, %v684
      %v692 = vadd.f32 %v244, %v686
      %vm693 = vcmp.gt.f32.partialorder %v690, 0.0
      %vm694 = vcmp.gt.f32.partialorder %v691, 0.0
      %vm695 = vcmp.gt.f32.partialorder %v692, 0.0
      %v696 = vmul.f32 %v690, %v608
      %v697 = vmul.f32 %v691, %v612
      %v698 = vmul.f32 %v692, %v616
      %v699 = vsel %vm693, %v690, %v696
      %v700 = vsel %vm694, %v691, %v697
      %v701 = vsel %vm695, %v692, %v698
      %vm702 = vcmask 261312
      %703 = vst.msk [vmem:[%s241] sm:$0xff] %vm702, %v699
      %704 = vst.msk [vmem:[%s241 + $0x8] sm:$0xff] %vm702, %v700
      %705 = vst.msk [vmem:[%s241 + $0x10] sm:$0xff] %vm702, %v701
      %706 = vrot.lane.b32.xlu0 %v597, 120
      %v707 = vpop.permute.xlu0 %706
      %708 = vrot.lane.b32.xlu0 %v598, 120
      %v709 = vpop.permute.xlu0 %708
      %710 = vrot.lane.b32.xlu0 %v599, 120
      %v711 = vpop.permute.xlu0 %710
      %v715 = vadd.f32 %v242, %v707
      %v716 = vadd.f32 %v243, %v709
      %v717 = vadd.f32 %v244, %v711
      %vm718 = vcmp.gt.f32.partialorder %v715, 0.0
      %vm719 = vcmp.gt.f32.partialorder %v716, 0.0
      %vm720 = vcmp.gt.f32.partialorder %v717, 0.0
      %v721 = vmul.f32 %v715, %v608
      %v722 = vmul.f32 %v716, %v612
      %v723 = vmul.f32 %v717, %v616
      %v724 = vsel %vm718, %v715, %v721
      %v725 = vsel %vm719, %v716, %v722
      %v726 = vsel %vm720, %v717, %v723
      %vm727 = vcmask 326912
      %728 = vst.msk [vmem:[%s241] sm:$0xff] %vm727, %v724
      %729 = vst.msk [vmem:[%s241 + $0x8] sm:$0xff] %vm727, %v725
      %730 = vst.msk [vmem:[%s241 + $0x10] sm:$0xff] %vm727, %v726
      %731 = vrot.lane.b32.xlu0 %v597, 118
      %v732 = vpop.permute.xlu0 %731
      %733 = vrot.lane.b32.xlu0 %v598, 118
      %v734 = vpop.permute.xlu0 %733
      %735 = vrot.lane.b32.xlu0 %v599, 118
      %v736 = vpop.permute.xlu0 %735
      %v740 = vadd.f32 %v242, %v732
      %v741 = vadd.f32 %v243, %v734
      %v742 = vadd.f32 %v244, %v736
      %vm743 = vcmp.gt.f32.partialorder %v740, 0.0
      %vm744 = vcmp.gt.f32.partialorder %v741, 0.0
      %vm745 = vcmp.gt.f32.partialorder %v742, 0.0
      %v746 = vmul.f32 %v740, %v608
      %v747 = vmul.f32 %v741, %v612
      %v748 = vmul.f32 %v742, %v616
      %v749 = vsel %vm743, %v740, %v746
      %v750 = vsel %vm744, %v741, %v747
      %v751 = vsel %vm745, %v742, %v748
      %vm752 = vcmask 392512
      %753 = vst.msk [vmem:[%s241] sm:$0xff] %vm752, %v749
      %754 = vst.msk [vmem:[%s241 + $0x8] sm:$0xff] %vm752, %v750
      %755 = vst.msk [vmem:[%s241 + $0x10] sm:$0xff] %vm752, %v751
      %756 = vrot.lane.b32.xlu0 %v597, 116
      %v757 = vpop.permute.xlu0 %756
      %758 = vrot.lane.b32.xlu0 %v598, 116
      %v759 = vpop.permute.xlu0 %758
      %760 = vrot.lane.b32.xlu0 %v599, 116
      %v761 = vpop.permute.xlu0 %760
      %v765 = vadd.f32 %v242, %v757
      %v766 = vadd.f32 %v243, %v759
      %v767 = vadd.f32 %v244, %v761
      %vm768 = vcmp.gt.f32.partialorder %v765, 0.0
      %vm769 = vcmp.gt.f32.partialorder %v766, 0.0
      %vm770 = vcmp.gt.f32.partialorder %v767, 0.0
      %v771 = vmul.f32 %v765, %v608
      %v772 = vmul.f32 %v766, %v612
      %v773 = vmul.f32 %v767, %v616
      %v774 = vsel %vm768, %v765, %v771
      %v775 = vsel %vm769, %v766, %v772
      %v776 = vsel %vm770, %v767, %v773
      %vm777 = vcmask 458112
      %778 = vst.msk [vmem:[%s241] sm:$0xff] %vm777, %v774
      %779 = vst.msk [vmem:[%s241 + $0x8] sm:$0xff] %vm777, %v775
      %780 = vst.msk [vmem:[%s241 + $0x10] sm:$0xff] %vm777, %v776
      %781 = vrot.lane.b32.xlu0 %v597, 114
      %v782 = vpop.permute.xlu0 %781
      %783 = vrot.lane.b32.xlu0 %v598, 114
      %v784 = vpop.permute.xlu0 %783
      %785 = vrot.lane.b32.xlu0 %v599, 114
      %v786 = vpop.permute.xlu0 %785
      %v790 = vadd.f32 %v242, %v782
      %v791 = vadd.f32 %v243, %v784
      %v792 = vadd.f32 %v244, %v786
      %vm793 = vcmp.gt.f32.partialorder %v790, 0.0
      %vm794 = vcmp.gt.f32.partialorder %v791, 0.0
      %vm795 = vcmp.gt.f32.partialorder %v792, 0.0
      %v796 = vmul.f32 %v790, %v608
      %v797 = vmul.f32 %v791, %v612
      %v798 = vmul.f32 %v792, %v616
      %v799 = vsel %vm793, %v790, %v796
      %v800 = vsel %vm794, %v791, %v797
      %v801 = vsel %vm795, %v792, %v798
      %vm802 = vcmask 523712
      %803 = vst.msk [vmem:[%s241] sm:$0xff] %vm802, %v799
      %804 = vst.msk [vmem:[%s241 + $0x8] sm:$0xff] %vm802, %v800
      %805 = vst.msk [vmem:[%s241 + $0x10] sm:$0xff] %vm802, %v801
      %p806 = scmp.lt.s32.totalorder %s16, 1
      %s807 = scalar_select %p806, %s16, 1
      %s808 = smul.addr %s807, 3
      %s809 = smul.addr %s808, 8
      %s810 = scalar_lea.vmem %s5, %s809
      // Predicated region
      $region41: #{downsampler_forward.7} parent=39 // pred_check
        %p811 = pneg %p149
      $region42: #{downsampler_forward.7} parent=39 // pred_check_branch
        %813 = sbr.rel (%p811) target = $region44
      $region43: #{downsampler_forward.7} parent=39 // pred_region
        _
      $region44: #{downsampler_forward.7} parent=39 // pred_fallthru
        _
    $region40: #{downsampler_forward.7} parent=5 // pred_fallthru
      _
    %p814 = scmp.le.s32.totalorder 2, %s11
    // Predicated region
    $region45: #{downsampler_forward.7} parent=5 // pred_check
      %p815 = pneg %p814
    $region46: #{downsampler_forward.7} parent=5 // pred_check_branch
      %817 = sbr.rel (%p815) target = $region48
    $region47: #{downsampler_forward.7} parent=5 // pred_region
      %s818 = ssub.s32 %s11, 2
      // Predicated region
      $region49: #{downsampler_forward.7} parent=47 // pred_check
        %p819 = pneg %p155
      $region50: #{downsampler_forward.7} parent=47 // pred_check_branch
        %821 = sbr.rel (%p819) target = $region52
      $region51: #{downsampler_forward.7} parent=47 // pred_region
        %p822 = scmp.lt.s32.totalorder %s17, 1
        %s823 = scalar_select %p822, %s17, 1
        %s824 = smul.addr %s823, 3
        %s825 = smul.addr %s824, 8
        %s826 = scalar_lea.vmem %s5, %s825
      $region52: #{downsampler_forward.7} parent=47 // pred_fallthru
        _
    $region48: #{downsampler_forward.7} parent=5 // pred_fallthru
      _
  $region6: #{downsampler_forward.7} parent=0 // loop_footer
    %s15 = sadd.s32 1, %s11
  $region7: #{downsampler_forward.7} parent=0 // loop_footer_branch
    %10 = sbr.rel target = $region3
  $region8: #{downsampler_forward.7} parent=0 // loop_exit
    _

</llo_original>
